<compile_context>
chip_gen: v7x
topology: tpu7x:2x2x1
jax: 0.10.0
libtpu: 0.0.40
codegen_flags: <defaults>
</compile_context>

<pallas_src>
import functools
import math

import jax
import jax.numpy as jnp
import numpy as np
from jax.experimental import pallas as pl
from jax.experimental.pallas import tpu as pltpu

C = 128  # fixed channel count of the module


# ----------------------------------------------------------------------------
# Fused kernel: dsconv1 + dsconv2 + 1x1 classifier conv + bilinear upsample.
# Layout: NHWC inside (C=128 on the lane axis); output written NCHW.
# ----------------------------------------------------------------------------
def _classifier_kernel(x_ref, wdw1_ref, wpw1_ref, b1_ref,
                       wdw2_ref, wpw2_ref, b2_ref,
                       wc_ref, bc_ref, awt_ref, mrow_ref, o_ref):
    H = x_ref.shape[1]
    W = x_ref.shape[2]
    Cc = x_ref.shape[3]
    NC = wc_ref.shape[1]
    Wo = awt_ref.shape[1]
    Ho = mrow_ref.shape[0] // NC

    def dsconv(src, wdw_ref, wpw_ref, bias_ref):
        # src: (H, W, C) f32.  Depthwise 3x3 (zero padding) with BN1 folded
        # into the weights, then pointwise 1x1 on the MXU (bf16 in, f32 acc)
        # with BN2 folded into weights + one bias, then ReLU.
        # (No ReLU after BN1 -- matches the module.)
        def wtap(dh, dw):                       # (1, 1, C) depthwise weight
            return wdw_ref[dh:dh + 1, dw:dw + 1, :]

        # Row (H) taps: zero-filled shift via slice + concat on the leading dim.
        zrow = jnp.zeros((1, W, Cc), jnp.float32)
        x_up = jnp.concatenate([zrow, src[:H - 1]], axis=0)    # value at h-1
        x_dn = jnp.concatenate([src[1:], zrow], axis=0)        # value at h+1

        # Partial sums per column tap, accumulated over the three row taps.
        s_l = x_up * wtap(0, 0) + src * wtap(1, 0) + x_dn * wtap(2, 0)
        s_c = x_up * wtap(0, 1) + src * wtap(1, 1) + x_dn * wtap(2, 1)
        s_r = x_up * wtap(0, 2) + src * wtap(1, 2) + x_dn * wtap(2, 2)

        # Column (W) shifts with zero fill: slice + concat on the sublane dim.
        # No iota / compares / masks and no padded VMEM scratch needed.
        zcol = jnp.zeros((H, 1, Cc), jnp.float32)
        left = jnp.concatenate([zcol, s_l[:, :W - 1, :]], axis=1)   # tap w-1
        right = jnp.concatenate([s_r[:, 1:, :], zcol], axis=1)      # tap w+1
        acc = s_c + left + right

        y = jnp.dot(acc.reshape(H * W, Cc).astype(jnp.bfloat16), wpw_ref[...],
                    preferred_element_type=jnp.float32)
        y = jnp.maximum(y + bias_ref[...], 0.0)
        return y.reshape(H, W, Cc)

    y1 = dsconv(x_ref[0], wdw1_ref, wpw1_ref, b1_ref)
    y2 = dsconv(y1, wdw2_ref, wpw2_ref, b2_ref)

    # Dropout(p=0.1) is identity in eval/inference mode.
    # TODO(synk): training-mode dropout masking is not implemented.

    # Final 1x1 conv (128 -> NC) with bias.
    z = jnp.dot(y2.reshape(H * W, Cc).astype(jnp.bfloat16), wc_ref[...],
                preferred_element_type=jnp.float32) + bc_ref[...]   # (H*W, NC)

    # Bilinear upsample, align_corners=True:
    #  1) move classes onto sublanes with ONE batched minor-dim transpose,
    #  2) W interpolation as a single MXU matmul against aw.T,
    #  3) H interpolation + (h,c)->(c,o) reorder as a single MXU matmul
    #     against a precomputed shuffle-kron matrix mrow with
    #     mrow[c*Ho + o, h*NC + c] = ah[o, h].
    z3 = z.reshape(H, W, NC)                              # free (W % 8 == 0)
    zt = jnp.transpose(z3, (0, 2, 1))                     # (H, NC, W)
    u = jnp.dot(zt.reshape(H * NC, W).astype(jnp.bfloat16), awt_ref[...],
                preferred_element_type=jnp.float32)       # (H*NC, Wo)
    out = jnp.dot(mrow_ref[...], u.astype(jnp.bfloat16),
                  preferred_element_type=jnp.float32)     # (NC*Ho, Wo)

    # (NC*Ho, Wo) -> (1, NC, Ho, Wo) only splits leading dims (Ho % 8 == 0),
    # so the store needs no relayout; at production sizes Wo % 128 == 0 makes
    # these stores full lane width.
    o_ref[...] = out.reshape(1, NC, Ho, Wo).astype(o_ref.dtype)


# ----------------------------------------------------------------------------
# Glue: bilinear matrices, BN folding, wrapper around pallas_call.
# ----------------------------------------------------------------------------
def bilinear_matrix(n_in, n_out):
    """Interpolation matrix (n_out, n_in) for align_corners=True bilinear."""
    if n_out == 1:
        src = np.zeros((1,), np.float64)
    else:
        src = np.arange(n_out, dtype=np.float64) * (n_in - 1) / (n_out - 1)
    i0 = np.clip(np.floor(src).astype(np.int64), 0, n_in - 1)
    i1 = np.clip(i0 + 1, 0, n_in - 1)
    w1 = src - i0
    w0 = 1.0 - w1
    A = np.zeros((n_out, n_in), np.float64)
    A[np.arange(n_out), i0] += w0
    A[np.arange(n_out), i1] += w1
    return A.astype(np.float32)


def _row_interp_shuffle_matrix(ah, num_classes):
    """M[(c*Ho + o), (h*NC + c)] = ah[o, h]: row interp + class reorder."""
    Ho, H = ah.shape
    M = np.zeros((num_classes * Ho, H * num_classes), np.float32)
    for c in range(num_classes):
        M[c * Ho:(c + 1) * Ho, c::num_classes] = ah
    return M


def fold_bn(gamma, beta, mean, var, eps=1e-5):
    scale = gamma / jnp.sqrt(var + eps)
    bias = beta - mean * scale
    return scale, bias


def _fold_dsconv(wdw, s1, b1, wpw, s2, b2):
    """Fold both BNs of a dsconv block into its conv weights + one bias."""
    wdw_f = wdw * s1[None, None, :]            # BN1 scale into depthwise
    wpw_f = wpw * s2[None, :]                  # BN2 scale into pointwise cols
    bias = (b1 @ wpw) * s2 + b2                # remaining affine terms
    return (wdw_f.astype(jnp.float32),
            wpw_f.astype(jnp.bfloat16),
            bias.reshape(1, -1).astype(jnp.float32))


@functools.partial(jax.jit, static_argnums=(2,))
def classifier_forward(x_nchw, params, scale_factor):
    """Matches Classifier.forward (eval mode). Input and output are NCHW."""
    B, Cc, H, W = x_nchw.shape
    assert Cc == C
    # TODO(synk): at production sizes take NHWC straight from the producer to
    # avoid this extra HBM pass.
    x = jnp.transpose(x_nchw, (0, 2, 3, 1))    # NCHW -> NHWC (C on lanes)

    NC = params["wc"].shape[1]
    Ho = int(math.floor(H * scale_factor))
    Wo = int(math.floor(W * scale_factor))
    ah = bilinear_matrix(H, Ho)                               # (Ho, H) np
    aw = bilinear_matrix(W, Wo)                               # (Wo, W) np
    awt = jnp.asarray(aw.T, dtype=jnp.bfloat16)               # (W, Wo)
    mrow = jnp.asarray(_row_interp_shuffle_matrix(ah, NC),
                       dtype=jnp.bfloat16)                    # (NC*Ho, H*NC)

    wdw1, wpw1, b1 = _fold_dsconv(params["wdw1"], params["s1a"], params["b1a"],
                                  params["wpw1"], params["s1b"], params["b1b"])
    wdw2, wpw2, b2 = _fold_dsconv(params["wdw2"], params["s2a"], params["b2a"],
                                  params["wpw2"], params["s2b"], params["b2b"])
    wc = params["wc"].astype(jnp.bfloat16)
    bc = params["bc"].reshape(1, NC).astype(jnp.float32)

    flops = B * (2 * 2 * H * W * C * C          # two pointwise 1x1 convs
                 + 2 * 2 * 9 * H * W * C        # two depthwise 3x3 convs
                 + 2 * H * W * C * NC           # classifier 1x1 conv
                 + 2 * H * NC * W * Wo          # W interpolation
                 + 2 * NC * Ho * H * NC * Wo)   # H interpolation (shuffle-kron)
    bytes_accessed = (4 * B * H * W * C + 4 * B * NC * Ho * Wo
                      + 2 * (4 * 9 * C + 2 * C * C + 4 * C)
                      + 2 * C * NC + 4 * NC
                      + 2 * W * Wo + 2 * NC * Ho * H * NC)
    cost = pl.CostEstimate(flops=flops, transcendentals=0,
                           bytes_accessed=bytes_accessed)

    out = pl.pallas_call(
        _classifier_kernel,
        out_shape=jax.ShapeDtypeStruct((B, NC, Ho, Wo), jnp.float32),
        grid=(B,),
        in_specs=[
            pl.BlockSpec((1, H, W, C), lambda b: (b, 0, 0, 0)),    # x
            pl.BlockSpec((3, 3, C), lambda b: (0, 0, 0)),          # wdw1
            pl.BlockSpec((C, C), lambda b: (0, 0)),                # wpw1 (bf16)
            pl.BlockSpec((1, C), lambda b: (0, 0)),                # bias1
            pl.BlockSpec((3, 3, C), lambda b: (0, 0, 0)),          # wdw2
            pl.BlockSpec((C, C), lambda b: (0, 0)),                # wpw2 (bf16)
            pl.BlockSpec((1, C), lambda b: (0, 0)),                # bias2
            pl.BlockSpec((C, NC), lambda b: (0, 0)),               # wc (bf16)
            pl.BlockSpec((1, NC), lambda b: (0, 0)),               # bc
            pl.BlockSpec((W, Wo), lambda b: (0, 0)),               # aw.T (bf16)
            pl.BlockSpec((NC * Ho, H * NC), lambda b: (0, 0)),     # mrow (bf16)
        ],
        out_specs=pl.BlockSpec((1, NC, Ho, Wo), lambda b: (b, 0, 0, 0)),
        compiler_params=pltpu.CompilerParams(
            dimension_semantics=("parallel",)),
        cost_estimate=cost,
    )(x, wdw1, wpw1, b1, wdw2, wpw2, b2, wc, bc, awt, mrow)
    return out  # already NCHW


# ----------------------------------------------------------------------------
# Parameters and a pure-JAX f32 reference (unfolded BN) for the self-check.
# ----------------------------------------------------------------------------
def make_params(key, num_classes):
    ks = jax.random.split(key, 10)

    def bn(k):
        k1, k2, k3, k4 = jax.random.split(k, 4)
        gamma = 1.0 + 0.1 * jax.random.normal(k1, (C,), jnp.float32)
        beta = 0.1 * jax.random.normal(k2, (C,), jnp.float32)
        mean = 0.1 * jax.random.normal(k3, (C,), jnp.float32)
        var = 0.5 + 0.5 * jnp.abs(jax.random.normal(k4, (C,), jnp.float32))
        return fold_bn(gamma, beta, mean, var)

    p = {}
    p["wdw1"] = 0.2 * jax.random.normal(ks[0], (3, 3, C), jnp.float32)
    p["s1a"], p["b1a"] = bn(ks[1])
    p["wpw1"] = jax.random.normal(ks[2], (C, C), jnp.float32) / math.sqrt(C)
    p["s1b"], p["b1b"] = bn(ks[3])
    p["wdw2"] = 0.2 * jax.random.normal(ks[4], (3, 3, C), jnp.float32)
    p["s2a"], p["b2a"] = bn(ks[5])
    p["wpw2"] = jax.random.normal(ks[6], (C, C), jnp.float32) / math.sqrt(C)
    p["s2b"], p["b2b"] = bn(ks[7])
    p["wc"] = jax.random.normal(ks[8], (C, num_classes),
                                jnp.float32) / math.sqrt(C)
    p["bc"] = 0.1 * jax.random.normal(ks[9], (num_classes,), jnp.float32)
    return p


def _ref_dsconv(x, wdw, s1, b1, wpw, s2, b2):
    B, H, W, Cc = x.shape
    xp = jnp.pad(x, ((0, 0), (1, 1), (1, 1), (0, 0)))
    acc = jnp.zeros_like(x)
    for dh in range(3):
        for dw in range(3):
            acc = acc + xp[:, dh:dh + H, dw:dw + W, :] * wdw[dh, dw, :]
    acc = acc * s1 + b1                      # BN1 (eval) -- no ReLU (per spec)
    y = jnp.einsum("bhwc,cd->bhwd", acc, wpw)
    y = y * s2 + b2                          # BN2 (eval)
    return jnp.maximum(y, 0.0)


def _ref_forward(x_nchw, p, scale_factor):
    x = jnp.transpose(x_nchw, (0, 2, 3, 1))
    x = _ref_dsconv(x, p["wdw1"], p["s1a"], p["b1a"],
                    p["wpw1"], p["s1b"], p["b1b"])
    x = _ref_dsconv(x, p["wdw2"], p["s2a"], p["b2a"],
                    p["wpw2"], p["s2b"], p["b2b"])
    y = jnp.einsum("bhwc,cd->bhwd", x, p["wc"]) + p["bc"]
    B, H, W, NC = y.shape
    Ho = int(math.floor(H * scale_factor))
    Wo = int(math.floor(W * scale_factor))
    ah = bilinear_matrix(H, Ho)
    aw = bilinear_matrix(W, Wo)
    t = jnp.einsum("oh,bhwc->bowc", ah, y)
    o = jnp.einsum("pw,bowc->bopc", aw, t)
    return jnp.transpose(o, (0, 3, 1, 2))


if __name__ == "__main__":
    B, H, W = 2, 16, 16
    num_classes = 8
    scale_factor = 2

    key = jax.random.PRNGKey(0)
    k_param, k_x = jax.random.split(key)
    params = make_params(k_param, num_classes)
    x_nchw = jax.random.normal(k_x, (B, C, H, W), jnp.float32)

    out = jax.block_until_ready(classifier_forward(x_nchw, params,
                                                   scale_factor))
    assert out.shape == (B, num_classes, H * scale_factor, W * scale_factor)

    ref = jax.block_until_ready(_ref_forward(x_nchw, params, scale_factor))
    err = float(jnp.max(jnp.abs(out - ref)))
    assert err < 5e-2, f"max abs err {err}"

    print("KERNEL_OK")
</pallas_src>

<mosaic_0001>
module attributes {stable_mosaic.version = 11 : i64} {
  func.func @_classifier_kernel(%arg0: i32, %arg1: memref<1x16x16x128xf32, #tpu.memory_space<vmem>>, %arg2: memref<3x3x128xf32, #tpu.memory_space<vmem>>, %arg3: memref<128x128xbf16, #tpu.memory_space<vmem>>, %arg4: memref<1x128xf32, #tpu.memory_space<vmem>>, %arg5: memref<3x3x128xf32, #tpu.memory_space<vmem>>, %arg6: memref<128x128xbf16, #tpu.memory_space<vmem>>, %arg7: memref<1x128xf32, #tpu.memory_space<vmem>>, %arg8: memref<128x8xbf16, #tpu.memory_space<vmem>>, %arg9: memref<1x8xf32, #tpu.memory_space<vmem>>, %arg10: memref<16x32xbf16, #tpu.memory_space<vmem>>, %arg11: memref<256x128xbf16, #tpu.memory_space<vmem>>, %arg12: memref<1x8x32x32xf32, #tpu.memory_space<vmem>>) attributes {dimension_semantics = [#tpu.dimension_semantics<parallel>], iteration_bounds = array<i64: 2>, scalar_prefetch = 0 : i64, scratch_operands = 0 : i64, tpu.core_type = #tpu.core_type<tc>, window_params = [{transform_indices = @transform_0, window_bounds = array<i64: 1, 16, 16, 128>}, {pipeline_mode = #tpu.pipeline_mode<synchronous>, transform_indices = @transform_1, window_bounds = array<i64: 3, 3, 128>}, {pipeline_mode = #tpu.pipeline_mode<synchronous>, transform_indices = @transform_2, window_bounds = array<i64: 128, 128>}, {pipeline_mode = #tpu.pipeline_mode<synchronous>, transform_indices = @transform_3, window_bounds = array<i64: 1, 128>}, {pipeline_mode = #tpu.pipeline_mode<synchronous>, transform_indices = @transform_4, window_bounds = array<i64: 3, 3, 128>}, {pipeline_mode = #tpu.pipeline_mode<synchronous>, transform_indices = @transform_5, window_bounds = array<i64: 128, 128>}, {pipeline_mode = #tpu.pipeline_mode<synchronous>, transform_indices = @transform_6, window_bounds = array<i64: 1, 128>}, {pipeline_mode = #tpu.pipeline_mode<synchronous>, transform_indices = @transform_7, window_bounds = array<i64: 128, 8>}, {pipeline_mode = #tpu.pipeline_mode<synchronous>, transform_indices = @transform_8, window_bounds = array<i64: 1, 8>}, {pipeline_mode = #tpu.pipeline_mode<synchronous>, transform_indices = @transform_9, window_bounds = array<i64: 16, 32>}, {pipeline_mode = #tpu.pipeline_mode<synchronous>, transform_indices = @transform_10, window_bounds = array<i64: 256, 128>}, {transform_indices = @transform_11, window_bounds = array<i64: 1, 8, 32, 32>}]} {
    %c0 = arith.constant 0 : index
    %c0_0 = arith.constant 0 : index
    %c0_1 = arith.constant 0 : index
    %c0_2 = arith.constant 0 : index
    %0 = vector.load %arg1[%c0, %c0_0, %c0_1, %c0_2] : memref<1x16x16x128xf32, #tpu.memory_space<vmem>>, vector<1x16x16x128xf32>
    %1 = vector.shape_cast %0 : vector<1x16x16x128xf32> to vector<16x16x128xf32>
    %cst = arith.constant 0.000000e+00 : f32
    %2 = vector.broadcast %cst : f32 to vector<1x16x128xf32>
    %3 = vector.extract_strided_slice %1 {offsets = [0, 0, 0], sizes = [15, 16, 128], strides = [1, 1, 1]} : vector<16x16x128xf32> to vector<15x16x128xf32>
    %4 = tpu.concatenate %2, %3 in 0 : vector<1x16x128xf32>, vector<15x16x128xf32> -> vector<16x16x128xf32>
    %5 = vector.extract_strided_slice %1 {offsets = [1, 0, 0], sizes = [15, 16, 128], strides = [1, 1, 1]} : vector<16x16x128xf32> to vector<15x16x128xf32>
    %6 = tpu.concatenate %5, %2 in 0 : vector<15x16x128xf32>, vector<1x16x128xf32> -> vector<16x16x128xf32>
    %c0_3 = arith.constant 0 : index
    %c0_4 = arith.constant 0 : index
    %c0_5 = arith.constant 0 : index
    %7 = vector.load %arg2[%c0_3, %c0_4, %c0_5] : memref<3x3x128xf32, #tpu.memory_space<vmem>>, vector<1x1x128xf32>
    %8 = vector.broadcast %7 : vector<1x1x128xf32> to vector<16x16x128xf32>
    %9 = arith.mulf %4, %8 : vector<16x16x128xf32>
    %c1 = arith.constant 1 : index
    %c0_6 = arith.constant 0 : index
    %c0_7 = arith.constant 0 : index
    %10 = vector.load %arg2[%c1, %c0_6, %c0_7] : memref<3x3x128xf32, #tpu.memory_space<vmem>>, vector<1x1x128xf32>
    %11 = vector.broadcast %10 : vector<1x1x128xf32> to vector<16x16x128xf32>
    %12 = arith.mulf %1, %11 : vector<16x16x128xf32>
    %13 = arith.addf %9, %12 : vector<16x16x128xf32>
    %c2 = arith.constant 2 : index
    %c0_8 = arith.constant 0 : index
    %c0_9 = arith.constant 0 : index
    %14 = vector.load %arg2[%c2, %c0_8, %c0_9] : memref<3x3x128xf32, #tpu.memory_space<vmem>>, vector<1x1x128xf32>
    %15 = vector.broadcast %14 : vector<1x1x128xf32> to vector<16x16x128xf32>
    %16 = arith.mulf %6, %15 : vector<16x16x128xf32>
    %17 = arith.addf %13, %16 : vector<16x16x128xf32>
    %c0_10 = arith.constant 0 : index
    %c1_11 = arith.constant 1 : index
    %c0_12 = arith.constant 0 : index
    %18 = vector.load %arg2[%c0_10, %c1_11, %c0_12] : memref<3x3x128xf32, #tpu.memory_space<vmem>>, vector<1x1x128xf32>
    %19 = vector.broadcast %18 : vector<1x1x128xf32> to vector<16x16x128xf32>
    %20 = arith.mulf %4, %19 : vector<16x16x128xf32>
    %c1_13 = arith.constant 1 : index
    %c1_14 = arith.constant 1 : index
    %c0_15 = arith.constant 0 : index
    %21 = vector.load %arg2[%c1_13, %c1_14, %c0_15] : memref<3x3x128xf32, #tpu.memory_space<vmem>>, vector<1x1x128xf32>
    %22 = vector.broadcast %21 : vector<1x1x128xf32> to vector<16x16x128xf32>
    %23 = arith.mulf %1, %22 : vector<16x16x128xf32>
    %24 = arith.addf %20, %23 : vector<16x16x128xf32>
    %c2_16 = arith.constant 2 : index
    %c1_17 = arith.constant 1 : index
    %c0_18 = arith.constant 0 : index
    %25 = vector.load %arg2[%c2_16, %c1_17, %c0_18] : memref<3x3x128xf32, #tpu.memory_space<vmem>>, vector<1x1x128xf32>
    %26 = vector.broadcast %25 : vector<1x1x128xf32> to vector<16x16x128xf32>
    %27 = arith.mulf %6, %26 : vector<16x16x128xf32>
    %28 = arith.addf %24, %27 : vector<16x16x128xf32>
    %c0_19 = arith.constant 0 : index
    %c2_20 = arith.constant 2 : index
    %c0_21 = arith.constant 0 : index
    %29 = vector.load %arg2[%c0_19, %c2_20, %c0_21] : memref<3x3x128xf32, #tpu.memory_space<vmem>>, vector<1x1x128xf32>
    %30 = vector.broadcast %29 : vector<1x1x128xf32> to vector<16x16x128xf32>
    %31 = arith.mulf %4, %30 : vector<16x16x128xf32>
    %c1_22 = arith.constant 1 : index
    %c2_23 = arith.constant 2 : index
    %c0_24 = arith.constant 0 : index
    %32 = vector.load %arg2[%c1_22, %c2_23, %c0_24] : memref<3x3x128xf32, #tpu.memory_space<vmem>>, vector<1x1x128xf32>
    %33 = vector.broadcast %32 : vector<1x1x128xf32> to vector<16x16x128xf32>
    %34 = arith.mulf %1, %33 : vector<16x16x128xf32>
    %35 = arith.addf %31, %34 : vector<16x16x128xf32>
    %c2_25 = arith.constant 2 : index
    %c2_26 = arith.constant 2 : index
    %c0_27 = arith.constant 0 : index
    %36 = vector.load %arg2[%c2_25, %c2_26, %c0_27] : memref<3x3x128xf32, #tpu.memory_space<vmem>>, vector<1x1x128xf32>
    %37 = vector.broadcast %36 : vector<1x1x128xf32> to vector<16x16x128xf32>
    %38 = arith.mulf %6, %37 : vector<16x16x128xf32>
    %39 = arith.addf %35, %38 : vector<16x16x128xf32>
    %cst_28 = arith.constant 0.000000e+00 : f32
    %40 = vector.broadcast %cst_28 : f32 to vector<16x1x128xf32>
    %41 = vector.extract_strided_slice %17 {offsets = [0, 0, 0], sizes = [16, 15, 128], strides = [1, 1, 1]} : vector<16x16x128xf32> to vector<16x15x128xf32>
    %42 = tpu.concatenate %40, %41 in 1 : vector<16x1x128xf32>, vector<16x15x128xf32> -> vector<16x16x128xf32>
    %43 = vector.extract_strided_slice %39 {offsets = [0, 1, 0], sizes = [16, 15, 128], strides = [1, 1, 1]} : vector<16x16x128xf32> to vector<16x15x128xf32>
    %44 = tpu.concatenate %43, %40 in 1 : vector<16x15x128xf32>, vector<16x1x128xf32> -> vector<16x16x128xf32>
    %45 = arith.addf %28, %42 : vector<16x16x128xf32>
    %46 = arith.addf %45, %44 : vector<16x16x128xf32>
    %47 = vector.shape_cast %46 : vector<16x16x128xf32> to vector<256x128xf32>
    %48 = arith.truncf %47 : vector<256x128xf32> to vector<256x128xbf16>
    %c0_29 = arith.constant 0 : index
    %c0_30 = arith.constant 0 : index
    %49 = vector.load %arg3[%c0_29, %c0_30] : memref<128x128xbf16, #tpu.memory_space<vmem>>, vector<128x128xbf16>
    %cst_31 = arith.constant dense<0.000000e+00> : vector<256x128xf32>
    %50 = tpu.matmul %48, %49, %cst_31 {dimension_numbers = #tpu.dot_dimension_numbers<[1], [0], [0], [1], [0, 0, 1, 1], [], []>} : vector<256x128xbf16>, vector<128x128xbf16>, vector<256x128xf32> -> vector<256x128xf32>
    %c0_32 = arith.constant 0 : index
    %c0_33 = arith.constant 0 : index
    %51 = vector.load %arg4[%c0_32, %c0_33] : memref<1x128xf32, #tpu.memory_space<vmem>>, vector<1x128xf32>
    %52 = vector.broadcast %51 : vector<1x128xf32> to vector<256x128xf32>
    %53 = arith.addf %50, %52 : vector<256x128xf32>
    %cst_34 = arith.constant 0.000000e+00 : f32
    %54 = vector.broadcast %cst_34 : f32 to vector<256x128xf32>
    %55 = arith.maximumf %53, %54 : vector<256x128xf32>
    %56 = vector.shape_cast %55 : vector<256x128xf32> to vector<16x16x128xf32>
    %cst_35 = arith.constant 0.000000e+00 : f32
    %57 = vector.broadcast %cst_35 : f32 to vector<1x16x128xf32>
    %58 = vector.extract_strided_slice %56 {offsets = [0, 0, 0], sizes = [15, 16, 128], strides = [1, 1, 1]} : vector<16x16x128xf32> to vector<15x16x128xf32>
    %59 = tpu.concatenate %57, %58 in 0 : vector<1x16x128xf32>, vector<15x16x128xf32> -> vector<16x16x128xf32>
    %60 = vector.extract_strided_slice %56 {offsets = [1, 0, 0], sizes = [15, 16, 128], strides = [1, 1, 1]} : vector<16x16x128xf32> to vector<15x16x128xf32>
    %61 = tpu.concatenate %60, %57 in 0 : vector<15x16x128xf32>, vector<1x16x128xf32> -> vector<16x16x128xf32>
    %c0_36 = arith.constant 0 : index
    %c0_37 = arith.constant 0 : index
    %c0_38 = arith.constant 0 : index
    %62 = vector.load %arg5[%c0_36, %c0_37, %c0_38] : memref<3x3x128xf32, #tpu.memory_space<vmem>>, vector<1x1x128xf32>
    %63 = vector.broadcast %62 : vector<1x1x128xf32> to vector<16x16x128xf32>
    %64 = arith.mulf %59, %63 : vector<16x16x128xf32>
    %c1_39 = arith.constant 1 : index
    %c0_40 = arith.constant 0 : index
    %c0_41 = arith.constant 0 : index
    %65 = vector.load %arg5[%c1_39, %c0_40, %c0_41] : memref<3x3x128xf32, #tpu.memory_space<vmem>>, vector<1x1x128xf32>
    %66 = vector.broadcast %65 : vector<1x1x128xf32> to vector<16x16x128xf32>
    %67 = arith.mulf %56, %66 : vector<16x16x128xf32>
    %68 = arith.addf %64, %67 : vector<16x16x128xf32>
    %c2_42 = arith.constant 2 : index
    %c0_43 = arith.constant 0 : index
    %c0_44 = arith.constant 0 : index
    %69 = vector.load %arg5[%c2_42, %c0_43, %c0_44] : memref<3x3x128xf32, #tpu.memory_space<vmem>>, vector<1x1x128xf32>
    %70 = vector.broadcast %69 : vector<1x1x128xf32> to vector<16x16x128xf32>
    %71 = arith.mulf %61, %70 : vector<16x16x128xf32>
    %72 = arith.addf %68, %71 : vector<16x16x128xf32>
    %c0_45 = arith.constant 0 : index
    %c1_46 = arith.constant 1 : index
    %c0_47 = arith.constant 0 : index
    %73 = vector.load %arg5[%c0_45, %c1_46, %c0_47] : memref<3x3x128xf32, #tpu.memory_space<vmem>>, vector<1x1x128xf32>
    %74 = vector.broadcast %73 : vector<1x1x128xf32> to vector<16x16x128xf32>
    %75 = arith.mulf %59, %74 : vector<16x16x128xf32>
    %c1_48 = arith.constant 1 : index
    %c1_49 = arith.constant 1 : index
    %c0_50 = arith.constant 0 : index
    %76 = vector.load %arg5[%c1_48, %c1_49, %c0_50] : memref<3x3x128xf32, #tpu.memory_space<vmem>>, vector<1x1x128xf32>
    %77 = vector.broadcast %76 : vector<1x1x128xf32> to vector<16x16x128xf32>
    %78 = arith.mulf %56, %77 : vector<16x16x128xf32>
    %79 = arith.addf %75, %78 : vector<16x16x128xf32>
    %c2_51 = arith.constant 2 : index
    %c1_52 = arith.constant 1 : index
    %c0_53 = arith.constant 0 : index
    %80 = vector.load %arg5[%c2_51, %c1_52, %c0_53] : memref<3x3x128xf32, #tpu.memory_space<vmem>>, vector<1x1x128xf32>
    %81 = vector.broadcast %80 : vector<1x1x128xf32> to vector<16x16x128xf32>
    %82 = arith.mulf %61, %81 : vector<16x16x128xf32>
    %83 = arith.addf %79, %82 : vector<16x16x128xf32>
    %c0_54 = arith.constant 0 : index
    %c2_55 = arith.constant 2 : index
    %c0_56 = arith.constant 0 : index
    %84 = vector.load %arg5[%c0_54, %c2_55, %c0_56] : memref<3x3x128xf32, #tpu.memory_space<vmem>>, vector<1x1x128xf32>
    %85 = vector.broadcast %84 : vector<1x1x128xf32> to vector<16x16x128xf32>
    %86 = arith.mulf %59, %85 : vector<16x16x128xf32>
    %c1_57 = arith.constant 1 : index
    %c2_58 = arith.constant 2 : index
    %c0_59 = arith.constant 0 : index
    %87 = vector.load %arg5[%c1_57, %c2_58, %c0_59] : memref<3x3x128xf32, #tpu.memory_space<vmem>>, vector<1x1x128xf32>
    %88 = vector.broadcast %87 : vector<1x1x128xf32> to vector<16x16x128xf32>
    %89 = arith.mulf %56, %88 : vector<16x16x128xf32>
    %90 = arith.addf %86, %89 : vector<16x16x128xf32>
    %c2_60 = arith.constant 2 : index
    %c2_61 = arith.constant 2 : index
    %c0_62 = arith.constant 0 : index
    %91 = vector.load %arg5[%c2_60, %c2_61, %c0_62] : memref<3x3x128xf32, #tpu.memory_space<vmem>>, vector<1x1x128xf32>
    %92 = vector.broadcast %91 : vector<1x1x128xf32> to vector<16x16x128xf32>
    %93 = arith.mulf %61, %92 : vector<16x16x128xf32>
    %94 = arith.addf %90, %93 : vector<16x16x128xf32>
    %cst_63 = arith.constant 0.000000e+00 : f32
    %95 = vector.broadcast %cst_63 : f32 to vector<16x1x128xf32>
    %96 = vector.extract_strided_slice %72 {offsets = [0, 0, 0], sizes = [16, 15, 128], strides = [1, 1, 1]} : vector<16x16x128xf32> to vector<16x15x128xf32>
    %97 = tpu.concatenate %95, %96 in 1 : vector<16x1x128xf32>, vector<16x15x128xf32> -> vector<16x16x128xf32>
    %98 = vector.extract_strided_slice %94 {offsets = [0, 1, 0], sizes = [16, 15, 128], strides = [1, 1, 1]} : vector<16x16x128xf32> to vector<16x15x128xf32>
    %99 = tpu.concatenate %98, %95 in 1 : vector<16x15x128xf32>, vector<16x1x128xf32> -> vector<16x16x128xf32>
    %100 = arith.addf %83, %97 : vector<16x16x128xf32>
    %101 = arith.addf %100, %99 : vector<16x16x128xf32>
    %102 = vector.shape_cast %101 : vector<16x16x128xf32> to vector<256x128xf32>
    %103 = arith.truncf %102 : vector<256x128xf32> to vector<256x128xbf16>
    %c0_64 = arith.constant 0 : index
    %c0_65 = arith.constant 0 : index
    %104 = vector.load %arg6[%c0_64, %c0_65] : memref<128x128xbf16, #tpu.memory_space<vmem>>, vector<128x128xbf16>
    %cst_66 = arith.constant dense<0.000000e+00> : vector<256x128xf32>
    %105 = tpu.matmul %103, %104, %cst_66 {dimension_numbers = #tpu.dot_dimension_numbers<[1], [0], [0], [1], [0, 0, 1, 1], [], []>} : vector<256x128xbf16>, vector<128x128xbf16>, vector<256x128xf32> -> vector<256x128xf32>
    %c0_67 = arith.constant 0 : index
    %c0_68 = arith.constant 0 : index
    %106 = vector.load %arg7[%c0_67, %c0_68] : memref<1x128xf32, #tpu.memory_space<vmem>>, vector<1x128xf32>
    %107 = vector.broadcast %106 : vector<1x128xf32> to vector<256x128xf32>
    %108 = arith.addf %105, %107 : vector<256x128xf32>
    %cst_69 = arith.constant 0.000000e+00 : f32
    %109 = vector.broadcast %cst_69 : f32 to vector<256x128xf32>
    %110 = arith.maximumf %108, %109 : vector<256x128xf32>
    %111 = vector.shape_cast %110 : vector<256x128xf32> to vector<16x16x128xf32>
    %112 = vector.shape_cast %111 : vector<16x16x128xf32> to vector<256x128xf32>
    %113 = arith.truncf %112 : vector<256x128xf32> to vector<256x128xbf16>
    %c0_70 = arith.constant 0 : index
    %c0_71 = arith.constant 0 : index
    %114 = vector.load %arg8[%c0_70, %c0_71] : memref<128x8xbf16, #tpu.memory_space<vmem>>, vector<128x8xbf16>
    %cst_72 = arith.constant dense<0.000000e+00> : vector<256x8xf32>
    %115 = tpu.matmul %113, %114, %cst_72 {dimension_numbers = #tpu.dot_dimension_numbers<[1], [0], [0], [1], [0, 0, 1, 1], [], []>} : vector<256x128xbf16>, vector<128x8xbf16>, vector<256x8xf32> -> vector<256x8xf32>
    %c0_73 = arith.constant 0 : index
    %c0_74 = arith.constant 0 : index
    %116 = vector.load %arg9[%c0_73, %c0_74] : memref<1x8xf32, #tpu.memory_space<vmem>>, vector<1x8xf32>
    %117 = vector.broadcast %116 : vector<1x8xf32> to vector<256x8xf32>
    %118 = arith.addf %115, %117 : vector<256x8xf32>
    %119 = vector.shape_cast %118 : vector<256x8xf32> to vector<16x16x8xf32>
    %120 = tpu.transpose %119, [0, 2, 1] : vector<16x16x8xf32> -> vector<16x8x16xf32>
    %121 = vector.shape_cast %120 : vector<16x8x16xf32> to vector<128x16xf32>
    %122 = arith.truncf %121 : vector<128x16xf32> to vector<128x16xbf16>
    %c0_75 = arith.constant 0 : index
    %c0_76 = arith.constant 0 : index
    %123 = vector.load %arg10[%c0_75, %c0_76] : memref<16x32xbf16, #tpu.memory_space<vmem>>, vector<16x32xbf16>
    %cst_77 = arith.constant dense<0.000000e+00> : vector<128x32xf32>
    %124 = tpu.matmul %122, %123, %cst_77 {dimension_numbers = #tpu.dot_dimension_numbers<[1], [0], [0], [1], [0, 0, 1, 1], [], []>} : vector<128x16xbf16>, vector<16x32xbf16>, vector<128x32xf32> -> vector<128x32xf32>
    %c0_78 = arith.constant 0 : index
    %c0_79 = arith.constant 0 : index
    %125 = vector.load %arg11[%c0_78, %c0_79] : memref<256x128xbf16, #tpu.memory_space<vmem>>, vector<256x128xbf16>
    %126 = arith.truncf %124 : vector<128x32xf32> to vector<128x32xbf16>
    %cst_80 = arith.constant dense<0.000000e+00> : vector<256x32xf32>
    %127 = tpu.matmul %125, %126, %cst_80 {dimension_numbers = #tpu.dot_dimension_numbers<[1], [0], [0], [1], [0, 0, 1, 1], [], []>} : vector<256x128xbf16>, vector<128x32xbf16>, vector<256x32xf32> -> vector<256x32xf32>
    %128 = vector.shape_cast %127 : vector<256x32xf32> to vector<1x8x32x32xf32>
    %c0_81 = arith.constant 0 : index
    %c0_82 = arith.constant 0 : index
    %c0_83 = arith.constant 0 : index
    %c0_84 = arith.constant 0 : index
    %129 = vector.load %arg12[%c0_81, %c0_82, %c0_83, %c0_84] : memref<1x8x32x32xf32, #tpu.memory_space<vmem>>, vector<1x8x32x32xf32>
    tpu.vector_store %arg12[%c0_81, %c0_82, %c0_83, %c0_84], %128 {strides = array<i32>} : memref<1x8x32x32xf32, #tpu.memory_space<vmem>>, vector<1x8x32x32xf32>,
    return
  }
  func.func @transform_0(%arg0: i32) -> (i32, i32, i32, i32) {
    %c0_i32 = arith.constant 0 : i32
    %c0_i32_0 = arith.constant 0 : i32
    %c0_i32_1 = arith.constant 0 : i32
    %c0_i32_2 = arith.constant 0 : i32
    return %arg0, %c0_i32, %c0_i32_0, %c0_i32_1 : i32, i32, i32, i32
  }
  func.func @transform_1(%arg0: i32) -> (i32, i32, i32) {
    %c0_i32 = arith.constant 0 : i32
    %c0_i32_0 = arith.constant 0 : i32
    %c0_i32_1 = arith.constant 0 : i32
    %c0_i32_2 = arith.constant 0 : i32
    return %c0_i32, %c0_i32_0, %c0_i32_1 : i32, i32, i32
  }
  func.func @transform_2(%arg0: i32) -> (i32, i32) {
    %c0_i32 = arith.constant 0 : i32
    %c0_i32_0 = arith.constant 0 : i32
    %c0_i32_1 = arith.constant 0 : i32
    return %c0_i32, %c0_i32_0 : i32, i32
  }
  func.func @transform_3(%arg0: i32) -> (i32, i32) {
    %c0_i32 = arith.constant 0 : i32
    %c0_i32_0 = arith.constant 0 : i32
    %c0_i32_1 = arith.constant 0 : i32
    return %c0_i32, %c0_i32_0 : i32, i32
  }
  func.func @transform_4(%arg0: i32) -> (i32, i32, i32) {
    %c0_i32 = arith.constant 0 : i32
    %c0_i32_0 = arith.constant 0 : i32
    %c0_i32_1 = arith.constant 0 : i32
    %c0_i32_2 = arith.constant 0 : i32
    return %c0_i32, %c0_i32_0, %c0_i32_1 : i32, i32, i32
  }
  func.func @transform_5(%arg0: i32) -> (i32, i32) {
    %c0_i32 = arith.constant 0 : i32
    %c0_i32_0 = arith.constant 0 : i32
    %c0_i32_1 = arith.constant 0 : i32
    return %c0_i32, %c0_i32_0 : i32, i32
  }
  func.func @transform_6(%arg0: i32) -> (i32, i32) {
    %c0_i32 = arith.constant 0 : i32
    %c0_i32_0 = arith.constant 0 : i32
    %c0_i32_1 = arith.constant 0 : i32
    return %c0_i32, %c0_i32_0 : i32, i32
  }
  func.func @transform_7(%arg0: i32) -> (i32, i32) {
    %c0_i32 = arith.constant 0 : i32
    %c0_i32_0 = arith.constant 0 : i32
    %c0_i32_1 = arith.constant 0 : i32
    return %c0_i32, %c0_i32_0 : i32, i32
  }
  func.func @transform_8(%arg0: i32) -> (i32, i32) {
    %c0_i32 = arith.constant 0 : i32
    %c0_i32_0 = arith.constant 0 : i32
    %c0_i32_1 = arith.constant 0 : i32
    return %c0_i32, %c0_i32_0 : i32, i32
  }
  func.func @transform_9(%arg0: i32) -> (i32, i32) {
    %c0_i32 = arith.constant 0 : i32
    %c0_i32_0 = arith.constant 0 : i32
    %c0_i32_1 = arith.constant 0 : i32
    return %c0_i32, %c0_i32_0 : i32, i32
  }
  func.func @transform_10(%arg0: i32) -> (i32, i32) {
    %c0_i32 = arith.constant 0 : i32
    %c0_i32_0 = arith.constant 0 : i32
    %c0_i32_1 = arith.constant 0 : i32
    return %c0_i32, %c0_i32_0 : i32, i32
  }
  func.func @transform_11(%arg0: i32) -> (i32, i32, i32, i32) {
    %c0_i32 = arith.constant 0 : i32
    %c0_i32_0 = arith.constant 0 : i32
    %c0_i32_1 = arith.constant 0 : i32
    %c0_i32_2 = arith.constant 0 : i32
    return %arg0, %c0_i32, %c0_i32_0, %c0_i32_1 : i32, i32, i32, i32
  }
}

</mosaic_0001>

<llo_original>
// kernel: classifier_forward.1
$region0: #{classifier_forward.1}
  #allocation0 [shape = 'u32[]', space=smem, size = 0x4, offset = 0x4, fixed_abs, tag = 'smem constant byte address 0x4 - core index']
  #allocation1 [shape = 'u32[144,128]{1,0:T(1,128)}', space=vmem, size = 0x12000, scoped, tag = 'internal scratch']
  %s0 = inlined_call_operand.vmem [shape: f32[2,16,16,128], index: 0, kind: input, shape index: {}]
  %s1 = inlined_call_operand.vmem [shape: f32[3,3,128], index: 1, kind: input, shape index: {}]
  %s2 = inlined_call_operand.vmem [shape: bf16[128,128], index: 2, kind: input, shape index: {}]
  %s3 = inlined_call_operand.vmem [shape: f32[1,128], index: 3, kind: input, shape index: {}]
  %s4 = inlined_call_operand.vmem [shape: f32[3,3,128], index: 4, kind: input, shape index: {}]
  %s5 = inlined_call_operand.vmem [shape: bf16[128,128], index: 5, kind: input, shape index: {}]
  %s6 = inlined_call_operand.vmem [shape: f32[1,128], index: 6, kind: input, shape index: {}]
  %s7 = inlined_call_operand.vmem [shape: bf16[128,8], index: 7, kind: input, shape index: {}]
  %s8 = inlined_call_operand.vmem [shape: f32[1,8], index: 8, kind: input, shape index: {}]
  %s9 = inlined_call_operand.vmem [shape: bf16[16,32], index: 9, kind: input, shape index: {}]
  %s10 = inlined_call_operand.hbm [shape: bf16[256,128], index: 10, kind: input, shape index: {}]
  %s11 = inlined_call_operand.hbm [shape: f32[2,8,32,32], index: 11, kind: output, shape index: {}]
  %s12 = sld [smem:[#allocation0]]
  $region81: #{classifier_forward.1} parent=0
    _
  %s14 = ssub.s32 1, %s12
  %s15 = scalar_select 0, %s14, %s12
  $region1: #{classifier_forward.1} parent=0
    #allocation2 [shape = 'u8[65536]{0}', space=vmem, size = 0x10000, scoped, tag = 'input window, operand 10, single buffered']
    #allocation3 [shape = 's32[2]{0}', space=sflag, size = 0x8, scoped, tag = 'scoped memory for classifier_forward.1']
    #allocation4 [shape = 's32[2]{0}', space=sflag, size = 0x8, scoped, tag = 'scoped memory for classifier_forward.1']
    #allocation5 [shape = 'u8[262144]{0}', space=vmem, size = 0x40000, scoped, tag = 'output window, operand 0']
    %16 = vsyncpa [#allocation3], 0
    %17 = vsyncpa [#allocation4], 0
    %s18 = scalar_lea.sflag [#allocation4], 1
    %19 = vsyncpa %s18, 0
    loop: start=0, step=1, limit=4
    $region2: #{classifier_forward.1} parent=1 // loop_pre_header
      _
    $region3: #{classifier_forward.1} parent=1 // loop_header
      %s21 = sphi 0, %s25
      %p22 = scmp.ge.s32.totalorder %s21, 4
      %s31 = sphi 0, %s33
      %s34 = sphi 0, %s31
      %s35 = sphi 0, %s34
      %s51 = sphi 0, %s35
      %s55 = sphi 0, %s55
      %s57 = sphi 0, %s55
      %s58 = sphi 0, %s57
      %s72 = sphi 0, %s58
      %s76 = sphi 0, %s76
      %s78 = sphi 0, %s76
      %s79 = sphi 0, %s78
      %s93 = sphi 0, %s79
      %s97 = sphi 0, %s97
      %s99 = sphi 0, %s97
      %s100 = sphi 0, %s99
      %s114 = sphi 0, %s100
      %s118 = sphi 0, %s118
      %s120 = sphi 0, %s118
      %s121 = sphi 0, %s120
      %s135 = sphi 0, %s121
      %s139 = sphi 0, %s139
      %s141 = sphi 0, %s139
      %s142 = sphi 0, %s141
      %s156 = sphi 0, %s142
      %s160 = sphi 0, %s160
      %s162 = sphi 0, %s160
      %s163 = sphi 0, %s162
      %s177 = sphi 0, %s163
      %s181 = sphi 0, %s181
      %s183 = sphi 0, %s181
      %s184 = sphi 0, %s183
      %s198 = sphi 0, %s184
      %s202 = sphi 0, %s202
      %s204 = sphi 0, %s202
      %s205 = sphi 0, %s204
      %s219 = sphi 0, %s205
      %s223 = sphi 0, %s223
      %s225 = sphi 0, %s223
      %s226 = sphi 0, %s225
      %s240 = sphi 0, %s226
      %s244 = sphi 0, %s244
      %s246 = sphi 0, %s244
      %s247 = sphi 0, %s246
      %s261 = sphi 0, %s247
      %s267 = sphi 0, %s269
      %s270 = sphi 0, %s267
      %s271 = sphi 0, %s270
      %s287 = sphi 0, %s271
    $region4: #{classifier_forward.1} parent=1 // loop_header_branch
      %24 = sbr.rel (%p22) target = $region8
    $region5: #{classifier_forward.1} parent=1 // loop_body
      %s26 = ssub.s32 %s21, 1
      %s27 = ssub.s32 %s21, 2
      %s28 = sadd.s32 %s21, 1
      %s29 = ssub.s32 %s21, %s28
      %p30 = scmp.eq.s32.totalorder %s29, 0
      %s32 = sadd.s32 %s31, 1
      %s33 = scalar_select %p30, %s31, %s32
      %p36 = pneg %p30
      %p37 = scmp.eq.s32.totalorder %s21, 1
      %p38 = por %p36, %p37
      %p39 = scmp.ne.s32.totalorder %s31, %s34
      %p40 = scmp.eq.s32.totalorder %s21, 0
      %p41 = por %p39, %p40
      %p42 = scmp.ne.s32.totalorder %s31, %s34
      %p43 = scmp.eq.s32.totalorder %s26, 1
      %p44 = por %p42, %p43
      %p45 = scmp.ne.s32.totalorder %s34, %s35
      %p46 = scmp.eq.s32.totalorder %s26, 0
      %p47 = por %p45, %p46
      %p48 = scmp.ne.s32.totalorder %s34, %s35
      %p49 = scmp.eq.s32.totalorder %s27, 1
      %p50 = por %p48, %p49
      %p52 = scmp.ne.s32.totalorder %s35, %s51
      %p53 = scmp.eq.s32.totalorder %s27, 0
      %p54 = por %p52, %p53
      %s56 = sadd.s32 %s55, 1
      %p59 = scmp.eq.s32.totalorder %s21, 1
      %p60 = scmp.ne.s32.totalorder %s55, %s57
      %p61 = scmp.eq.s32.totalorder %s21, 0
      %p62 = por %p60, %p61
      %p63 = scmp.ne.s32.totalorder %s55, %s57
      %p64 = scmp.eq.s32.totalorder %s26, 1
      %p65 = por %p63, %p64
      %p66 = scmp.ne.s32.totalorder %s57, %s58
      %p67 = scmp.eq.s32.totalorder %s26, 0
      %p68 = por %p66, %p67
      %p69 = scmp.ne.s32.totalorder %s57, %s58
      %p70 = scmp.eq.s32.totalorder %s27, 1
      %p71 = por %p69, %p70
      %p73 = scmp.ne.s32.totalorder %s58, %s72
      %p74 = scmp.eq.s32.totalorder %s27, 0
      %p75 = por %p73, %p74
      %s77 = sadd.s32 %s76, 1
      %p80 = scmp.eq.s32.totalorder %s21, 1
      %p81 = scmp.ne.s32.totalorder %s76, %s78
      %p82 = scmp.eq.s32.totalorder %s21, 0
      %p83 = por %p81, %p82
      %p84 = scmp.ne.s32.totalorder %s76, %s78
      %p85 = scmp.eq.s32.totalorder %s26, 1
      %p86 = por %p84, %p85
      %p87 = scmp.ne.s32.totalorder %s78, %s79
      %p88 = scmp.eq.s32.totalorder %s26, 0
      %p89 = por %p87, %p88
      %p90 = scmp.ne.s32.totalorder %s78, %s79
      %p91 = scmp.eq.s32.totalorder %s27, 1
      %p92 = por %p90, %p91
      %p94 = scmp.ne.s32.totalorder %s79, %s93
      %p95 = scmp.eq.s32.totalorder %s27, 0
      %p96 = por %p94, %p95
      %s98 = sadd.s32 %s97, 1
      %p101 = scmp.eq.s32.totalorder %s21, 1
      %p102 = scmp.ne.s32.totalorder %s97, %s99
      %p103 = scmp.eq.s32.totalorder %s21, 0
      %p104 = por %p102, %p103
      %p105 = scmp.ne.s32.totalorder %s97, %s99
      %p106 = scmp.eq.s32.totalorder %s26, 1
      %p107 = por %p105, %p106
      %p108 = scmp.ne.s32.totalorder %s99, %s100
      %p109 = scmp.eq.s32.totalorder %s26, 0
      %p110 = por %p108, %p109
      %p111 = scmp.ne.s32.totalorder %s99, %s100
      %p112 = scmp.eq.s32.totalorder %s27, 1
      %p113 = por %p111, %p112
      %p115 = scmp.ne.s32.totalorder %s100, %s114
      %p116 = scmp.eq.s32.totalorder %s27, 0
      %p117 = por %p115, %p116
      %s119 = sadd.s32 %s118, 1
      %p122 = scmp.eq.s32.totalorder %s21, 1
      %p123 = scmp.ne.s32.totalorder %s118, %s120
      %p124 = scmp.eq.s32.totalorder %s21, 0
      %p125 = por %p123, %p124
      %p126 = scmp.ne.s32.totalorder %s118, %s120
      %p127 = scmp.eq.s32.totalorder %s26, 1
      %p128 = por %p126, %p127
      %p129 = scmp.ne.s32.totalorder %s120, %s121
      %p130 = scmp.eq.s32.totalorder %s26, 0
      %p131 = por %p129, %p130
      %p132 = scmp.ne.s32.totalorder %s120, %s121
      %p133 = scmp.eq.s32.totalorder %s27, 1
      %p134 = por %p132, %p133
      %p136 = scmp.ne.s32.totalorder %s121, %s135
      %p137 = scmp.eq.s32.totalorder %s27, 0
      %p138 = por %p136, %p137
      %s140 = sadd.s32 %s139, 1
      %p143 = scmp.eq.s32.totalorder %s21, 1
      %p144 = scmp.ne.s32.totalorder %s139, %s141
      %p145 = scmp.eq.s32.totalorder %s21, 0
      %p146 = por %p144, %p145
      %p147 = scmp.ne.s32.totalorder %s139, %s141
      %p148 = scmp.eq.s32.totalorder %s26, 1
      %p149 = por %p147, %p148
      %p150 = scmp.ne.s32.totalorder %s141, %s142
      %p151 = scmp.eq.s32.totalorder %s26, 0
      %p152 = por %p150, %p151
      %p153 = scmp.ne.s32.totalorder %s141, %s142
      %p154 = scmp.eq.s32.totalorder %s27, 1
      %p155 = por %p153, %p154
      %p157 = scmp.ne.s32.totalorder %s142, %s156
      %p158 = scmp.eq.s32.totalorder %s27, 0
      %p159 = por %p157, %p158
      %s161 = sadd.s32 %s160, 1
      %p164 = scmp.eq.s32.totalorder %s21, 1
      %p165 = scmp.ne.s32.totalorder %s160, %s162
      %p166 = scmp.eq.s32.totalorder %s21, 0
      %p167 = por %p165, %p166
      %p168 = scmp.ne.s32.totalorder %s160, %s162
      %p169 = scmp.eq.s32.totalorder %s26, 1
      %p170 = por %p168, %p169
      %p171 = scmp.ne.s32.totalorder %s162, %s163
      %p172 = scmp.eq.s32.totalorder %s26, 0
      %p173 = por %p171, %p172
      %p174 = scmp.ne.s32.totalorder %s162, %s163
      %p175 = scmp.eq.s32.totalorder %s27, 1
      %p176 = por %p174, %p175
      %p178 = scmp.ne.s32.totalorder %s163, %s177
      %p179 = scmp.eq.s32.totalorder %s27, 0
      %p180 = por %p178, %p179
      %s182 = sadd.s32 %s181, 1
      %p185 = scmp.eq.s32.totalorder %s21, 1
      %p186 = scmp.ne.s32.totalorder %s181, %s183
      %p187 = scmp.eq.s32.totalorder %s21, 0
      %p188 = por %p186, %p187
      %p189 = scmp.ne.s32.totalorder %s181, %s183
      %p190 = scmp.eq.s32.totalorder %s26, 1
      %p191 = por %p189, %p190
      %p192 = scmp.ne.s32.totalorder %s183, %s184
      %p193 = scmp.eq.s32.totalorder %s26, 0
      %p194 = por %p192, %p193
      %p195 = scmp.ne.s32.totalorder %s183, %s184
      %p196 = scmp.eq.s32.totalorder %s27, 1
      %p197 = por %p195, %p196
      %p199 = scmp.ne.s32.totalorder %s184, %s198
      %p200 = scmp.eq.s32.totalorder %s27, 0
      %p201 = por %p199, %p200
      %s203 = sadd.s32 %s202, 1
      %p206 = scmp.eq.s32.totalorder %s21, 1
      %p207 = scmp.ne.s32.totalorder %s202, %s204
      %p208 = scmp.eq.s32.totalorder %s21, 0
      %p209 = por %p207, %p208
      %p210 = scmp.ne.s32.totalorder %s202, %s204
      %p211 = scmp.eq.s32.totalorder %s26, 1
      %p212 = por %p210, %p211
      %p213 = scmp.ne.s32.totalorder %s204, %s205
      %p214 = scmp.eq.s32.totalorder %s26, 0
      %p215 = por %p213, %p214
      %p216 = scmp.ne.s32.totalorder %s204, %s205
      %p217 = scmp.eq.s32.totalorder %s27, 1
      %p218 = por %p216, %p217
      %p220 = scmp.ne.s32.totalorder %s205, %s219
      %p221 = scmp.eq.s32.totalorder %s27, 0
      %p222 = por %p220, %p221
      %s224 = sadd.s32 %s223, 1
      %p227 = scmp.eq.s32.totalorder %s21, 1
      %p228 = scmp.ne.s32.totalorder %s223, %s225
      %p229 = scmp.eq.s32.totalorder %s21, 0
      %p230 = por %p228, %p229
      %p231 = scmp.ne.s32.totalorder %s223, %s225
      %p232 = scmp.eq.s32.totalorder %s26, 1
      %p233 = por %p231, %p232
      %p234 = scmp.ne.s32.totalorder %s225, %s226
      %p235 = scmp.eq.s32.totalorder %s26, 0
      %p236 = por %p234, %p235
      %p237 = scmp.ne.s32.totalorder %s225, %s226
      %p238 = scmp.eq.s32.totalorder %s27, 1
      %p239 = por %p237, %p238
      %p241 = scmp.ne.s32.totalorder %s226, %s240
      %p242 = scmp.eq.s32.totalorder %s27, 0
      %p243 = por %p241, %p242
      %s245 = sadd.s32 %s244, 1
      %p248 = scmp.eq.s32.totalorder %s21, 1
      %p249 = scmp.ne.s32.totalorder %s244, %s246
      %p250 = scmp.eq.s32.totalorder %s21, 0
      %p251 = por %p249, %p250
      %p252 = scmp.ne.s32.totalorder %s244, %s246
      %p253 = scmp.eq.s32.totalorder %s26, 1
      %p254 = por %p252, %p253
      %p255 = scmp.ne.s32.totalorder %s246, %s247
      %p256 = scmp.eq.s32.totalorder %s26, 0
      %p257 = por %p255, %p256
      %p258 = scmp.ne.s32.totalorder %s246, %s247
      %p259 = scmp.eq.s32.totalorder %s27, 1
      %p260 = por %p258, %p259
      %p262 = scmp.ne.s32.totalorder %s247, %s261
      %p263 = scmp.eq.s32.totalorder %s27, 0
      %p264 = por %p262, %p263
      %s265 = ssub.s32 %s21, %s28
      %p266 = scmp.eq.s32.totalorder %s265, 0
      %s268 = sadd.s32 %s267, 1
      %s269 = scalar_select %p266, %s267, %s268
      %p272 = pneg %p266
      %p273 = scmp.eq.s32.totalorder %s21, 1
      %p274 = por %p272, %p273
      %p275 = scmp.ne.s32.totalorder %s267, %s270
      %p276 = scmp.eq.s32.totalorder %s21, 0
      %p277 = por %p275, %p276
      %p278 = scmp.ne.s32.totalorder %s267, %s270
      %p279 = scmp.eq.s32.totalorder %s26, 1
      %p280 = por %p278, %p279
      %p281 = scmp.ne.s32.totalorder %s270, %s271
      %p282 = scmp.eq.s32.totalorder %s26, 0
      %p283 = por %p281, %p282
      %p284 = scmp.ne.s32.totalorder %s270, %s271
      %p285 = scmp.eq.s32.totalorder %s27, 1
      %p286 = por %p284, %p285
      %p288 = scmp.ne.s32.totalorder %s271, %s287
      %p289 = scmp.eq.s32.totalorder %s27, 0
      %p290 = por %p288, %p289
      %p291 = scmp.le.s32.totalorder 1, %s21
      %p292 = scmp.lt.s32.totalorder %s21, 3
      %p293 = pnand %p291, %p292
      %p294 = pneg %p293
      // Predicated region
      $region9: #{classifier_forward.1} parent=5 // pred_check
        _
      $region10: #{classifier_forward.1} parent=5 // pred_check_branch
        %296 = sbr.rel (%p293) target = $region12
      $region11: #{classifier_forward.1} parent=5 // pred_region
        %s297 = ssub.s32 %s21, 1
        // Predicated region
        $region13: #{classifier_forward.1} parent=11 // pred_check
          %p298 = pneg %p68
        $region14: #{classifier_forward.1} parent=11 // pred_check_branch
          %300 = sbr.rel (%p298) target = $region16
        $region15: #{classifier_forward.1} parent=11 // pred_region
          _
        $region16: #{classifier_forward.1} parent=11 // pred_fallthru
          _
        // Predicated region
        $region17: #{classifier_forward.1} parent=11 // pred_check
          %p301 = pneg %p89
        $region18: #{classifier_forward.1} parent=11 // pred_check_branch
          %303 = sbr.rel (%p301) target = $region20
        $region19: #{classifier_forward.1} parent=11 // pred_region
          _
        $region20: #{classifier_forward.1} parent=11 // pred_fallthru
          _
        // Predicated region
        $region21: #{classifier_forward.1} parent=11 // pred_check
          %p304 = pneg %p110
        $region22: #{classifier_forward.1} parent=11 // pred_check_branch
          %306 = sbr.rel (%p304) target = $region24
        $region23: #{classifier_forward.1} parent=11 // pred_region
          _
        $region24: #{classifier_forward.1} parent=11 // pred_fallthru
          _
        // Predicated region
        $region25: #{classifier_forward.1} parent=11 // pred_check
          %p307 = pneg %p131
        $region26: #{classifier_forward.1} parent=11 // pred_check_branch
          %309 = sbr.rel (%p307) target = $region28
        $region27: #{classifier_forward.1} parent=11 // pred_region
          _
        $region28: #{classifier_forward.1} parent=11 // pred_fallthru
          _
        // Predicated region
        $region29: #{classifier_forward.1} parent=11 // pred_check
          %p310 = pneg %p152
        $region30: #{classifier_forward.1} parent=11 // pred_check_branch
          %312 = sbr.rel (%p310) target = $region32
        $region31: #{classifier_forward.1} parent=11 // pred_region
          _
        $region32: #{classifier_forward.1} parent=11 // pred_fallthru
          _
        // Predicated region
        $region33: #{classifier_forward.1} parent=11 // pred_check
          %p313 = pneg %p173
        $region34: #{classifier_forward.1} parent=11 // pred_check_branch
          %315 = sbr.rel (%p313) target = $region36
        $region35: #{classifier_forward.1} parent=11 // pred_region
          _
        $region36: #{classifier_forward.1} parent=11 // pred_fallthru
          _
        // Predicated region
        $region37: #{classifier_forward.1} parent=11 // pred_check
          %p316 = pneg %p194
        $region38: #{classifier_forward.1} parent=11 // pred_check_branch
          %318 = sbr.rel (%p316) target = $region40
        $region39: #{classifier_forward.1} parent=11 // pred_region
          _
        $region40: #{classifier_forward.1} parent=11 // pred_fallthru
          _
        // Predicated region
        $region41: #{classifier_forward.1} parent=11 // pred_check
          %p319 = pneg %p215
        $region42: #{classifier_forward.1} parent=11 // pred_check_branch
          %321 = sbr.rel (%p319) target = $region44
        $region43: #{classifier_forward.1} parent=11 // pred_region
          _
        $region44: #{classifier_forward.1} parent=11 // pred_fallthru
          _
        // Predicated region
        $region45: #{classifier_forward.1} parent=11 // pred_check
          %p322 = pneg %p236
        $region46: #{classifier_forward.1} parent=11 // pred_check_branch
          %324 = sbr.rel (%p322) target = $region48
        $region47: #{classifier_forward.1} parent=11 // pred_region
          _
        $region48: #{classifier_forward.1} parent=11 // pred_fallthru
          _
        // Predicated region
        $region49: #{classifier_forward.1} parent=11 // pred_check
          %p325 = pneg %p257
        $region50: #{classifier_forward.1} parent=11 // pred_check_branch
          %327 = sbr.rel (%p325) target = $region52
        $region51: #{classifier_forward.1} parent=11 // pred_region
          %s329 = ssub.s32 2048, 2048
          %330 = vsyncadd [#allocation3], %s329
          %s331 = sshll.u32 [#allocation2], 4
          %s332 = int_to_ptr.vmem [resolvable:$true] %s331
          %337 = dma.hbm_to_vmem [thread:$0]  %s10, 2048, %s332, [#allocation3], 64, 64, 4
        $region52: #{classifier_forward.1} parent=11 // pred_fallthru
          _
      $region12: #{classifier_forward.1} parent=5 // pred_fallthru
        _
      %p338 = scmp.lt.s32.totalorder %s21, 2
      // Predicated region
      $region53: #{classifier_forward.1} parent=5 // pred_check
        %p339 = pneg %p338
      $region54: #{classifier_forward.1} parent=5 // pred_check_branch
        %341 = sbr.rel (%p339) target = $region56
      $region55: #{classifier_forward.1} parent=5 // pred_region
        // Predicated region
        $region57: #{classifier_forward.1} parent=55 // pred_check
          %p342 = pneg %p41
        $region58: #{classifier_forward.1} parent=55 // pred_check_branch
          %344 = sbr.rel (%p342) target = $region60
        $region59: #{classifier_forward.1} parent=55 // pred_region
          %p345 = scmp.lt.s32.totalorder %s21, 1
          %s346 = scalar_select %p345, %s21, 1
          %s347 = smul.addr %s346, 32
          %s348 = smul.addr %s347, 8
          %s349 = scalar_lea.vmem %s0, %s348
        $region60: #{classifier_forward.1} parent=55 // pred_fallthru
          _
      $region56: #{classifier_forward.1} parent=5 // pred_fallthru
        _
      %p350 = scmp.le.s32.totalorder 1, %s21
      %p351 = scmp.lt.s32.totalorder %s21, 3
      %p352 = pnand %p350, %p351
      %p353 = pneg %p352
      // Predicated region
      $region61: #{classifier_forward.1} parent=5 // pred_check
        _
      $region62: #{classifier_forward.1} parent=5 // pred_check_branch
        %355 = sbr.rel (%p352) target = $region64
      $region63: #{classifier_forward.1} parent=5 // pred_region
        %s356 = ssub.s32 %s21, 1
        // Predicated region
        $region65: #{classifier_forward.1} parent=63 // pred_check
          %p357 = pneg %p257
        $region66: #{classifier_forward.1} parent=63 // pred_check_branch
          %359 = sbr.rel (%p357) target = $region68
        $region67: #{classifier_forward.1} parent=63 // pred_region
          %360 = dma.done [#allocation3], 2048
        $region68: #{classifier_forward.1} parent=63 // pred_fallthru
          _
        %p361 = scmp.lt.s32.totalorder %s26, 1
        %s362 = scalar_select %p361, %s26, 1
        %s363 = smul.addr %s362, 32
        %s364 = smul.addr %s363, 8
        %s365 = scalar_lea.vmem %s0, %s364
        %p366 = pneg %p47
        %p367 = pneg %p44
        %p368 = pneg %p68
        %p369 = pneg %p65
        %p370 = pneg %p89
        %p371 = pneg %p86
        %p372 = pneg %p110
        %p373 = pneg %p107
        %p374 = pneg %p131
        %p375 = pneg %p128
        %p376 = pneg %p152
        %p377 = pneg %p149
        %p378 = pneg %p173
        %p379 = pneg %p170
        %p380 = pneg %p194
        %p381 = pneg %p191
        %p382 = pneg %p215
        %p383 = pneg %p212
        %p384 = pneg %p236
        %p385 = pneg %p233
        %p386 = pneg %p257
        %p387 = pneg %p254
        %p388 = pneg %p283
        %p389 = pneg %p280
        %s390 = sand.u32 %s270, 1
        %s391 = scalar_lea.sflag [#allocation4], %s390
        %s392 = sand.u32 %s270, 1
        %s393 = smul.addr %s392, 256
        %s394 = scalar_lea.vmem [#allocation5], %s393
        %p395 = scmp.lt.s32.totalorder %s26, 1
        %s396 = scalar_select %p395, %s26, 1
        %s397 = smul.addr %s396, 32
        %s398 = smul.addr %s397, 8
        %s399 = scalar_lea.vmem %s0, %s398
        %v401 = vld [vmem:[%s399] sm:$0xff]
        %v402 = vld [vmem:[%s399 + $0x8] sm:$0xff]
        %v403 = vld [vmem:[%s399 + $0x10] sm:$0xff]
        %v404 = vld [vmem:[%s399 + $0x18] sm:$0xff]
        %v405 = vld [vmem:[%s399 + $0x20] sm:$0xff]
        %v406 = vld [vmem:[%s399 + $0x28] sm:$0xff]
        %v407 = vld [vmem:[%s399 + $0x30] sm:$0xff]
        %v408 = vld [vmem:[%s399 + $0x38] sm:$0xff]
        %v409 = vld [vmem:[%s399 + $0x40] sm:$0xff]
        %v410 = vld [vmem:[%s399 + $0x48] sm:$0xff]
        %v411 = vld [vmem:[%s399 + $0x50] sm:$0xff]
        %v412 = vld [vmem:[%s399 + $0x58] sm:$0xff]
        %v413 = vld [vmem:[%s399 + $0x60] sm:$0xff]
        %v414 = vld [vmem:[%s399 + $0x68] sm:$0xff]
        %v415 = vld [vmem:[%s399 + $0x70] sm:$0xff]
        %v416 = vld [vmem:[%s399 + $0x78] sm:$0xff]
        %v417 = vld [vmem:[%s399 + $0x80] sm:$0xff]
        %v418 = vld [vmem:[%s399 + $0x88] sm:$0xff]
        %v419 = vld [vmem:[%s399 + $0x90] sm:$0xff]
        %v420 = vld [vmem:[%s399 + $0x98] sm:$0xff]
        %v421 = vld [vmem:[%s399 + $0xa0] sm:$0xff]
        %v422 = vld [vmem:[%s399 + $0xa8] sm:$0xff]
        %v423 = vld [vmem:[%s399 + $0xb0] sm:$0xff]
        %v424 = vld [vmem:[%s399 + $0xb8] sm:$0xff]
        %v425 = vld [vmem:[%s399 + $0xc0] sm:$0xff]
        %v426 = vld [vmem:[%s399 + $0xc8] sm:$0xff]
        %v427 = vld [vmem:[%s399 + $0xd0] sm:$0xff]
        %v428 = vld [vmem:[%s399 + $0xd8] sm:$0xff]
        %v429 = vld [vmem:[%s399 + $0xe0] sm:$0xff]
        %v430 = vld [vmem:[%s399 + $0xe8] sm:$0xff]
        %v431 = vld [vmem:[%s399 + $0xf0] sm:$0xff]
        %v432 = vld [vmem:[%s399 + $0xf8] sm:$0xff]
        %v433 = vld [vmem:[%s1] sm:$0x1]
        %v434 = vlaneseq
        %v435 = vshrl.u32 %v434, 7
        %v436 = vsub.s32 0, %v435
        %v437 = vrot.slane %v433, %v436
        %v438 = vmul.f32 %v437, 0.0
        %v439 = vmul.f32 %v401, %v437
        %v440 = vmul.f32 %v402, %v437
        %v441 = vmul.f32 %v403, %v437
        %v442 = vmul.f32 %v404, %v437
        %v443 = vmul.f32 %v405, %v437
        %v444 = vmul.f32 %v406, %v437
        %v445 = vmul.f32 %v407, %v437
        %v446 = vmul.f32 %v408, %v437
        %v447 = vmul.f32 %v409, %v437
        %v448 = vmul.f32 %v410, %v437
        %v449 = vmul.f32 %v411, %v437
        %v450 = vmul.f32 %v412, %v437
        %v451 = vmul.f32 %v413, %v437
        %v452 = vmul.f32 %v414, %v437
        %v453 = vmul.f32 %v415, %v437
        %v454 = vmul.f32 %v416, %v437
        %v455 = vmul.f32 %v417, %v437
        %v456 = vmul.f32 %v418, %v437
        %v457 = vmul.f32 %v419, %v437
        %v458 = vmul.f32 %v420, %v437
        %v459 = vmul.f32 %v421, %v437
        %v460 = vmul.f32 %v422, %v437
        %v461 = vmul.f32 %v423, %v437
        %v462 = vmul.f32 %v424, %v437
        %v463 = vmul.f32 %v425, %v437
        %v464 = vmul.f32 %v426, %v437
        %v465 = vmul.f32 %v427, %v437
        %v466 = vmul.f32 %v428, %v437
        %v467 = vmul.f32 %v429, %v437
        %v468 = vmul.f32 %v430, %v437
        %s469 = scalar_lea.vmem %s1, 4
        %v470 = vld [vmem:[%s469] sm:$0x1]
        %v471 = vlaneseq
        %v472 = vshrl.u32 %v471, 7
        %v473 = vsub.s32 0, %v472
        %v474 = vrot.slane %v470, %v473
        %v475 = vmul.f32 %v401, %v474
        %v476 = vmul.f32 %v402, %v474
        %v477 = vmul.f32 %v403, %v474
        %v478 = vmul.f32 %v404, %v474
        %v479 = vmul.f32 %v405, %v474
        %v480 = vmul.f32 %v406, %v474
        %v481 = vmul.f32 %v407, %v474
        %v482 = vmul.f32 %v408, %v474
        %v483 = vmul.f32 %v409, %v474
        %v484 = vmul.f32 %v410, %v474
        %v485 = vmul.f32 %v411, %v474
        %v486 = vmul.f32 %v412, %v474
        %v487 = vmul.f32 %v413, %v474
        %v488 = vmul.f32 %v414, %v474
        %v489 = vmul.f32 %v415, %v474
        %v490 = vmul.f32 %v416, %v474
        %v491 = vmul.f32 %v417, %v474
        %v492 = vmul.f32 %v418, %v474
        %v493 = vmul.f32 %v419, %v474
        %v494 = vmul.f32 %v420, %v474
        %v495 = vmul.f32 %v421, %v474
        %v496 = vmul.f32 %v422, %v474
        %v497 = vmul.f32 %v423, %v474
        %v498 = vmul.f32 %v424, %v474
        %v499 = vmul.f32 %v425, %v474
        %v500 = vmul.f32 %v426, %v474
        %v501 = vmul.f32 %v427, %v474
        %v502 = vmul.f32 %v428, %v474
        %v503 = vmul.f32 %v429, %v474
        %v504 = vmul.f32 %v430, %v474
        %v505 = vmul.f32 %v431, %v474
        %v506 = vmul.f32 %v432, %v474
        %v507 = vadd.f32 %v438, %v475
        %v508 = vadd.f32 %v438, %v476
        %v509 = vadd.f32 %v439, %v477
        %v510 = vadd.f32 %v440, %v478
        %v511 = vadd.f32 %v441, %v479
        %v512 = vadd.f32 %v442, %v480
        %v513 = vadd.f32 %v443, %v481
        %v514 = vadd.f32 %v444, %v482
        %v515 = vadd.f32 %v445, %v483
        %v516 = vadd.f32 %v446, %v484
        %v517 = vadd.f32 %v447, %v485
        %v518 = vadd.f32 %v448, %v486
        %v519 = vadd.f32 %v449, %v487
        %v520 = vadd.f32 %v450, %v488
        %v521 = vadd.f32 %v451, %v489
        %v522 = vadd.f32 %v452, %v490
        %v523 = vadd.f32 %v453, %v491
        %v524 = vadd.f32 %v454, %v492
        %v525 = vadd.f32 %v455, %v493
        %v526 = vadd.f32 %v456, %v494
        %v527 = vadd.f32 %v457, %v495
        %v528 = vadd.f32 %v458, %v496
        %v529 = vadd.f32 %v459, %v497
        %v530 = vadd.f32 %v460, %v498
        %v531 = vadd.f32 %v461, %v499
        %v532 = vadd.f32 %v462, %v500
        %v533 = vadd.f32 %v463, %v501
        %v534 = vadd.f32 %v464, %v502
        %v535 = vadd.f32 %v465, %v503
        %v536 = vadd.f32 %v466, %v504
        %v537 = vadd.f32 %v467, %v505
        %v538 = vadd.f32 %v468, %v506
        %s539 = scalar_lea.vmem %s1, 8
        %v540 = vld [vmem:[%s539] sm:$0x1]
        %v541 = vlaneseq
        %v542 = vshrl.u32 %v541, 7
        %v543 = vsub.s32 0, %v542
        %v544 = vrot.slane %v540, %v543
        %v545 = vmul.f32 %v403, %v544
        %v546 = vmul.f32 %v404, %v544
        %v547 = vmul.f32 %v405, %v544
        %v548 = vmul.f32 %v406, %v544
        %v549 = vmul.f32 %v407, %v544
        %v550 = vmul.f32 %v408, %v544
        %v551 = vmul.f32 %v409, %v544
        %v552 = vmul.f32 %v410, %v544
        %v553 = vmul.f32 %v411, %v544
        %v554 = vmul.f32 %v412, %v544
        %v555 = vmul.f32 %v413, %v544
        %v556 = vmul.f32 %v414, %v544
        %v557 = vmul.f32 %v415, %v544
        %v558 = vmul.f32 %v416, %v544
        %v559 = vmul.f32 %v417, %v544
        %v560 = vmul.f32 %v418, %v544
        %v561 = vmul.f32 %v419, %v544
        %v562 = vmul.f32 %v420, %v544
        %v563 = vmul.f32 %v421, %v544
        %v564 = vmul.f32 %v422, %v544
        %v565 = vmul.f32 %v423, %v544
        %v566 = vmul.f32 %v424, %v544
        %v567 = vmul.f32 %v425, %v544
        %v568 = vmul.f32 %v426, %v544
        %v569 = vmul.f32 %v427, %v544
        %v570 = vmul.f32 %v428, %v544
        %v571 = vmul.f32 %v429, %v544
        %v572 = vmul.f32 %v430, %v544
        %v573 = vmul.f32 %v431, %v544
        %v574 = vmul.f32 %v432, %v544
        %v575 = vmul.f32 %v544, 0.0
        %v576 = vadd.f32 %v507, %v545
        %v577 = vadd.f32 %v508, %v546
        %v578 = vadd.f32 %v509, %v547
        %v579 = vadd.f32 %v510, %v548
        %v580 = vadd.f32 %v511, %v549
        %v581 = vadd.f32 %v512, %v550
        %v582 = vadd.f32 %v513, %v551
        %v583 = vadd.f32 %v514, %v552
        %v584 = vadd.f32 %v515, %v553
        %v585 = vadd.f32 %v516, %v554
        %v586 = vadd.f32 %v517, %v555
        %v587 = vadd.f32 %v518, %v556
        %v588 = vadd.f32 %v519, %v557
        %v589 = vadd.f32 %v520, %v558
        %v590 = vadd.f32 %v521, %v559
        %v591 = vadd.f32 %v522, %v560
        %v592 = vadd.f32 %v523, %v561
        %v593 = vadd.f32 %v524, %v562
        %v594 = vadd.f32 %v525, %v563
        %v595 = vadd.f32 %v526, %v564
        %v596 = vadd.f32 %v527, %v565
        %v597 = vadd.f32 %v528, %v566
        %v598 = vadd.f32 %v529, %v567
        %v599 = vadd.f32 %v530, %v568
        %v600 = vadd.f32 %v531, %v569
        %v601 = vadd.f32 %v532, %v570
        %v602 = vadd.f32 %v533, %v571
        %v603 = vadd.f32 %v534, %v572
        %v604 = vadd.f32 %v535, %v573
        %v605 = vadd.f32 %v536, %v574
        %v606 = vadd.f32 %v537, %v575
        %v607 = vadd.f32 %v538, %v575
        %v608 = vld [vmem:[%s1 + $0x1] sm:$0x1]
        %v609 = vlaneseq
        %v610 = vshrl.u32 %v609, 7
        %v611 = vsub.s32 0, %v610
        %v612 = vrot.slane %v608, %v611
        %v613 = vmul.f32 %v612, 0.0
        %v614 = vmul.f32 %v401, %v612
        %v615 = vmul.f32 %v402, %v612
        %v616 = vmul.f32 %v403, %v612
        %v617 = vmul.f32 %v404, %v612
        %v618 = vmul.f32 %v405, %v612
        %v619 = vmul.f32 %v406, %v612
        %v620 = vmul.f32 %v407, %v612
        %v621 = vmul.f32 %v408, %v612
        %v622 = vmul.f32 %v409, %v612
        %v623 = vmul.f32 %v410, %v612
        %v624 = vmul.f32 %v411, %v612
        %v625 = vmul.f32 %v412, %v612
        %v626 = vmul.f32 %v413, %v612
        %v627 = vmul.f32 %v414, %v612
        %v628 = vmul.f32 %v415, %v612
        %v629 = vmul.f32 %v416, %v612
        %v630 = vmul.f32 %v417, %v612
        %v631 = vmul.f32 %v418, %v612
        %v632 = vmul.f32 %v419, %v612
        %v633 = vmul.f32 %v420, %v612
        %v634 = vmul.f32 %v421, %v612
        %v635 = vmul.f32 %v422, %v612
        %v636 = vmul.f32 %v423, %v612
        %v637 = vmul.f32 %v424, %v612
        %v638 = vmul.f32 %v425, %v612
        %v639 = vmul.f32 %v426, %v612
        %v640 = vmul.f32 %v427, %v612
        %v641 = vmul.f32 %v428, %v612
        %v642 = vmul.f32 %v429, %v612
        %v643 = vmul.f32 %v430, %v612
        %v644 = vld [vmem:[%s469 + $0x1] sm:$0x1]
        %v645 = vlaneseq
        %v646 = vshrl.u32 %v645, 7
        %v647 = vsub.s32 0, %v646
        %v648 = vrot.slane %v644, %v647
        %v649 = vmul.f32 %v401, %v648
        %v650 = vmul.f32 %v402, %v648
        %v651 = vmul.f32 %v403, %v648
        %v652 = vmul.f32 %v404, %v648
        %v653 = vmul.f32 %v405, %v648
        %v654 = vmul.f32 %v406, %v648
        %v655 = vmul.f32 %v407, %v648
        %v656 = vmul.f32 %v408, %v648
        %v657 = vmul.f32 %v409, %v648
        %v658 = vmul.f32 %v410, %v648
        %v659 = vmul.f32 %v411, %v648
        %v660 = vmul.f32 %v412, %v648
        %v661 = vmul.f32 %v413, %v648
        %v662 = vmul.f32 %v414, %v648
        %v663 = vmul.f32 %v415, %v648
        %v664 = vmul.f32 %v416, %v648
        %v665 = vmul.f32 %v417, %v648
        %v666 = vmul.f32 %v418, %v648
        %v667 = vmul.f32 %v419, %v648
        %v668 = vmul.f32 %v420, %v648
        %v669 = vmul.f32 %v421, %v648
        %v670 = vmul.f32 %v422, %v648
        %v671 = vmul.f32 %v423, %v648
        %v672 = vmul.f32 %v424, %v648
        %v673 = vmul.f32 %v425, %v648
        %v674 = vmul.f32 %v426, %v648
        %v675 = vmul.f32 %v427, %v648
        %v676 = vmul.f32 %v428, %v648
        %v677 = vmul.f32 %v429, %v648
        %v678 = vmul.f32 %v430, %v648
        %v679 = vmul.f32 %v431, %v648
        %v680 = vmul.f32 %v432, %v648
        %v681 = vadd.f32 %v613, %v649
        %v682 = vadd.f32 %v613, %v650
        %v683 = vadd.f32 %v614, %v651
        %v684 = vadd.f32 %v615, %v652
        %v685 = vadd.f32 %v616, %v653
        %v686 = vadd.f32 %v617, %v654
        %v687 = vadd.f32 %v618, %v655
        %v688 = vadd.f32 %v619, %v656
        %v689 = vadd.f32 %v620, %v657
        %v690 = vadd.f32 %v621, %v658
        %v691 = vadd.f32 %v622, %v659
        %v692 = vadd.f32 %v623, %v660
        %v693 = vadd.f32 %v624, %v661
        %v694 = vadd.f32 %v625, %v662
        %v695 = vadd.f32 %v626, %v663
        %v696 = vadd.f32 %v627, %v664
        %v697 = vadd.f32 %v628, %v665
        %v698 = vadd.f32 %v629, %v666
        %v699 = vadd.f32 %v630, %v667
        %v700 = vadd.f32 %v631, %v668
        %v701 = vadd.f32 %v632, %v669
        %v702 = vadd.f32 %v633, %v670
        %v703 = vadd.f32 %v634, %v671
        %v704 = vadd.f32 %v635, %v672
        %v705 = vadd.f32 %v636, %v673
        %v706 = vadd.f32 %v637, %v674
        %v707 = vadd.f32 %v638, %v675
        %v708 = vadd.f32 %v639, %v676
        %v709 = vadd.f32 %v640, %v677
        %v710 = vadd.f32 %v641, %v678
        %v711 = vadd.f32 %v642, %v679
        %v712 = vadd.f32 %v643, %v680
        %v713 = vld [vmem:[%s539 + $0x1] sm:$0x1]
        %v714 = vlaneseq
        %v715 = vshrl.u32 %v714, 7
        %v716 = vsub.s32 0, %v715
        %v717 = vrot.slane %v713, %v716
        %v718 = vmul.f32 %v403, %v717
        %v719 = vmul.f32 %v404, %v717
        %v720 = vmul.f32 %v405, %v717
        %v721 = vmul.f32 %v406, %v717
        %v722 = vmul.f32 %v407, %v717
        %v723 = vmul.f32 %v408, %v717
        %v724 = vmul.f32 %v409, %v717
        %v725 = vmul.f32 %v410, %v717
        %v726 = vmul.f32 %v411, %v717
        %v727 = vmul.f32 %v412, %v717
        %v728 = vmul.f32 %v413, %v717
        %v729 = vmul.f32 %v414, %v717
        %v730 = vmul.f32 %v415, %v717
        %v731 = vmul.f32 %v416, %v717
        %v732 = vmul.f32 %v417, %v717
        %v733 = vmul.f32 %v418, %v717
        %v734 = vmul.f32 %v419, %v717
        %v735 = vmul.f32 %v420, %v717
        %v736 = vmul.f32 %v421, %v717
        %v737 = vmul.f32 %v422, %v717
        %v738 = vmul.f32 %v423, %v717
        %v739 = vmul.f32 %v424, %v717
        %v740 = vmul.f32 %v425, %v717
        %v741 = vmul.f32 %v426, %v717
        %v742 = vmul.f32 %v427, %v717
        %v743 = vmul.f32 %v428, %v717
        %v744 = vmul.f32 %v429, %v717
        %v745 = vmul.f32 %v430, %v717
        %v746 = vmul.f32 %v431, %v717
        %v747 = vmul.f32 %v432, %v717
        %v748 = vmul.f32 %v717, 0.0
        %v749 = vadd.f32 %v681, %v718
        %v750 = vadd.f32 %v682, %v719
        %v751 = vadd.f32 %v683, %v720
        %v752 = vadd.f32 %v684, %v721
        %v753 = vadd.f32 %v685, %v722
        %v754 = vadd.f32 %v686, %v723
        %v755 = vadd.f32 %v687, %v724
        %v756 = vadd.f32 %v688, %v725
        %v757 = vadd.f32 %v689, %v726
        %v758 = vadd.f32 %v690, %v727
        %v759 = vadd.f32 %v691, %v728
        %v760 = vadd.f32 %v692, %v729
        %v761 = vadd.f32 %v693, %v730
        %v762 = vadd.f32 %v694, %v731
        %v763 = vadd.f32 %v695, %v732
        %v764 = vadd.f32 %v696, %v733
        %v765 = vadd.f32 %v697, %v734
        %v766 = vadd.f32 %v698, %v735
        %v767 = vadd.f32 %v699, %v736
        %v768 = vadd.f32 %v700, %v737
        %v769 = vadd.f32 %v701, %v738
        %v770 = vadd.f32 %v702, %v739
        %v771 = vadd.f32 %v703, %v740
        %v772 = vadd.f32 %v704, %v741
        %v773 = vadd.f32 %v705, %v742
        %v774 = vadd.f32 %v706, %v743
        %v775 = vadd.f32 %v707, %v744
        %v776 = vadd.f32 %v708, %v745
        %v777 = vadd.f32 %v709, %v746
        %v778 = vadd.f32 %v710, %v747
        %v779 = vadd.f32 %v711, %v748
        %v780 = vadd.f32 %v712, %v748
        %v781 = vld [vmem:[%s1 + $0x2] sm:$0x1]
        %v782 = vlaneseq
        %v783 = vshrl.u32 %v782, 7
        %v784 = vsub.s32 0, %v783
        %v785 = vrot.slane %v781, %v784
        %v786 = vmul.f32 %v785, 0.0
        %v787 = vmul.f32 %v401, %v785
        %v788 = vmul.f32 %v402, %v785
        %v789 = vmul.f32 %v403, %v785
        %v790 = vmul.f32 %v404, %v785
        %v791 = vmul.f32 %v405, %v785
        %v792 = vmul.f32 %v406, %v785
        %v793 = vmul.f32 %v407, %v785
        %v794 = vmul.f32 %v408, %v785
        %v795 = vmul.f32 %v409, %v785
        %v796 = vmul.f32 %v410, %v785
        %v797 = vmul.f32 %v411, %v785
        %v798 = vmul.f32 %v412, %v785
        %v799 = vmul.f32 %v413, %v785
        %v800 = vmul.f32 %v414, %v785
        %v801 = vmul.f32 %v415, %v785
        %v802 = vmul.f32 %v416, %v785
        %v803 = vmul.f32 %v417, %v785
        %v804 = vmul.f32 %v418, %v785
        %v805 = vmul.f32 %v419, %v785
        %v806 = vmul.f32 %v420, %v785
        %v807 = vmul.f32 %v421, %v785
        %v808 = vmul.f32 %v422, %v785
        %v809 = vmul.f32 %v423, %v785
        %v810 = vmul.f32 %v424, %v785
        %v811 = vmul.f32 %v425, %v785
        %v812 = vmul.f32 %v426, %v785
        %v813 = vmul.f32 %v427, %v785
        %v814 = vmul.f32 %v428, %v785
        %v815 = vmul.f32 %v429, %v785
        %v816 = vmul.f32 %v430, %v785
        %v817 = vld [vmem:[%s469 + $0x2] sm:$0x1]
        %v818 = vlaneseq
        %v819 = vshrl.u32 %v818, 7
        %v820 = vsub.s32 0, %v819
        %v821 = vrot.slane %v817, %v820
        %v822 = vmul.f32 %v401, %v821
        %v823 = vmul.f32 %v402, %v821
        %v824 = vmul.f32 %v403, %v821
        %v825 = vmul.f32 %v404, %v821
        %v826 = vmul.f32 %v405, %v821
        %v827 = vmul.f32 %v406, %v821
        %v828 = vmul.f32 %v407, %v821
        %v829 = vmul.f32 %v408, %v821
        %v830 = vmul.f32 %v409, %v821
        %v831 = vmul.f32 %v410, %v821
        %v832 = vmul.f32 %v411, %v821
        %v833 = vmul.f32 %v412, %v821
        %v834 = vmul.f32 %v413, %v821
        %v835 = vmul.f32 %v414, %v821
        %v836 = vmul.f32 %v415, %v821
        %v837 = vmul.f32 %v416, %v821
        %v838 = vmul.f32 %v417, %v821
        %v839 = vmul.f32 %v418, %v821
        %v840 = vmul.f32 %v419, %v821
        %v841 = vmul.f32 %v420, %v821
        %v842 = vmul.f32 %v421, %v821
        %v843 = vmul.f32 %v422, %v821
        %v844 = vmul.f32 %v423, %v821
        %v845 = vmul.f32 %v424, %v821
        %v846 = vmul.f32 %v425, %v821
        %v847 = vmul.f32 %v426, %v821
        %v848 = vmul.f32 %v427, %v821
        %v849 = vmul.f32 %v428, %v821
        %v850 = vmul.f32 %v429, %v821
        %v851 = vmul.f32 %v430, %v821
        %v852 = vmul.f32 %v431, %v821
        %v853 = vmul.f32 %v432, %v821
        %v854 = vadd.f32 %v786, %v822
        %v855 = vadd.f32 %v786, %v823
        %v856 = vadd.f32 %v787, %v824
        %v857 = vadd.f32 %v788, %v825
        %v858 = vadd.f32 %v789, %v826
        %v859 = vadd.f32 %v790, %v827
        %v860 = vadd.f32 %v791, %v828
        %v861 = vadd.f32 %v792, %v829
        %v862 = vadd.f32 %v793, %v830
        %v863 = vadd.f32 %v794, %v831
        %v864 = vadd.f32 %v795, %v832
        %v865 = vadd.f32 %v796, %v833
        %v866 = vadd.f32 %v797, %v834
        %v867 = vadd.f32 %v798, %v835
        %v868 = vadd.f32 %v799, %v836
        %v869 = vadd.f32 %v800, %v837
        %v870 = vadd.f32 %v801, %v838
        %v871 = vadd.f32 %v802, %v839
        %v872 = vadd.f32 %v803, %v840
        %v873 = vadd.f32 %v804, %v841
        %v874 = vadd.f32 %v805, %v842
        %v875 = vadd.f32 %v806, %v843
        %v876 = vadd.f32 %v807, %v844
        %v877 = vadd.f32 %v808, %v845
        %v878 = vadd.f32 %v809, %v846
        %v879 = vadd.f32 %v810, %v847
        %v880 = vadd.f32 %v811, %v848
        %v881 = vadd.f32 %v812, %v849
        %v882 = vadd.f32 %v813, %v850
        %v883 = vadd.f32 %v814, %v851
        %v884 = vadd.f32 %v815, %v852
        %v885 = vadd.f32 %v816, %v853
        %v886 = vld [vmem:[%s539 + $0x2] sm:$0x1]
        %v887 = vlaneseq
        %v888 = vshrl.u32 %v887, 7
        %v889 = vsub.s32 0, %v888
        %v890 = vrot.slane %v886, %v889
        %v891 = vmul.f32 %v403, %v890
        %v892 = vmul.f32 %v404, %v890
        %v893 = vmul.f32 %v405, %v890
        %v894 = vmul.f32 %v406, %v890
        %v895 = vmul.f32 %v407, %v890
        %v896 = vmul.f32 %v408, %v890
        %v897 = vmul.f32 %v409, %v890
        %v898 = vmul.f32 %v410, %v890
        %v899 = vmul.f32 %v411, %v890
        %v900 = vmul.f32 %v412, %v890
        %v901 = vmul.f32 %v413, %v890
        %v902 = vmul.f32 %v414, %v890
        %v903 = vmul.f32 %v415, %v890
        %v904 = vmul.f32 %v416, %v890
        %v905 = vmul.f32 %v417, %v890
        %v906 = vmul.f32 %v418, %v890
        %v907 = vmul.f32 %v419, %v890
        %v908 = vmul.f32 %v420, %v890
        %v909 = vmul.f32 %v421, %v890
        %v910 = vmul.f32 %v422, %v890
        %v911 = vmul.f32 %v423, %v890
        %v912 = vmul.f32 %v424, %v890
        %v913 = vmul.f32 %v425, %v890
        %v914 = vmul.f32 %v426, %v890
        %v915 = vmul.f32 %v427, %v890
        %v916 = vmul.f32 %v428, %v890
        %v917 = vmul.f32 %v429, %v890
        %v918 = vmul.f32 %v430, %v890
        %v919 = vmul.f32 %v431, %v890
        %v920 = vmul.f32 %v432, %v890
        %v921 = vmul.f32 %v890, 0.0
        %v922 = vadd.f32 %v854, %v891
        %v923 = vadd.f32 %v855, %v892
        %v924 = vadd.f32 %v856, %v893
        %v925 = vadd.f32 %v857, %v894
        %v926 = vadd.f32 %v858, %v895
        %v927 = vadd.f32 %v859, %v896
        %v928 = vadd.f32 %v860, %v897
        %v929 = vadd.f32 %v861, %v898
        %v930 = vadd.f32 %v862, %v899
        %v931 = vadd.f32 %v863, %v900
        %v932 = vadd.f32 %v864, %v901
        %v933 = vadd.f32 %v865, %v902
        %v934 = vadd.f32 %v866, %v903
        %v935 = vadd.f32 %v867, %v904
        %v936 = vadd.f32 %v868, %v905
        %v937 = vadd.f32 %v869, %v906
        %v938 = vadd.f32 %v870, %v907
        %v939 = vadd.f32 %v871, %v908
        %v940 = vadd.f32 %v872, %v909
        %v941 = vadd.f32 %v873, %v910
        %v942 = vadd.f32 %v874, %v911
        %v943 = vadd.f32 %v875, %v912
        %v944 = vadd.f32 %v876, %v913
        %v945 = vadd.f32 %v877, %v914
        %v946 = vadd.f32 %v878, %v915
        %v947 = vadd.f32 %v879, %v916
        %v948 = vadd.f32 %v880, %v917
        %v949 = vadd.f32 %v881, %v918
        %v950 = vadd.f32 %v882, %v919
        %v951 = vadd.f32 %v883, %v920
        %v952 = vadd.f32 %v884, %v921
        %v953 = vadd.f32 %v885, %v921
        %vm986 = vcmask 1040384
        %v987 = vrot.slane %v576, 7
        %v988 = vrot.slane %v577, 7
        %v989 = vsel %vm986, %v987, %v988
        %v990 = vrot.slane %v578, 7
        %v991 = vrot.slane %v579, 7
        %v992 = vsel %vm986, %v990, %v991
        %v993 = vrot.slane %v580, 7
        %v994 = vrot.slane %v581, 7
        %v995 = vsel %vm986, %v993, %v994
        %v996 = vrot.slane %v582, 7
        %v997 = vrot.slane %v583, 7
        %v998 = vsel %vm986, %v996, %v997
        %v999 = vrot.slane %v584, 7
        %v1000 = vrot.slane %v585, 7
        %v1001 = vsel %vm986, %v999, %v1000
        %v1002 = vrot.slane %v586, 7
        %v1003 = vrot.slane %v587, 7
        %v1004 = vsel %vm986, %v1002, %v1003
        %v1005 = vrot.slane %v588, 7
        %v1006 = vrot.slane %v589, 7
        %v1007 = vsel %vm986, %v1005, %v1006
        %v1008 = vrot.slane %v590, 7
        %v1009 = vrot.slane %v591, 7
        %v1010 = vsel %vm986, %v1008, %v1009
        %v1011 = vrot.slane %v592, 7
        %v1012 = vrot.slane %v593, 7
        %v1013 = vsel %vm986, %v1011, %v1012
        %v1014 = vrot.slane %v594, 7
        %v1015 = vrot.slane %v595, 7
        %v1016 = vsel %vm986, %v1014, %v1015
        %v1017 = vrot.slane %v596, 7
        %v1018 = vrot.slane %v597, 7
        %v1019 = vsel %vm986, %v1017, %v1018
        %v1020 = vrot.slane %v598, 7
        %v1021 = vrot.slane %v599, 7
        %v1022 = vsel %vm986, %v1020, %v1021
        %v1023 = vrot.slane %v600, 7
        %v1024 = vrot.slane %v601, 7
        %v1025 = vsel %vm986, %v1023, %v1024
        %v1026 = vrot.slane %v602, 7
        %v1027 = vrot.slane %v603, 7
        %v1028 = vsel %vm986, %v1026, %v1027
        %v1029 = vrot.slane %v604, 7
        %v1030 = vrot.slane %v605, 7
        %v1031 = vsel %vm986, %v1029, %v1030
        %v1032 = vrot.slane %v606, 7
        %v1033 = vrot.slane %v607, 7
        %v1034 = vsel %vm986, %v1032, %v1033
        %v1067 = vsel %vm986, 0.0, %v987
        %v1068 = vsel %vm986, 0.0, %v990
        %v1069 = vsel %vm986, 0.0, %v993
        %v1070 = vsel %vm986, 0.0, %v996
        %v1071 = vsel %vm986, 0.0, %v999
        %v1072 = vsel %vm986, 0.0, %v1002
        %v1073 = vsel %vm986, 0.0, %v1005
        %v1074 = vsel %vm986, 0.0, %v1008
        %v1075 = vsel %vm986, 0.0, %v1011
        %v1076 = vsel %vm986, 0.0, %v1014
        %v1077 = vsel %vm986, 0.0, %v1017
        %v1078 = vsel %vm986, 0.0, %v1020
        %v1079 = vsel %vm986, 0.0, %v1023
        %v1080 = vsel %vm986, 0.0, %v1026
        %v1081 = vsel %vm986, 0.0, %v1029
        %v1082 = vsel %vm986, 0.0, %v1032
        %vm1115 = vcmask 1046528
        %v1116 = vrot.slane %v922, 1
        %v1117 = vrot.slane %v923, 1
        %v1118 = vsel %vm1115, %v1116, %v1117
        %v1119 = vrot.slane %v924, 1
        %v1120 = vrot.slane %v925, 1
        %v1121 = vsel %vm1115, %v1119, %v1120
        %v1122 = vrot.slane %v926, 1
        %v1123 = vrot.slane %v927, 1
        %v1124 = vsel %vm1115, %v1122, %v1123
        %v1125 = vrot.slane %v928, 1
        %v1126 = vrot.slane %v929, 1
        %v1127 = vsel %vm1115, %v1125, %v1126
        %v1128 = vrot.slane %v930, 1
        %v1129 = vrot.slane %v931, 1
        %v1130 = vsel %vm1115, %v1128, %v1129
        %v1131 = vrot.slane %v932, 1
        %v1132 = vrot.slane %v933, 1
        %v1133 = vsel %vm1115, %v1131, %v1132
        %v1134 = vrot.slane %v934, 1
        %v1135 = vrot.slane %v935, 1
        %v1136 = vsel %vm1115, %v1134, %v1135
        %v1137 = vrot.slane %v936, 1
        %v1138 = vrot.slane %v937, 1
        %v1139 = vsel %vm1115, %v1137, %v1138
        %v1140 = vrot.slane %v938, 1
        %v1141 = vrot.slane %v939, 1
        %v1142 = vsel %vm1115, %v1140, %v1141
        %v1143 = vrot.slane %v940, 1
        %v1144 = vrot.slane %v941, 1
        %v1145 = vsel %vm1115, %v1143, %v1144
        %v1146 = vrot.slane %v942, 1
        %v1147 = vrot.slane %v943, 1
        %v1148 = vsel %vm1115, %v1146, %v1147
        %v1149 = vrot.slane %v944, 1
        %v1150 = vrot.slane %v945, 1
        %v1151 = vsel %vm1115, %v1149, %v1150
        %v1152 = vrot.slane %v946, 1
        %v1153 = vrot.slane %v947, 1
        %v1154 = vsel %vm1115, %v1152, %v1153
        %v1155 = vrot.slane %v948, 1
        %v1156 = vrot.slane %v949, 1
        %v1157 = vsel %vm1115, %v1155, %v1156
        %v1158 = vrot.slane %v950, 1
        %v1159 = vrot.slane %v951, 1
        %v1160 = vsel %vm1115, %v1158, %v1159
        %v1161 = vrot.slane %v952, 1
        %v1162 = vrot.slane %v953, 1
        %v1163 = vsel %vm1115, %v1161, %v1162
        %v1196 = vsel %vm1115, %v1117, 0.0
        %v1197 = vsel %vm1115, %v1120, 0.0
        %v1198 = vsel %vm1115, %v1123, 0.0
        %v1199 = vsel %vm1115, %v1126, 0.0
        %v1200 = vsel %vm1115, %v1129, 0.0
        %v1201 = vsel %vm1115, %v1132, 0.0
        %v1202 = vsel %vm1115, %v1135, 0.0
        %v1203 = vsel %vm1115, %v1138, 0.0
        %v1204 = vsel %vm1115, %v1141, 0.0
        %v1205 = vsel %vm1115, %v1144, 0.0
        %v1206 = vsel %vm1115, %v1147, 0.0
        %v1207 = vsel %vm1115, %v1150, 0.0
        %v1208 = vsel %vm1115, %v1153, 0.0
        %v1209 = vsel %vm1115, %v1156, 0.0
        %v1210 = vsel %vm1115, %v1159, 0.0
        %v1211 = vsel %vm1115, %v1162, 0.0
        %v1212 = vadd.f32 %v749, %v1067
        %v1213 = vadd.f32 %v750, %v989
        %v1214 = vadd.f32 %v751, %v1068
        %v1215 = vadd.f32 %v752, %v992
        %v1216 = vadd.f32 %v753, %v1069
        %v1217 = vadd.f32 %v754, %v995
        %v1218 = vadd.f32 %v755, %v1070
        %v1219 = vadd.f32 %v756, %v998
        %v1220 = vadd.f32 %v757, %v1071
        %v1221 = vadd.f32 %v758, %v1001
        %v1222 = vadd.f32 %v759, %v1072
        %v1223 = vadd.f32 %v760, %v1004
        %v1224 = vadd.f32 %v761, %v1073
        %v1225 = vadd.f32 %v762, %v1007
        %v1226 = vadd.f32 %v763, %v1074
        %v1227 = vadd.f32 %v764, %v1010
        %v1228 = vadd.f32 %v765, %v1075
        %v1229 = vadd.f32 %v766, %v1013
        %v1230 = vadd.f32 %v767, %v1076
        %v1231 = vadd.f32 %v768, %v1016
        %v1232 = vadd.f32 %v769, %v1077
        %v1233 = vadd.f32 %v770, %v1019
        %v1234 = vadd.f32 %v771, %v1078
        %v1235 = vadd.f32 %v772, %v1022
        %v1236 = vadd.f32 %v773, %v1079
        %v1237 = vadd.f32 %v774, %v1025
        %v1238 = vadd.f32 %v775, %v1080
        %v1239 = vadd.f32 %v776, %v1028
        %v1240 = vadd.f32 %v777, %v1081
        %v1241 = vadd.f32 %v778, %v1031
        %v1242 = vadd.f32 %v779, %v1082
        %v1243 = vadd.f32 %v780, %v1034
        %v1244 = vadd.f32 %v1212, %v1118
        %v1245 = vadd.f32 %v1213, %v1196
        %v1246 = vadd.f32 %v1214, %v1121
        %v1247 = vadd.f32 %v1215, %v1197
        %v1248 = vadd.f32 %v1216, %v1124
        %v1249 = vadd.f32 %v1217, %v1198
        %v1250 = vadd.f32 %v1218, %v1127
        %v1251 = vadd.f32 %v1219, %v1199
        %v1252 = vadd.f32 %v1220, %v1130
        %v1253 = vadd.f32 %v1221, %v1200
        %v1254 = vadd.f32 %v1222, %v1133
        %v1255 = vadd.f32 %v1223, %v1201
        %v1256 = vadd.f32 %v1224, %v1136
        %v1257 = vadd.f32 %v1225, %v1202
        %v1258 = vadd.f32 %v1226, %v1139
        %v1259 = vadd.f32 %v1227, %v1203
        %v1260 = vadd.f32 %v1228, %v1142
        %v1261 = vadd.f32 %v1229, %v1204
        %v1262 = vadd.f32 %v1230, %v1145
        %v1263 = vadd.f32 %v1231, %v1205
        %v1264 = vadd.f32 %v1232, %v1148
        %v1265 = vadd.f32 %v1233, %v1206
        %v1266 = vadd.f32 %v1234, %v1151
        %v1267 = vadd.f32 %v1235, %v1207
        %v1268 = vadd.f32 %v1236, %v1154
        %v1269 = vadd.f32 %v1237, %v1208
        %v1270 = vadd.f32 %v1238, %v1157
        %v1271 = vadd.f32 %v1239, %v1209
        %v1272 = vadd.f32 %v1240, %v1160
        %v1273 = vadd.f32 %v1241, %v1210
        %v1274 = vadd.f32 %v1242, %v1163
        %v1275 = vadd.f32 %v1243, %v1211
        %v1276 = vpack.c.bf16 %v1245, %v1244
        %v1277 = vpack.c.bf16 %v1247, %v1246
        %v1278 = vpack.c.bf16 %v1249, %v1248
        %v1279 = vpack.c.bf16 %v1251, %v1250
        %v1280 = vpack.c.bf16 %v1253, %v1252
        %v1281 = vpack.c.bf16 %v1255, %v1254
        %v1282 = vpack.c.bf16 %v1257, %v1256
        %v1283 = vpack.c.bf16 %v1259, %v1258
        %v1284 = vpack.c.bf16 %v1261, %v1260
        %v1285 = vpack.c.bf16 %v1263, %v1262
        %v1286 = vpack.c.bf16 %v1265, %v1264
        %v1287 = vpack.c.bf16 %v1267, %v1266
        %v1288 = vpack.c.bf16 %v1269, %v1268
        %v1289 = vpack.c.bf16 %v1271, %v1270
        %v1290 = vpack.c.bf16 %v1273, %v1272
        %v1291 = vpack.c.bf16 %v1275, %v1274
        %v1292 = vld [vmem:[%s2] sm:$0xf]
        %v1293 = vld [vmem:[%s2 + $0x4] sm:$0xf]
        %v1294 = vld [vmem:[%s2 + $0x8] sm:$0xf]
        %v1295 = vld [vmem:[%s2 + $0xc] sm:$0xf]
        %v1296 = vld [vmem:[%s2 + $0x10] sm:$0xf]
        %v1297 = vld [vmem:[%s2 + $0x14] sm:$0xf]
        %v1298 = vld [vmem:[%s2 + $0x18] sm:$0xf]
        %v1299 = vld [vmem:[%s2 + $0x1c] sm:$0xf]
        %v1300 = vld [vmem:[%s2 + $0x20] sm:$0xf]
        %v1301 = vld [vmem:[%s2 + $0x24] sm:$0xf]
        %v1302 = vld [vmem:[%s2 + $0x28] sm:$0xf]
        %v1303 = vld [vmem:[%s2 + $0x2c] sm:$0xf]
        %v1304 = vld [vmem:[%s2 + $0x30] sm:$0xf]
        %v1305 = vld [vmem:[%s2 + $0x34] sm:$0xf]
        %v1306 = vld [vmem:[%s2 + $0x38] sm:$0xf]
        %v1307 = vld [vmem:[%s2 + $0x3c] sm:$0xf]
        %v1308 = vld [vmem:[%s3] sm:$0x1]
        %v1310 = vlaneseq
        %v1311 = vshrl.u32 %v1310, 7
        %v1312 = vsub.s32 0, %v1311
        %v1313 = vrot.slane %v1308, %v1312
        %v1331 = vunpack.c.l.b16 %v1292
        %v1332 = vunpack.c.l.b16 %v1293
        %v1333 = vunpack.c.l.b16 %v1294
        %v1334 = vunpack.c.l.b16 %v1295
        %v1335 = vunpack.c.l.b16 %v1296
        %v1336 = vunpack.c.l.b16 %v1297
        %v1337 = vunpack.c.l.b16 %v1298
        %v1338 = vunpack.c.l.b16 %v1299
        %v1339 = vunpack.c.l.b16 %v1300
        %v1340 = vunpack.c.l.b16 %v1301
        %v1341 = vunpack.c.l.b16 %v1302
        %v1342 = vunpack.c.l.b16 %v1303
        %v1343 = vunpack.c.l.b16 %v1304
        %v1344 = vunpack.c.l.b16 %v1305
        %v1345 = vunpack.c.l.b16 %v1306
        %v1346 = vunpack.c.l.b16 %v1307
        %v1347 = vpack.c.b16 %v1332, %v1331
        %v1348 = vpack.c.b16 %v1334, %v1333
        %v1349 = vpack.c.b16 %v1336, %v1335
        %v1350 = vpack.c.b16 %v1338, %v1337
        %v1351 = vpack.c.b16 %v1340, %v1339
        %v1352 = vpack.c.b16 %v1342, %v1341
        %v1353 = vpack.c.b16 %v1344, %v1343
        %v1354 = vpack.c.b16 %v1346, %v1345
        %1363 = vmatprep.subr.bf16.mxu0 0
        %1364 = vmatpush1.bf16.msra.mxu0 %v1347
        %1365 = vmatprep.subr.bf16.mxu0 0
        %1366 = vmatpush1.bf16.msra.mxu0 %v1348
        %1367 = vmatprep.subr.bf16.mxu0 0
        %1368 = vmatpush1.bf16.msra.mxu0 %v1349
        %1369 = vmatprep.subr.bf16.mxu0 0
        %1370 = vmatpush1.bf16.msra.mxu0 %v1350
        %1371 = vmatprep.subr.bf16.mxu0 0
        %1372 = vmatpush1.bf16.msra.mxu0 %v1351
        %1373 = vmatprep.subr.bf16.mxu0 0
        %1374 = vmatpush1.bf16.msra.mxu0 %v1352
        %1375 = vmatprep.subr.bf16.mxu0 0
        %1376 = vmatpush1.bf16.msra.mxu0 %v1353
        %1377 = vmatprep.subr.bf16.mxu0 0
        %1378 = vmatpush1.bf16.msra.mxu0 %v1354
        %1379 = vmatprep.subr.bf16.mxu0 0
        %1380 = vmatpush1.bf16.msra.mxu0 0
        %1381 = vmatprep.subr.bf16.mxu0 0
        %1382 = vmatpush1.bf16.msra.mxu0 0
        %1383 = vmatprep.subr.bf16.mxu0 0
        %1384 = vmatpush1.bf16.msra.mxu0 0
        %1385 = vmatprep.subr.bf16.mxu0 0
        %1386 = vmatpush1.bf16.msra.mxu0 0
        %1387 = vmatprep.subr.bf16.mxu0 0
        %1388 = vmatpush1.bf16.msra.mxu0 0
        %1389 = vmatprep.subr.bf16.mxu0 0
        %1390 = vmatpush1.bf16.msra.mxu0 0
        %1391 = vmatprep.subr.bf16.mxu0 0
        %1392 = vmatpush1.bf16.msra.mxu0 0
        %1393 = vmatprep.subr.bf16.mxu0 0
        %1394 = vmatpush1.bf16.msra.mxu0 0
        %1395 = vmatprep.mubr.bf16.mxu0 0
        %1396 = vmatmul.mubr.bf16.gmra.mrb[0].mxu0 %v1276
        %v1397 = vpop.f32.mrb[0].mxu0
        %v1398 = vadd.f32 %v1313, %v1397
        %v1399 = vpop.f32.mrb[0].mxu0
        %v1400 = vpop.f32.mrb[0].mxu0
        %v1401 = vadd.f32 %v1313, %v1400
        %v1402 = vpop.f32.mrb[0].mxu0
        %1403 = vmatprep.mubr.bf16.mxu0 0
        %1404 = vmatmul.mubr.bf16.gmra.mrb[0].mxu0 %v1277
        %v1405 = vpop.f32.mrb[0].mxu0
        %v1406 = vadd.f32 %v1313, %v1405
        %v1407 = vpop.f32.mrb[0].mxu0
        %v1408 = vpop.f32.mrb[0].mxu0
        %v1409 = vadd.f32 %v1313, %v1408
        %v1410 = vpop.f32.mrb[0].mxu0
        %1411 = vmatprep.mubr.bf16.mxu0 0
        %1412 = vmatmul.mubr.bf16.gmra.mrb[0].mxu0 %v1278
        %v1413 = vpop.f32.mrb[0].mxu0
        %v1414 = vadd.f32 %v1313, %v1413
        %v1415 = vpop.f32.mrb[0].mxu0
        %v1416 = vpop.f32.mrb[0].mxu0
        %v1417 = vadd.f32 %v1313, %v1416
        %v1418 = vpop.f32.mrb[0].mxu0
        %1419 = vmatprep.mubr.bf16.mxu0 0
        %1420 = vmatmul.mubr.bf16.gmra.mrb[0].mxu0 %v1279
        %v1421 = vpop.f32.mrb[0].mxu0
        %v1422 = vadd.f32 %v1313, %v1421
        %v1423 = vpop.f32.mrb[0].mxu0
        %v1424 = vpop.f32.mrb[0].mxu0
        %v1425 = vadd.f32 %v1313, %v1424
        %v1426 = vpop.f32.mrb[0].mxu0
        %1427 = vmatprep.mubr.bf16.mxu0 0
        %1428 = vmatmul.mubr.bf16.gmra.mrb[0].mxu0 %v1280
        %v1429 = vpop.f32.mrb[0].mxu0
        %v1430 = vadd.f32 %v1313, %v1429
        %v1431 = vpop.f32.mrb[0].mxu0
        %v1432 = vpop.f32.mrb[0].mxu0
        %v1433 = vadd.f32 %v1313, %v1432
        %v1434 = vpop.f32.mrb[0].mxu0
        %1435 = vmatprep.mubr.bf16.mxu0 0
        %1436 = vmatmul.mubr.bf16.gmra.mrb[0].mxu0 %v1281
        %v1437 = vpop.f32.mrb[0].mxu0
        %v1438 = vadd.f32 %v1313, %v1437
        %v1439 = vpop.f32.mrb[0].mxu0
        %v1440 = vpop.f32.mrb[0].mxu0
        %v1441 = vadd.f32 %v1313, %v1440
        %v1442 = vpop.f32.mrb[0].mxu0
        %1443 = vmatprep.mubr.bf16.mxu0 0
        %1444 = vmatmul.mubr.bf16.gmra.mrb[0].mxu0 %v1282
        %v1445 = vpop.f32.mrb[0].mxu0
        %v1446 = vadd.f32 %v1313, %v1445
        %v1447 = vpop.f32.mrb[0].mxu0
        %v1448 = vpop.f32.mrb[0].mxu0
        %v1449 = vadd.f32 %v1313, %v1448
        %v1450 = vpop.f32.mrb[0].mxu0
        %1451 = vmatprep.mubr.bf16.mxu0 0
        %1452 = vmatmul.mubr.bf16.gmra.mrb[0].mxu0 %v1283
        %v1453 = vpop.f32.mrb[0].mxu0
        %v1454 = vadd.f32 %v1313, %v1453
        %v1455 = vpop.f32.mrb[0].mxu0
        %v1456 = vpop.f32.mrb[0].mxu0
        %v1457 = vadd.f32 %v1313, %v1456
        %v1458 = vpop.f32.mrb[0].mxu0
        %1459 = vmatprep.mubr.bf16.mxu0 0
        %1460 = vmatmul.mubr.bf16.gmra.mrb[0].mxu0 %v1284
        %v1461 = vpop.f32.mrb[0].mxu0
        %v1462 = vadd.f32 %v1313, %v1461
        %v1463 = vpop.f32.mrb[0].mxu0
        %v1464 = vpop.f32.mrb[0].mxu0
        %v1465 = vadd.f32 %v1313, %v1464
        %v1466 = vpop.f32.mrb[0].mxu0
        %1467 = vmatprep.mubr.bf16.mxu0 0
        %1468 = vmatmul.mubr.bf16.gmra.mrb[0].mxu0 %v1285
        %v1469 = vpop.f32.mrb[0].mxu0
        %v1470 = vadd.f32 %v1313, %v1469
        %v1471 = vpop.f32.mrb[0].mxu0
        %v1472 = vpop.f32.mrb[0].mxu0
        %v1473 = vadd.f32 %v1313, %v1472
        %v1474 = vpop.f32.mrb[0].mxu0
        %1475 = vmatprep.mubr.bf16.mxu0 0
        %1476 = vmatmul.mubr.bf16.gmra.mrb[0].mxu0 %v1286
        %v1477 = vpop.f32.mrb[0].mxu0
        %v1478 = vadd.f32 %v1313, %v1477
        %v1479 = vpop.f32.mrb[0].mxu0
        %v1480 = vpop.f32.mrb[0].mxu0
        %v1481 = vadd.f32 %v1313, %v1480
        %v1482 = vpop.f32.mrb[0].mxu0
        %1483 = vmatprep.mubr.bf16.mxu0 0
        %1484 = vmatmul.mubr.bf16.gmra.mrb[0].mxu0 %v1287
        %v1485 = vpop.f32.mrb[0].mxu0
        %v1486 = vadd.f32 %v1313, %v1485
        %v1487 = vpop.f32.mrb[0].mxu0
        %v1488 = vpop.f32.mrb[0].mxu0
        %v1489 = vadd.f32 %v1313, %v1488
        %v1490 = vpop.f32.mrb[0].mxu0
        %1491 = vmatprep.mubr.bf16.mxu0 0
        %1492 = vmatmul.mubr.bf16.gmra.mrb[0].mxu0 %v1288
        %v1493 = vpop.f32.mrb[0].mxu0
        %v1494 = vadd.f32 %v1313, %v1493
        %v1495 = vpop.f32.mrb[0].mxu0
        %v1496 = vpop.f32.mrb[0].mxu0
        %v1497 = vadd.f32 %v1313, %v1496
        %v1498 = vpop.f32.mrb[0].mxu0
        %1499 = vmatprep.mubr.bf16.mxu0 0
        %1500 = vmatmul.mubr.bf16.gmra.mrb[0].mxu0 %v1289
        %v1501 = vpop.f32.mrb[0].mxu0
        %v1502 = vadd.f32 %v1313, %v1501
        %v1503 = vpop.f32.mrb[0].mxu0
        %v1504 = vpop.f32.mrb[0].mxu0
        %v1505 = vadd.f32 %v1313, %v1504
        %v1506 = vpop.f32.mrb[0].mxu0
        %1507 = vmatprep.mubr.bf16.mxu0 0
        %1508 = vmatmul.mubr.bf16.gmra.mrb[0].mxu0 %v1290
        %v1509 = vpop.f32.mrb[0].mxu0
        %v1510 = vadd.f32 %v1313, %v1509
        %v1511 = vpop.f32.mrb[0].mxu0
        %v1512 = vpop.f32.mrb[0].mxu0
        %v1513 = vadd.f32 %v1313, %v1512
        %v1514 = vpop.f32.mrb[0].mxu0
        %1515 = vmatprep.mubr.bf16.mxu0 0
        %1516 = vmatmul.mubr.bf16.gmra.mrb[0].mxu0 %v1291
        %v1517 = vpop.f32.mrb[0].mxu0
        %v1518 = vadd.f32 %v1313, %v1517
        %v1519 = vpop.f32.mrb[0].mxu0
        %v1520 = vpop.f32.mrb[0].mxu0
        %v1521 = vadd.f32 %v1313, %v1520
        %v1522 = vpop.f32.mrb[0].mxu0
        %1523 = vdwg.mxu0
        %v1524 = vmax.f32 %v1398, 0.0
        %v1525 = vmax.f32 %v1401, 0.0
        %v1526 = vmax.f32 %v1406, 0.0
        %v1527 = vmax.f32 %v1409, 0.0
        %v1528 = vmax.f32 %v1414, 0.0
        %v1529 = vmax.f32 %v1417, 0.0
        %v1530 = vmax.f32 %v1422, 0.0
        %v1531 = vmax.f32 %v1425, 0.0
        %v1532 = vmax.f32 %v1430, 0.0
        %v1533 = vmax.f32 %v1433, 0.0
        %v1534 = vmax.f32 %v1438, 0.0
        %v1535 = vmax.f32 %v1441, 0.0
        %v1536 = vmax.f32 %v1446, 0.0
        %v1537 = vmax.f32 %v1449, 0.0
        %v1538 = vmax.f32 %v1454, 0.0
        %v1539 = vmax.f32 %v1457, 0.0
        %v1540 = vmax.f32 %v1462, 0.0
        %v1541 = vmax.f32 %v1465, 0.0
        %v1542 = vmax.f32 %v1470, 0.0
        %v1543 = vmax.f32 %v1473, 0.0
        %v1544 = vmax.f32 %v1478, 0.0
        %v1545 = vmax.f32 %v1481, 0.0
        %v1546 = vmax.f32 %v1486, 0.0
        %v1547 = vmax.f32 %v1489, 0.0
        %v1548 = vmax.f32 %v1494, 0.0
        %v1549 = vmax.f32 %v1497, 0.0
        %v1550 = vmax.f32 %v1502, 0.0
        %v1551 = vmax.f32 %v1505, 0.0
        %v1552 = vmax.f32 %v1510, 0.0
        %v1553 = vmax.f32 %v1513, 0.0
        %v1554 = vmax.f32 %v1518, 0.0
        %v1555 = vmax.f32 %v1521, 0.0
        %v1556 = vld [vmem:[%s4] sm:$0x1]
        %v1557 = vlaneseq
        %v1558 = vshrl.u32 %v1557, 7
        %v1559 = vsub.s32 0, %v1558
        %v1560 = vrot.slane %v1556, %v1559
        %v1561 = vmul.f32 %v1560, 0.0
        %v1562 = vmul.f32 %v1524, %v1560
        %v1563 = vmul.f32 %v1525, %v1560
        %v1564 = vmul.f32 %v1526, %v1560
        %v1565 = vmul.f32 %v1527, %v1560
        %v1566 = vmul.f32 %v1528, %v1560
        %v1567 = vmul.f32 %v1529, %v1560
        %v1568 = vmul.f32 %v1530, %v1560
        %v1569 = vmul.f32 %v1531, %v1560
        %v1570 = vmul.f32 %v1532, %v1560
        %v1571 = vmul.f32 %v1533, %v1560
        %v1572 = vmul.f32 %v1534, %v1560
        %v1573 = vmul.f32 %v1535, %v1560
        %v1574 = vmul.f32 %v1536, %v1560
        %v1575 = vmul.f32 %v1537, %v1560
        %v1576 = vmul.f32 %v1538, %v1560
        %v1577 = vmul.f32 %v1539, %v1560
        %v1578 = vmul.f32 %v1540, %v1560
        %v1579 = vmul.f32 %v1541, %v1560
        %v1580 = vmul.f32 %v1542, %v1560
        %v1581 = vmul.f32 %v1543, %v1560
        %v1582 = vmul.f32 %v1544, %v1560
        %v1583 = vmul.f32 %v1545, %v1560
        %v1584 = vmul.f32 %v1546, %v1560
        %v1585 = vmul.f32 %v1547, %v1560
        %v1586 = vmul.f32 %v1548, %v1560
        %v1587 = vmul.f32 %v1549, %v1560
        %v1588 = vmul.f32 %v1550, %v1560
        %v1589 = vmul.f32 %v1551, %v1560
        %v1590 = vmul.f32 %v1552, %v1560
        %v1591 = vmul.f32 %v1553, %v1560
        %s1592 = scalar_lea.vmem %s4, 4
        %v1593 = vld [vmem:[%s1592] sm:$0x1]
        %v1594 = vlaneseq
        %v1595 = vshrl.u32 %v1594, 7
        %v1596 = vsub.s32 0, %v1595
        %v1597 = vrot.slane %v1593, %v1596
        %v1598 = vmul.f32 %v1524, %v1597
        %v1599 = vmul.f32 %v1525, %v1597
        %v1600 = vmul.f32 %v1526, %v1597
        %v1601 = vmul.f32 %v1527, %v1597
        %v1602 = vmul.f32 %v1528, %v1597
        %v1603 = vmul.f32 %v1529, %v1597
        %v1604 = vmul.f32 %v1530, %v1597
        %v1605 = vmul.f32 %v1531, %v1597
        %v1606 = vmul.f32 %v1532, %v1597
        %v1607 = vmul.f32 %v1533, %v1597
        %v1608 = vmul.f32 %v1534, %v1597
        %v1609 = vmul.f32 %v1535, %v1597
        %v1610 = vmul.f32 %v1536, %v1597
        %v1611 = vmul.f32 %v1537, %v1597
        %v1612 = vmul.f32 %v1538, %v1597
        %v1613 = vmul.f32 %v1539, %v1597
        %v1614 = vmul.f32 %v1540, %v1597
        %v1615 = vmul.f32 %v1541, %v1597
        %v1616 = vmul.f32 %v1542, %v1597
        %v1617 = vmul.f32 %v1543, %v1597
        %v1618 = vmul.f32 %v1544, %v1597
        %v1619 = vmul.f32 %v1545, %v1597
        %v1620 = vmul.f32 %v1546, %v1597
        %v1621 = vmul.f32 %v1547, %v1597
        %v1622 = vmul.f32 %v1548, %v1597
        %v1623 = vmul.f32 %v1549, %v1597
        %v1624 = vmul.f32 %v1550, %v1597
        %v1625 = vmul.f32 %v1551, %v1597
        %v1626 = vmul.f32 %v1552, %v1597
        %v1627 = vmul.f32 %v1553, %v1597
        %v1628 = vmul.f32 %v1554, %v1597
        %v1629 = vmul.f32 %v1555, %v1597
        %v1630 = vadd.f32 %v1561, %v1598
        %v1631 = vadd.f32 %v1561, %v1599
        %v1632 = vadd.f32 %v1562, %v1600
        %v1633 = vadd.f32 %v1563, %v1601
        %v1634 = vadd.f32 %v1564, %v1602
        %v1635 = vadd.f32 %v1565, %v1603
        %v1636 = vadd.f32 %v1566, %v1604
        %v1637 = vadd.f32 %v1567, %v1605
        %v1638 = vadd.f32 %v1568, %v1606
        %v1639 = vadd.f32 %v1569, %v1607
        %v1640 = vadd.f32 %v1570, %v1608
        %v1641 = vadd.f32 %v1571, %v1609
        %v1642 = vadd.f32 %v1572, %v1610
        %v1643 = vadd.f32 %v1573, %v1611
        %v1644 = vadd.f32 %v1574, %v1612
        %v1645 = vadd.f32 %v1575, %v1613
        %v1646 = vadd.f32 %v1576, %v1614
        %v1647 = vadd.f32 %v1577, %v1615
        %v1648 = vadd.f32 %v1578, %v1616
        %v1649 = vadd.f32 %v1579, %v1617
        %v1650 = vadd.f32 %v1580, %v1618
        %v1651 = vadd.f32 %v1581, %v1619
        %v1652 = vadd.f32 %v1582, %v1620
        %v1653 = vadd.f32 %v1583, %v1621
        %v1654 = vadd.f32 %v1584, %v1622
        %v1655 = vadd.f32 %v1585, %v1623
        %v1656 = vadd.f32 %v1586, %v1624
        %v1657 = vadd.f32 %v1587, %v1625
        %v1658 = vadd.f32 %v1588, %v1626
        %v1659 = vadd.f32 %v1589, %v1627
        %v1660 = vadd.f32 %v1590, %v1628
        %v1661 = vadd.f32 %v1591, %v1629
        %s1662 = scalar_lea.vmem %s4, 8
        %v1663 = vld [vmem:[%s1662] sm:$0x1]
        %v1664 = vlaneseq
        %v1665 = vshrl.u32 %v1664, 7
        %v1666 = vsub.s32 0, %v1665
        %v1667 = vrot.slane %v1663, %v1666
        %v1668 = vmul.f32 %v1526, %v1667
        %v1669 = vmul.f32 %v1527, %v1667
        %v1670 = vmul.f32 %v1528, %v1667
        %v1671 = vmul.f32 %v1529, %v1667
        %v1672 = vmul.f32 %v1530, %v1667
        %v1673 = vmul.f32 %v1531, %v1667
        %v1674 = vmul.f32 %v1532, %v1667
        %v1675 = vmul.f32 %v1533, %v1667
        %v1676 = vmul.f32 %v1534, %v1667
        %v1677 = vmul.f32 %v1535, %v1667
        %v1678 = vmul.f32 %v1536, %v1667
        %v1679 = vmul.f32 %v1537, %v1667
        %v1680 = vmul.f32 %v1538, %v1667
        %v1681 = vmul.f32 %v1539, %v1667
        %v1682 = vmul.f32 %v1540, %v1667
        %v1683 = vmul.f32 %v1541, %v1667
        %v1684 = vmul.f32 %v1542, %v1667
        %v1685 = vmul.f32 %v1543, %v1667
        %v1686 = vmul.f32 %v1544, %v1667
        %v1687 = vmul.f32 %v1545, %v1667
        %v1688 = vmul.f32 %v1546, %v1667
        %v1689 = vmul.f32 %v1547, %v1667
        %v1690 = vmul.f32 %v1548, %v1667
        %v1691 = vmul.f32 %v1549, %v1667
        %v1692 = vmul.f32 %v1550, %v1667
        %v1693 = vmul.f32 %v1551, %v1667
        %v1694 = vmul.f32 %v1552, %v1667
        %v1695 = vmul.f32 %v1553, %v1667
        %v1696 = vmul.f32 %v1554, %v1667
        %v1697 = vmul.f32 %v1555, %v1667
        %v1698 = vmul.f32 %v1667, 0.0
        %v1699 = vadd.f32 %v1630, %v1668
        %v1700 = vadd.f32 %v1631, %v1669
        %v1701 = vadd.f32 %v1632, %v1670
        %v1702 = vadd.f32 %v1633, %v1671
        %v1703 = vadd.f32 %v1634, %v1672
        %v1704 = vadd.f32 %v1635, %v1673
        %v1705 = vadd.f32 %v1636, %v1674
        %v1706 = vadd.f32 %v1637, %v1675
        %v1707 = vadd.f32 %v1638, %v1676
        %v1708 = vadd.f32 %v1639, %v1677
        %v1709 = vadd.f32 %v1640, %v1678
        %v1710 = vadd.f32 %v1641, %v1679
        %v1711 = vadd.f32 %v1642, %v1680
        %v1712 = vadd.f32 %v1643, %v1681
        %v1713 = vadd.f32 %v1644, %v1682
        %v1714 = vadd.f32 %v1645, %v1683
        %v1715 = vadd.f32 %v1646, %v1684
        %v1716 = vadd.f32 %v1647, %v1685
        %v1717 = vadd.f32 %v1648, %v1686
        %v1718 = vadd.f32 %v1649, %v1687
        %v1719 = vadd.f32 %v1650, %v1688
        %v1720 = vadd.f32 %v1651, %v1689
        %v1721 = vadd.f32 %v1652, %v1690
        %v1722 = vadd.f32 %v1653, %v1691
        %v1723 = vadd.f32 %v1654, %v1692
        %v1724 = vadd.f32 %v1655, %v1693
        %v1725 = vadd.f32 %v1656, %v1694
        %v1726 = vadd.f32 %v1657, %v1695
        %v1727 = vadd.f32 %v1658, %v1696
        %v1728 = vadd.f32 %v1659, %v1697
        %v1729 = vadd.f32 %v1660, %v1698
        %v1730 = vadd.f32 %v1661, %v1698
        %v1731 = vld [vmem:[%s4 + $0x1] sm:$0x1]
        %v1732 = vlaneseq
        %v1733 = vshrl.u32 %v1732, 7
        %v1734 = vsub.s32 0, %v1733
        %v1735 = vrot.slane %v1731, %v1734
        %v1736 = vmul.f32 %v1735, 0.0
        %v1737 = vmul.f32 %v1524, %v1735
        %v1738 = vmul.f32 %v1525, %v1735
        %v1739 = vmul.f32 %v1526, %v1735
        %v1740 = vmul.f32 %v1527, %v1735
        %v1741 = vmul.f32 %v1528, %v1735
        %v1742 = vmul.f32 %v1529, %v1735
        %v1743 = vmul.f32 %v1530, %v1735
        %v1744 = vmul.f32 %v1531, %v1735
        %v1745 = vmul.f32 %v1532, %v1735
        %v1746 = vmul.f32 %v1533, %v1735
        %v1747 = vmul.f32 %v1534, %v1735
        %v1748 = vmul.f32 %v1535, %v1735
        %v1749 = vmul.f32 %v1536, %v1735
        %v1750 = vmul.f32 %v1537, %v1735
        %v1751 = vmul.f32 %v1538, %v1735
        %v1752 = vmul.f32 %v1539, %v1735
        %v1753 = vmul.f32 %v1540, %v1735
        %v1754 = vmul.f32 %v1541, %v1735
        %v1755 = vmul.f32 %v1542, %v1735
        %v1756 = vmul.f32 %v1543, %v1735
        %v1757 = vmul.f32 %v1544, %v1735
        %v1758 = vmul.f32 %v1545, %v1735
        %v1759 = vmul.f32 %v1546, %v1735
        %v1760 = vmul.f32 %v1547, %v1735
        %v1761 = vmul.f32 %v1548, %v1735
        %v1762 = vmul.f32 %v1549, %v1735
        %v1763 = vmul.f32 %v1550, %v1735
        %v1764 = vmul.f32 %v1551, %v1735
        %v1765 = vmul.f32 %v1552, %v1735
        %v1766 = vmul.f32 %v1553, %v1735
        %v1767 = vld [vmem:[%s1592 + $0x1] sm:$0x1]
        %v1768 = vlaneseq
        %v1769 = vshrl.u32 %v1768, 7
        %v1770 = vsub.s32 0, %v1769
        %v1771 = vrot.slane %v1767, %v1770
        %v1772 = vmul.f32 %v1524, %v1771
        %v1773 = vmul.f32 %v1525, %v1771
        %v1774 = vmul.f32 %v1526, %v1771
        %v1775 = vmul.f32 %v1527, %v1771
        %v1776 = vmul.f32 %v1528, %v1771
        %v1777 = vmul.f32 %v1529, %v1771
        %v1778 = vmul.f32 %v1530, %v1771
        %v1779 = vmul.f32 %v1531, %v1771
        %v1780 = vmul.f32 %v1532, %v1771
        %v1781 = vmul.f32 %v1533, %v1771
        %v1782 = vmul.f32 %v1534, %v1771
        %v1783 = vmul.f32 %v1535, %v1771
        %v1784 = vmul.f32 %v1536, %v1771
        %v1785 = vmul.f32 %v1537, %v1771
        %v1786 = vmul.f32 %v1538, %v1771
        %v1787 = vmul.f32 %v1539, %v1771
        %v1788 = vmul.f32 %v1540, %v1771
        %v1789 = vmul.f32 %v1541, %v1771
        %v1790 = vmul.f32 %v1542, %v1771
        %v1791 = vmul.f32 %v1543, %v1771
        %v1792 = vmul.f32 %v1544, %v1771
        %v1793 = vmul.f32 %v1545, %v1771
        %v1794 = vmul.f32 %v1546, %v1771
        %v1795 = vmul.f32 %v1547, %v1771
        %v1796 = vmul.f32 %v1548, %v1771
        %v1797 = vmul.f32 %v1549, %v1771
        %v1798 = vmul.f32 %v1550, %v1771
        %v1799 = vmul.f32 %v1551, %v1771
        %v1800 = vmul.f32 %v1552, %v1771
        %v1801 = vmul.f32 %v1553, %v1771
        %v1802 = vmul.f32 %v1554, %v1771
        %v1803 = vmul.f32 %v1555, %v1771
        %v1804 = vadd.f32 %v1736, %v1772
        %v1805 = vadd.f32 %v1736, %v1773
        %v1806 = vadd.f32 %v1737, %v1774
        %v1807 = vadd.f32 %v1738, %v1775
        %v1808 = vadd.f32 %v1739, %v1776
        %v1809 = vadd.f32 %v1740, %v1777
        %v1810 = vadd.f32 %v1741, %v1778
        %v1811 = vadd.f32 %v1742, %v1779
        %v1812 = vadd.f32 %v1743, %v1780
        %v1813 = vadd.f32 %v1744, %v1781
        %v1814 = vadd.f32 %v1745, %v1782
        %v1815 = vadd.f32 %v1746, %v1783
        %v1816 = vadd.f32 %v1747, %v1784
        %v1817 = vadd.f32 %v1748, %v1785
        %v1818 = vadd.f32 %v1749, %v1786
        %v1819 = vadd.f32 %v1750, %v1787
        %v1820 = vadd.f32 %v1751, %v1788
        %v1821 = vadd.f32 %v1752, %v1789
        %v1822 = vadd.f32 %v1753, %v1790
        %v1823 = vadd.f32 %v1754, %v1791
        %v1824 = vadd.f32 %v1755, %v1792
        %v1825 = vadd.f32 %v1756, %v1793
        %v1826 = vadd.f32 %v1757, %v1794
        %v1827 = vadd.f32 %v1758, %v1795
        %v1828 = vadd.f32 %v1759, %v1796
        %v1829 = vadd.f32 %v1760, %v1797
        %v1830 = vadd.f32 %v1761, %v1798
        %v1831 = vadd.f32 %v1762, %v1799
        %v1832 = vadd.f32 %v1763, %v1800
        %v1833 = vadd.f32 %v1764, %v1801
        %v1834 = vadd.f32 %v1765, %v1802
        %v1835 = vadd.f32 %v1766, %v1803
        %v1836 = vld [vmem:[%s1662 + $0x1] sm:$0x1]
        %v1837 = vlaneseq
        %v1838 = vshrl.u32 %v1837, 7
        %v1839 = vsub.s32 0, %v1838
        %v1840 = vrot.slane %v1836, %v1839
        %v1841 = vmul.f32 %v1526, %v1840
        %v1842 = vmul.f32 %v1527, %v1840
        %v1843 = vmul.f32 %v1528, %v1840
        %v1844 = vmul.f32 %v1529, %v1840
        %v1845 = vmul.f32 %v1530, %v1840
        %v1846 = vmul.f32 %v1531, %v1840
        %v1847 = vmul.f32 %v1532, %v1840
        %v1848 = vmul.f32 %v1533, %v1840
        %v1849 = vmul.f32 %v1534, %v1840
        %v1850 = vmul.f32 %v1535, %v1840
        %v1851 = vmul.f32 %v1536, %v1840
        %v1852 = vmul.f32 %v1537, %v1840
        %v1853 = vmul.f32 %v1538, %v1840
        %v1854 = vmul.f32 %v1539, %v1840
        %v1855 = vmul.f32 %v1540, %v1840
        %v1856 = vmul.f32 %v1541, %v1840
        %v1857 = vmul.f32 %v1542, %v1840
        %v1858 = vmul.f32 %v1543, %v1840
        %v1859 = vmul.f32 %v1544, %v1840
        %v1860 = vmul.f32 %v1545, %v1840
        %v1861 = vmul.f32 %v1546, %v1840
        %v1862 = vmul.f32 %v1547, %v1840
        %v1863 = vmul.f32 %v1548, %v1840
        %v1864 = vmul.f32 %v1549, %v1840
        %v1865 = vmul.f32 %v1550, %v1840
        %v1866 = vmul.f32 %v1551, %v1840
        %v1867 = vmul.f32 %v1552, %v1840
        %v1868 = vmul.f32 %v1553, %v1840
        %v1869 = vmul.f32 %v1554, %v1840
        %v1870 = vmul.f32 %v1555, %v1840
        %v1871 = vmul.f32 %v1840, 0.0
        %v1872 = vadd.f32 %v1804, %v1841
        %v1873 = vadd.f32 %v1805, %v1842
        %v1874 = vadd.f32 %v1806, %v1843
        %v1875 = vadd.f32 %v1807, %v1844
        %v1876 = vadd.f32 %v1808, %v1845
        %v1877 = vadd.f32 %v1809, %v1846
        %v1878 = vadd.f32 %v1810, %v1847
        %v1879 = vadd.f32 %v1811, %v1848
        %v1880 = vadd.f32 %v1812, %v1849
        %v1881 = vadd.f32 %v1813, %v1850
        %v1882 = vadd.f32 %v1814, %v1851
        %v1883 = vadd.f32 %v1815, %v1852
        %v1884 = vadd.f32 %v1816, %v1853
        %v1885 = vadd.f32 %v1817, %v1854
        %v1886 = vadd.f32 %v1818, %v1855
        %v1887 = vadd.f32 %v1819, %v1856
        %v1888 = vadd.f32 %v1820, %v1857
        %v1889 = vadd.f32 %v1821, %v1858
        %v1890 = vadd.f32 %v1822, %v1859
        %v1891 = vadd.f32 %v1823, %v1860
        %v1892 = vadd.f32 %v1824, %v1861
        %v1893 = vadd.f32 %v1825, %v1862
        %v1894 = vadd.f32 %v1826, %v1863
        %v1895 = vadd.f32 %v1827, %v1864
        %v1896 = vadd.f32 %v1828, %v1865
        %v1897 = vadd.f32 %v1829, %v1866
        %v1898 = vadd.f32 %v1830, %v1867
        %v1899 = vadd.f32 %v1831, %v1868
        %v1900 = vadd.f32 %v1832, %v1869
        %v1901 = vadd.f32 %v1833, %v1870
        %v1902 = vadd.f32 %v1834, %v1871
        %v1903 = vadd.f32 %v1835, %v1871
        %v1904 = vld [vmem:[%s4 + $0x2] sm:$0x1]
        %v1905 = vlaneseq
        %v1906 = vshrl.u32 %v1905, 7
        %v1907 = vsub.s32 0, %v1906
        %v1908 = vrot.slane %v1904, %v1907
        %v1909 = vmul.f32 %v1908, 0.0
        %v1910 = vmul.f32 %v1524, %v1908
        %v1911 = vmul.f32 %v1525, %v1908
        %v1912 = vmul.f32 %v1526, %v1908
        %v1913 = vmul.f32 %v1527, %v1908
        %v1914 = vmul.f32 %v1528, %v1908
        %v1915 = vmul.f32 %v1529, %v1908
        %v1916 = vmul.f32 %v1530, %v1908
        %v1917 = vmul.f32 %v1531, %v1908
        %v1918 = vmul.f32 %v1532, %v1908
        %v1919 = vmul.f32 %v1533, %v1908
        %v1920 = vmul.f32 %v1534, %v1908
        %v1921 = vmul.f32 %v1535, %v1908
        %v1922 = vmul.f32 %v1536, %v1908
        %v1923 = vmul.f32 %v1537, %v1908
        %v1924 = vmul.f32 %v1538, %v1908
        %v1925 = vmul.f32 %v1539, %v1908
        %v1926 = vmul.f32 %v1540, %v1908
        %v1927 = vmul.f32 %v1541, %v1908
        %v1928 = vmul.f32 %v1542, %v1908
        %v1929 = vmul.f32 %v1543, %v1908
        %v1930 = vmul.f32 %v1544, %v1908
        %v1931 = vmul.f32 %v1545, %v1908
        %v1932 = vmul.f32 %v1546, %v1908
        %v1933 = vmul.f32 %v1547, %v1908
        %v1934 = vmul.f32 %v1548, %v1908
        %v1935 = vmul.f32 %v1549, %v1908
        %v1936 = vmul.f32 %v1550, %v1908
        %v1937 = vmul.f32 %v1551, %v1908
        %v1938 = vmul.f32 %v1552, %v1908
        %v1939 = vmul.f32 %v1553, %v1908
        %v1940 = vld [vmem:[%s1592 + $0x2] sm:$0x1]
        %v1941 = vlaneseq
        %v1942 = vshrl.u32 %v1941, 7
        %v1943 = vsub.s32 0, %v1942
        %v1944 = vrot.slane %v1940, %v1943
        %v1945 = vmul.f32 %v1524, %v1944
        %v1946 = vmul.f32 %v1525, %v1944
        %v1947 = vmul.f32 %v1526, %v1944
        %v1948 = vmul.f32 %v1527, %v1944
        %v1949 = vmul.f32 %v1528, %v1944
        %v1950 = vmul.f32 %v1529, %v1944
        %v1951 = vmul.f32 %v1530, %v1944
        %v1952 = vmul.f32 %v1531, %v1944
        %v1953 = vmul.f32 %v1532, %v1944
        %v1954 = vmul.f32 %v1533, %v1944
        %v1955 = vmul.f32 %v1534, %v1944
        %v1956 = vmul.f32 %v1535, %v1944
        %v1957 = vmul.f32 %v1536, %v1944
        %v1958 = vmul.f32 %v1537, %v1944
        %v1959 = vmul.f32 %v1538, %v1944
        %v1960 = vmul.f32 %v1539, %v1944
        %v1961 = vmul.f32 %v1540, %v1944
        %v1962 = vmul.f32 %v1541, %v1944
        %v1963 = vmul.f32 %v1542, %v1944
        %v1964 = vmul.f32 %v1543, %v1944
        %v1965 = vmul.f32 %v1544, %v1944
        %v1966 = vmul.f32 %v1545, %v1944
        %v1967 = vmul.f32 %v1546, %v1944
        %v1968 = vmul.f32 %v1547, %v1944
        %v1969 = vmul.f32 %v1548, %v1944
        %v1970 = vmul.f32 %v1549, %v1944
        %v1971 = vmul.f32 %v1550, %v1944
        %v1972 = vmul.f32 %v1551, %v1944
        %v1973 = vmul.f32 %v1552, %v1944
        %v1974 = vmul.f32 %v1553, %v1944
        %v1975 = vmul.f32 %v1554, %v1944
        %v1976 = vmul.f32 %v1555, %v1944
        %v1977 = vadd.f32 %v1909, %v1945
        %v1978 = vadd.f32 %v1909, %v1946
        %v1979 = vadd.f32 %v1910, %v1947
        %v1980 = vadd.f32 %v1911, %v1948
        %v1981 = vadd.f32 %v1912, %v1949
        %v1982 = vadd.f32 %v1913, %v1950
        %v1983 = vadd.f32 %v1914, %v1951
        %v1984 = vadd.f32 %v1915, %v1952
        %v1985 = vadd.f32 %v1916, %v1953
        %v1986 = vadd.f32 %v1917, %v1954
        %v1987 = vadd.f32 %v1918, %v1955
        %v1988 = vadd.f32 %v1919, %v1956
        %v1989 = vadd.f32 %v1920, %v1957
        %v1990 = vadd.f32 %v1921, %v1958
        %v1991 = vadd.f32 %v1922, %v1959
        %v1992 = vadd.f32 %v1923, %v1960
        %v1993 = vadd.f32 %v1924, %v1961
        %v1994 = vadd.f32 %v1925, %v1962
        %v1995 = vadd.f32 %v1926, %v1963
        %v1996 = vadd.f32 %v1927, %v1964
        %v1997 = vadd.f32 %v1928, %v1965
        %v1998 = vadd.f32 %v1929, %v1966
        %v1999 = vadd.f32 %v1930, %v1967
        %v2000 = vadd.f32 %v1931, %v1968
        %v2001 = vadd.f32 %v1932, %v1969
        %v2002 = vadd.f32 %v1933, %v1970
        %v2003 = vadd.f32 %v1934, %v1971
        %v2004 = vadd.f32 %v1935, %v1972
        %v2005 = vadd.f32 %v1936, %v1973
        %v2006 = vadd.f32 %v1937, %v1974
        %v2007 = vadd.f32 %v1938, %v1975
        %v2008 = vadd.f32 %v1939, %v1976
        %v2009 = vld [vmem:[%s1662 + $0x2] sm:$0x1]
        %v2010 = vlaneseq
        %v2011 = vshrl.u32 %v2010, 7
        %v2012 = vsub.s32 0, %v2011
        %v2013 = vrot.slane %v2009, %v2012
        %v2014 = vmul.f32 %v1526, %v2013
        %v2015 = vmul.f32 %v1527, %v2013
        %v2016 = vmul.f32 %v1528, %v2013
        %v2017 = vmul.f32 %v1529, %v2013
        %v2018 = vmul.f32 %v1530, %v2013
        %v2019 = vmul.f32 %v1531, %v2013
        %v2020 = vmul.f32 %v1532, %v2013
        %v2021 = vmul.f32 %v1533, %v2013
        %v2022 = vmul.f32 %v1534, %v2013
        %v2023 = vmul.f32 %v1535, %v2013
        %v2024 = vmul.f32 %v1536, %v2013
        %v2025 = vmul.f32 %v1537, %v2013
        %v2026 = vmul.f32 %v1538, %v2013
        %v2027 = vmul.f32 %v1539, %v2013
        %v2028 = vmul.f32 %v1540, %v2013
        %v2029 = vmul.f32 %v1541, %v2013
        %v2030 = vmul.f32 %v1542, %v2013
        %v2031 = vmul.f32 %v1543, %v2013
        %v2032 = vmul.f32 %v1544, %v2013
        %v2033 = vmul.f32 %v1545, %v2013
        %v2034 = vmul.f32 %v1546, %v2013
        %v2035 = vmul.f32 %v1547, %v2013
        %v2036 = vmul.f32 %v1548, %v2013
        %v2037 = vmul.f32 %v1549, %v2013
        %v2038 = vmul.f32 %v1550, %v2013
        %v2039 = vmul.f32 %v1551, %v2013
        %v2040 = vmul.f32 %v1552, %v2013
        %v2041 = vmul.f32 %v1553, %v2013
        %v2042 = vmul.f32 %v1554, %v2013
        %v2043 = vmul.f32 %v1555, %v2013
        %v2044 = vmul.f32 %v2013, 0.0
        %v2045 = vadd.f32 %v1977, %v2014
        %v2046 = vadd.f32 %v1978, %v2015
        %v2047 = vadd.f32 %v1979, %v2016
        %v2048 = vadd.f32 %v1980, %v2017
        %v2049 = vadd.f32 %v1981, %v2018
        %v2050 = vadd.f32 %v1982, %v2019
        %v2051 = vadd.f32 %v1983, %v2020
        %v2052 = vadd.f32 %v1984, %v2021
        %v2053 = vadd.f32 %v1985, %v2022
        %v2054 = vadd.f32 %v1986, %v2023
        %v2055 = vadd.f32 %v1987, %v2024
        %v2056 = vadd.f32 %v1988, %v2025
        %v2057 = vadd.f32 %v1989, %v2026
        %v2058 = vadd.f32 %v1990, %v2027
        %v2059 = vadd.f32 %v1991, %v2028
        %v2060 = vadd.f32 %v1992, %v2029
        %v2061 = vadd.f32 %v1993, %v2030
        %v2062 = vadd.f32 %v1994, %v2031
        %v2063 = vadd.f32 %v1995, %v2032
        %v2064 = vadd.f32 %v1996, %v2033
        %v2065 = vadd.f32 %v1997, %v2034
        %v2066 = vadd.f32 %v1998, %v2035
        %v2067 = vadd.f32 %v1999, %v2036
        %v2068 = vadd.f32 %v2000, %v2037
        %v2069 = vadd.f32 %v2001, %v2038
        %v2070 = vadd.f32 %v2002, %v2039
        %v2071 = vadd.f32 %v2003, %v2040
        %v2072 = vadd.f32 %v2004, %v2041
        %v2073 = vadd.f32 %v2005, %v2042
        %v2074 = vadd.f32 %v2006, %v2043
        %v2075 = vadd.f32 %v2007, %v2044
        %v2076 = vadd.f32 %v2008, %v2044
        %v2109 = vrot.slane %v1699, 7
        %v2110 = vrot.slane %v1700, 7
        %v2111 = vsel %vm986, %v2109, %v2110
        %v2112 = vrot.slane %v1701, 7
        %v2113 = vrot.slane %v1702, 7
        %v2114 = vsel %vm986, %v2112, %v2113
        %v2115 = vrot.slane %v1703, 7
        %v2116 = vrot.slane %v1704, 7
        %v2117 = vsel %vm986, %v2115, %v2116
        %v2118 = vrot.slane %v1705, 7
        %v2119 = vrot.slane %v1706, 7
        %v2120 = vsel %vm986, %v2118, %v2119
        %v2121 = vrot.slane %v1707, 7
        %v2122 = vrot.slane %v1708, 7
        %v2123 = vsel %vm986, %v2121, %v2122
        %v2124 = vrot.slane %v1709, 7
        %v2125 = vrot.slane %v1710, 7
        %v2126 = vsel %vm986, %v2124, %v2125
        %v2127 = vrot.slane %v1711, 7
        %v2128 = vrot.slane %v1712, 7
        %v2129 = vsel %vm986, %v2127, %v2128
        %v2130 = vrot.slane %v1713, 7
        %v2131 = vrot.slane %v1714, 7
        %v2132 = vsel %vm986, %v2130, %v2131
        %v2133 = vrot.slane %v1715, 7
        %v2134 = vrot.slane %v1716, 7
        %v2135 = vsel %vm986, %v2133, %v2134
        %v2136 = vrot.slane %v1717, 7
        %v2137 = vrot.slane %v1718, 7
        %v2138 = vsel %vm986, %v2136, %v2137
        %v2139 = vrot.slane %v1719, 7
        %v2140 = vrot.slane %v1720, 7
        %v2141 = vsel %vm986, %v2139, %v2140
        %v2142 = vrot.slane %v1721, 7
        %v2143 = vrot.slane %v1722, 7
        %v2144 = vsel %vm986, %v2142, %v2143
        %v2145 = vrot.slane %v1723, 7
        %v2146 = vrot.slane %v1724, 7
        %v2147 = vsel %vm986, %v2145, %v2146
        %v2148 = vrot.slane %v1725, 7
        %v2149 = vrot.slane %v1726, 7
        %v2150 = vsel %vm986, %v2148, %v2149
        %v2151 = vrot.slane %v1727, 7
        %v2152 = vrot.slane %v1728, 7
        %v2153 = vsel %vm986, %v2151, %v2152
        %v2154 = vrot.slane %v1729, 7
        %v2155 = vrot.slane %v1730, 7
        %v2156 = vsel %vm986, %v2154, %v2155
        %v2189 = vsel %vm986, 0.0, %v2109
        %v2190 = vsel %vm986, 0.0, %v2112
        %v2191 = vsel %vm986, 0.0, %v2115
        %v2192 = vsel %vm986, 0.0, %v2118
        %v2193 = vsel %vm986, 0.0, %v2121
        %v2194 = vsel %vm986, 0.0, %v2124
        %v2195 = vsel %vm986, 0.0, %v2127
        %v2196 = vsel %vm986, 0.0, %v2130
        %v2197 = vsel %vm986, 0.0, %v2133
        %v2198 = vsel %vm986, 0.0, %v2136
        %v2199 = vsel %vm986, 0.0, %v2139
        %v2200 = vsel %vm986, 0.0, %v2142
        %v2201 = vsel %vm986, 0.0, %v2145
        %v2202 = vsel %vm986, 0.0, %v2148
        %v2203 = vsel %vm986, 0.0, %v2151
        %v2204 = vsel %vm986, 0.0, %v2154
        %v2237 = vrot.slane %v2045, 1
        %v2238 = vrot.slane %v2046, 1
        %v2239 = vsel %vm1115, %v2237, %v2238
        %v2240 = vrot.slane %v2047, 1
        %v2241 = vrot.slane %v2048, 1
        %v2242 = vsel %vm1115, %v2240, %v2241
        %v2243 = vrot.slane %v2049, 1
        %v2244 = vrot.slane %v2050, 1
        %v2245 = vsel %vm1115, %v2243, %v2244
        %v2246 = vrot.slane %v2051, 1
        %v2247 = vrot.slane %v2052, 1
        %v2248 = vsel %vm1115, %v2246, %v2247
        %v2249 = vrot.slane %v2053, 1
        %v2250 = vrot.slane %v2054, 1
        %v2251 = vsel %vm1115, %v2249, %v2250
        %v2252 = vrot.slane %v2055, 1
        %v2253 = vrot.slane %v2056, 1
        %v2254 = vsel %vm1115, %v2252, %v2253
        %v2255 = vrot.slane %v2057, 1
        %v2256 = vrot.slane %v2058, 1
        %v2257 = vsel %vm1115, %v2255, %v2256
        %v2258 = vrot.slane %v2059, 1
        %v2259 = vrot.slane %v2060, 1
        %v2260 = vsel %vm1115, %v2258, %v2259
        %v2261 = vrot.slane %v2061, 1
        %v2262 = vrot.slane %v2062, 1
        %v2263 = vsel %vm1115, %v2261, %v2262
        %v2264 = vrot.slane %v2063, 1
        %v2265 = vrot.slane %v2064, 1
        %v2266 = vsel %vm1115, %v2264, %v2265
        %v2267 = vrot.slane %v2065, 1
        %v2268 = vrot.slane %v2066, 1
        %v2269 = vsel %vm1115, %v2267, %v2268
        %v2270 = vrot.slane %v2067, 1
        %v2271 = vrot.slane %v2068, 1
        %v2272 = vsel %vm1115, %v2270, %v2271
        %v2273 = vrot.slane %v2069, 1
        %v2274 = vrot.slane %v2070, 1
        %v2275 = vsel %vm1115, %v2273, %v2274
        %v2276 = vrot.slane %v2071, 1
        %v2277 = vrot.slane %v2072, 1
        %v2278 = vsel %vm1115, %v2276, %v2277
        %v2279 = vrot.slane %v2073, 1
        %v2280 = vrot.slane %v2074, 1
        %v2281 = vsel %vm1115, %v2279, %v2280
        %v2282 = vrot.slane %v2075, 1
        %v2283 = vrot.slane %v2076, 1
        %v2284 = vsel %vm1115, %v2282, %v2283
        %v2317 = vsel %vm1115, %v2238, 0.0
        %v2318 = vsel %vm1115, %v2241, 0.0
        %v2319 = vsel %vm1115, %v2244, 0.0
        %v2320 = vsel %vm1115, %v2247, 0.0
        %v2321 = vsel %vm1115, %v2250, 0.0
        %v2322 = vsel %vm1115, %v2253, 0.0
        %v2323 = vsel %vm1115, %v2256, 0.0
        %v2324 = vsel %vm1115, %v2259, 0.0
        %v2325 = vsel %vm1115, %v2262, 0.0
        %v2326 = vsel %vm1115, %v2265, 0.0
        %v2327 = vsel %vm1115, %v2268, 0.0
        %v2328 = vsel %vm1115, %v2271, 0.0
        %v2329 = vsel %vm1115, %v2274, 0.0
        %v2330 = vsel %vm1115, %v2277, 0.0
        %v2331 = vsel %vm1115, %v2280, 0.0
        %v2332 = vsel %vm1115, %v2283, 0.0
        %v2333 = vadd.f32 %v1872, %v2189
        %v2334 = vadd.f32 %v1873, %v2111
        %v2335 = vadd.f32 %v1874, %v2190
        %v2336 = vadd.f32 %v1875, %v2114
        %v2337 = vadd.f32 %v1876, %v2191
        %v2338 = vadd.f32 %v1877, %v2117
        %v2339 = vadd.f32 %v1878, %v2192
        %v2340 = vadd.f32 %v1879, %v2120
        %v2341 = vadd.f32 %v1880, %v2193
        %v2342 = vadd.f32 %v1881, %v2123
        %v2343 = vadd.f32 %v1882, %v2194
        %v2344 = vadd.f32 %v1883, %v2126
        %v2345 = vadd.f32 %v1884, %v2195
        %v2346 = vadd.f32 %v1885, %v2129
        %v2347 = vadd.f32 %v1886, %v2196
        %v2348 = vadd.f32 %v1887, %v2132
        %v2349 = vadd.f32 %v1888, %v2197
        %v2350 = vadd.f32 %v1889, %v2135
        %v2351 = vadd.f32 %v1890, %v2198
        %v2352 = vadd.f32 %v1891, %v2138
        %v2353 = vadd.f32 %v1892, %v2199
        %v2354 = vadd.f32 %v1893, %v2141
        %v2355 = vadd.f32 %v1894, %v2200
        %v2356 = vadd.f32 %v1895, %v2144
        %v2357 = vadd.f32 %v1896, %v2201
        %v2358 = vadd.f32 %v1897, %v2147
        %v2359 = vadd.f32 %v1898, %v2202
        %v2360 = vadd.f32 %v1899, %v2150
        %v2361 = vadd.f32 %v1900, %v2203
        %v2362 = vadd.f32 %v1901, %v2153
        %v2363 = vadd.f32 %v1902, %v2204
        %v2364 = vadd.f32 %v1903, %v2156
        %v2365 = vadd.f32 %v2333, %v2239
        %v2366 = vadd.f32 %v2334, %v2317
        %v2367 = vadd.f32 %v2335, %v2242
        %v2368 = vadd.f32 %v2336, %v2318
        %v2369 = vadd.f32 %v2337, %v2245
        %v2370 = vadd.f32 %v2338, %v2319
        %v2371 = vadd.f32 %v2339, %v2248
        %v2372 = vadd.f32 %v2340, %v2320
        %v2373 = vadd.f32 %v2341, %v2251
        %v2374 = vadd.f32 %v2342, %v2321
        %v2375 = vadd.f32 %v2343, %v2254
        %v2376 = vadd.f32 %v2344, %v2322
        %v2377 = vadd.f32 %v2345, %v2257
        %v2378 = vadd.f32 %v2346, %v2323
        %v2379 = vadd.f32 %v2347, %v2260
        %v2380 = vadd.f32 %v2348, %v2324
        %v2381 = vadd.f32 %v2349, %v2263
        %v2382 = vadd.f32 %v2350, %v2325
        %v2383 = vadd.f32 %v2351, %v2266
        %v2384 = vadd.f32 %v2352, %v2326
        %v2385 = vadd.f32 %v2353, %v2269
        %v2386 = vadd.f32 %v2354, %v2327
        %v2387 = vadd.f32 %v2355, %v2272
        %v2388 = vadd.f32 %v2356, %v2328
        %v2389 = vadd.f32 %v2357, %v2275
        %v2390 = vadd.f32 %v2358, %v2329
        %v2391 = vadd.f32 %v2359, %v2278
        %v2392 = vadd.f32 %v2360, %v2330
        %v2393 = vadd.f32 %v2361, %v2281
        %v2394 = vadd.f32 %v2362, %v2331
        %v2395 = vadd.f32 %v2363, %v2284
        %v2396 = vadd.f32 %v2364, %v2332
        %v2397 = vpack.c.bf16 %v2366, %v2365
        %v2398 = vpack.c.bf16 %v2368, %v2367
        %v2399 = vpack.c.bf16 %v2370, %v2369
        %v2400 = vpack.c.bf16 %v2372, %v2371
        %v2401 = vpack.c.bf16 %v2374, %v2373
        %v2402 = vpack.c.bf16 %v2376, %v2375
        %v2403 = vpack.c.bf16 %v2378, %v2377
        %v2404 = vpack.c.bf16 %v2380, %v2379
        %v2405 = vpack.c.bf16 %v2382, %v2381
        %v2406 = vpack.c.bf16 %v2384, %v2383
        %v2407 = vpack.c.bf16 %v2386, %v2385
        %v2408 = vpack.c.bf16 %v2388, %v2387
        %v2409 = vpack.c.bf16 %v2390, %v2389
        %v2410 = vpack.c.bf16 %v2392, %v2391
        %v2411 = vpack.c.bf16 %v2394, %v2393
        %v2412 = vpack.c.bf16 %v2396, %v2395
        %v2413 = vld [vmem:[%s5] sm:$0xf]
        %v2414 = vld [vmem:[%s5 + $0x4] sm:$0xf]
        %v2415 = vld [vmem:[%s5 + $0x8] sm:$0xf]
        %v2416 = vld [vmem:[%s5 + $0xc] sm:$0xf]
        %v2417 = vld [vmem:[%s5 + $0x10] sm:$0xf]
        %v2418 = vld [vmem:[%s5 + $0x14] sm:$0xf]
        %v2419 = vld [vmem:[%s5 + $0x18] sm:$0xf]
        %v2420 = vld [vmem:[%s5 + $0x1c] sm:$0xf]
        %v2421 = vld [vmem:[%s5 + $0x20] sm:$0xf]
        %v2422 = vld [vmem:[%s5 + $0x24] sm:$0xf]
        %v2423 = vld [vmem:[%s5 + $0x28] sm:$0xf]
        %v2424 = vld [vmem:[%s5 + $0x2c] sm:$0xf]
        %v2425 = vld [vmem:[%s5 + $0x30] sm:$0xf]
        %v2426 = vld [vmem:[%s5 + $0x34] sm:$0xf]
        %v2427 = vld [vmem:[%s5 + $0x38] sm:$0xf]
        %v2428 = vld [vmem:[%s5 + $0x3c] sm:$0xf]
        %v2429 = vld [vmem:[%s6] sm:$0x1]
        %v2431 = vlaneseq
        %v2432 = vshrl.u32 %v2431, 7
        %v2433 = vsub.s32 0, %v2432
        %v2434 = vrot.slane %v2429, %v2433
        %v2452 = vunpack.c.l.b16 %v2413
        %v2453 = vunpack.c.l.b16 %v2414
        %v2454 = vunpack.c.l.b16 %v2415
        %v2455 = vunpack.c.l.b16 %v2416
        %v2456 = vunpack.c.l.b16 %v2417
        %v2457 = vunpack.c.l.b16 %v2418
        %v2458 = vunpack.c.l.b16 %v2419
        %v2459 = vunpack.c.l.b16 %v2420
        %v2460 = vunpack.c.l.b16 %v2421
        %v2461 = vunpack.c.l.b16 %v2422
        %v2462 = vunpack.c.l.b16 %v2423
        %v2463 = vunpack.c.l.b16 %v2424
        %v2464 = vunpack.c.l.b16 %v2425
        %v2465 = vunpack.c.l.b16 %v2426
        %v2466 = vunpack.c.l.b16 %v2427
        %v2467 = vunpack.c.l.b16 %v2428
        %v2468 = vpack.c.b16 %v2453, %v2452
        %v2469 = vpack.c.b16 %v2455, %v2454
        %v2470 = vpack.c.b16 %v2457, %v2456
        %v2471 = vpack.c.b16 %v2459, %v2458
        %v2472 = vpack.c.b16 %v2461, %v2460
        %v2473 = vpack.c.b16 %v2463, %v2462
        %v2474 = vpack.c.b16 %v2465, %v2464
        %v2475 = vpack.c.b16 %v2467, %v2466
        %2484 = vmatprep.subr.bf16.mxu0 0
        %2485 = vmatpush1.bf16.msra.mxu0 %v2468
        %2486 = vmatprep.subr.bf16.mxu0 0
        %2487 = vmatpush1.bf16.msra.mxu0 %v2469
        %2488 = vmatprep.subr.bf16.mxu0 0
        %2489 = vmatpush1.bf16.msra.mxu0 %v2470
        %2490 = vmatprep.subr.bf16.mxu0 0
        %2491 = vmatpush1.bf16.msra.mxu0 %v2471
        %2492 = vmatprep.subr.bf16.mxu0 0
        %2493 = vmatpush1.bf16.msra.mxu0 %v2472
        %2494 = vmatprep.subr.bf16.mxu0 0
        %2495 = vmatpush1.bf16.msra.mxu0 %v2473
        %2496 = vmatprep.subr.bf16.mxu0 0
        %2497 = vmatpush1.bf16.msra.mxu0 %v2474
        %2498 = vmatprep.subr.bf16.mxu0 0
        %2499 = vmatpush1.bf16.msra.mxu0 %v2475
        %2500 = vmatprep.subr.bf16.mxu0 0
        %2501 = vmatpush1.bf16.msra.mxu0 0
        %2502 = vmatprep.subr.bf16.mxu0 0
        %2503 = vmatpush1.bf16.msra.mxu0 0
        %2504 = vmatprep.subr.bf16.mxu0 0
        %2505 = vmatpush1.bf16.msra.mxu0 0
        %2506 = vmatprep.subr.bf16.mxu0 0
        %2507 = vmatpush1.bf16.msra.mxu0 0
        %2508 = vmatprep.subr.bf16.mxu0 0
        %2509 = vmatpush1.bf16.msra.mxu0 0
        %2510 = vmatprep.subr.bf16.mxu0 0
        %2511 = vmatpush1.bf16.msra.mxu0 0
        %2512 = vmatprep.subr.bf16.mxu0 0
        %2513 = vmatpush1.bf16.msra.mxu0 0
        %2514 = vmatprep.subr.bf16.mxu0 0
        %2515 = vmatpush1.bf16.msra.mxu0 0
        %2516 = vmatprep.mubr.bf16.mxu0 0
        %2517 = vmatmul.mubr.bf16.gmra.mrb[0].mxu0 %v2397
        %v2518 = vpop.f32.mrb[0].mxu0
        %v2519 = vadd.f32 %v2434, %v2518
        %v2520 = vpop.f32.mrb[0].mxu0
        %v2521 = vpop.f32.mrb[0].mxu0
        %v2522 = vadd.f32 %v2434, %v2521
        %v2523 = vpop.f32.mrb[0].mxu0
        %2524 = vmatprep.mubr.bf16.mxu0 0
        %2525 = vmatmul.mubr.bf16.gmra.mrb[0].mxu0 %v2398
        %v2526 = vpop.f32.mrb[0].mxu0
        %v2527 = vadd.f32 %v2434, %v2526
        %v2528 = vpop.f32.mrb[0].mxu0
        %v2529 = vpop.f32.mrb[0].mxu0
        %v2530 = vadd.f32 %v2434, %v2529
        %v2531 = vpop.f32.mrb[0].mxu0
        %2532 = vmatprep.mubr.bf16.mxu0 0
        %2533 = vmatmul.mubr.bf16.gmra.mrb[0].mxu0 %v2399
        %v2534 = vpop.f32.mrb[0].mxu0
        %v2535 = vadd.f32 %v2434, %v2534
        %v2536 = vpop.f32.mrb[0].mxu0
        %v2537 = vpop.f32.mrb[0].mxu0
        %v2538 = vadd.f32 %v2434, %v2537
        %v2539 = vpop.f32.mrb[0].mxu0
        %2540 = vmatprep.mubr.bf16.mxu0 0
        %2541 = vmatmul.mubr.bf16.gmra.mrb[0].mxu0 %v2400
        %v2542 = vpop.f32.mrb[0].mxu0
        %v2543 = vadd.f32 %v2434, %v2542
        %v2544 = vpop.f32.mrb[0].mxu0
        %v2545 = vpop.f32.mrb[0].mxu0
        %v2546 = vadd.f32 %v2434, %v2545
        %v2547 = vpop.f32.mrb[0].mxu0
        %2548 = vmatprep.mubr.bf16.mxu0 0
        %2549 = vmatmul.mubr.bf16.gmra.mrb[0].mxu0 %v2401
        %v2550 = vpop.f32.mrb[0].mxu0
        %v2551 = vadd.f32 %v2434, %v2550
        %v2552 = vpop.f32.mrb[0].mxu0
        %v2553 = vpop.f32.mrb[0].mxu0
        %v2554 = vadd.f32 %v2434, %v2553
        %v2555 = vpop.f32.mrb[0].mxu0
        %2556 = vmatprep.mubr.bf16.mxu0 0
        %2557 = vmatmul.mubr.bf16.gmra.mrb[0].mxu0 %v2402
        %v2558 = vpop.f32.mrb[0].mxu0
        %v2559 = vadd.f32 %v2434, %v2558
        %v2560 = vpop.f32.mrb[0].mxu0
        %v2561 = vpop.f32.mrb[0].mxu0
        %v2562 = vadd.f32 %v2434, %v2561
        %v2563 = vpop.f32.mrb[0].mxu0
        %2564 = vmatprep.mubr.bf16.mxu0 0
        %2565 = vmatmul.mubr.bf16.gmra.mrb[0].mxu0 %v2403
        %v2566 = vpop.f32.mrb[0].mxu0
        %v2567 = vadd.f32 %v2434, %v2566
        %v2568 = vpop.f32.mrb[0].mxu0
        %v2569 = vpop.f32.mrb[0].mxu0
        %v2570 = vadd.f32 %v2434, %v2569
        %v2571 = vpop.f32.mrb[0].mxu0
        %2572 = vmatprep.mubr.bf16.mxu0 0
        %2573 = vmatmul.mubr.bf16.gmra.mrb[0].mxu0 %v2404
        %v2574 = vpop.f32.mrb[0].mxu0
        %v2575 = vadd.f32 %v2434, %v2574
        %v2576 = vpop.f32.mrb[0].mxu0
        %v2577 = vpop.f32.mrb[0].mxu0
        %v2578 = vadd.f32 %v2434, %v2577
        %v2579 = vpop.f32.mrb[0].mxu0
        %2580 = vmatprep.mubr.bf16.mxu0 0
        %2581 = vmatmul.mubr.bf16.gmra.mrb[0].mxu0 %v2405
        %v2582 = vpop.f32.mrb[0].mxu0
        %v2583 = vadd.f32 %v2434, %v2582
        %v2584 = vpop.f32.mrb[0].mxu0
        %v2585 = vpop.f32.mrb[0].mxu0
        %v2586 = vadd.f32 %v2434, %v2585
        %v2587 = vpop.f32.mrb[0].mxu0
        %2588 = vmatprep.mubr.bf16.mxu0 0
        %2589 = vmatmul.mubr.bf16.gmra.mrb[0].mxu0 %v2406
        %v2590 = vpop.f32.mrb[0].mxu0
        %v2591 = vadd.f32 %v2434, %v2590
        %v2592 = vpop.f32.mrb[0].mxu0
        %v2593 = vpop.f32.mrb[0].mxu0
        %v2594 = vadd.f32 %v2434, %v2593
        %v2595 = vpop.f32.mrb[0].mxu0
        %2596 = vmatprep.mubr.bf16.mxu0 0
        %2597 = vmatmul.mubr.bf16.gmra.mrb[0].mxu0 %v2407
        %v2598 = vpop.f32.mrb[0].mxu0
        %v2599 = vadd.f32 %v2434, %v2598
        %v2600 = vpop.f32.mrb[0].mxu0
        %v2601 = vpop.f32.mrb[0].mxu0
        %v2602 = vadd.f32 %v2434, %v2601
        %v2603 = vpop.f32.mrb[0].mxu0
        %2604 = vmatprep.mubr.bf16.mxu0 0
        %2605 = vmatmul.mubr.bf16.gmra.mrb[0].mxu0 %v2408
        %v2606 = vpop.f32.mrb[0].mxu0
        %v2607 = vadd.f32 %v2434, %v2606
        %v2608 = vpop.f32.mrb[0].mxu0
        %v2609 = vpop.f32.mrb[0].mxu0
        %v2610 = vadd.f32 %v2434, %v2609
        %v2611 = vpop.f32.mrb[0].mxu0
        %2612 = vmatprep.mubr.bf16.mxu0 0
        %2613 = vmatmul.mubr.bf16.gmra.mrb[0].mxu0 %v2409
        %v2614 = vpop.f32.mrb[0].mxu0
        %v2615 = vadd.f32 %v2434, %v2614
        %v2616 = vpop.f32.mrb[0].mxu0
        %v2617 = vpop.f32.mrb[0].mxu0
        %v2618 = vadd.f32 %v2434, %v2617
        %v2619 = vpop.f32.mrb[0].mxu0
        %2620 = vmatprep.mubr.bf16.mxu0 0
        %2621 = vmatmul.mubr.bf16.gmra.mrb[0].mxu0 %v2410
        %v2622 = vpop.f32.mrb[0].mxu0
        %v2623 = vadd.f32 %v2434, %v2622
        %v2624 = vpop.f32.mrb[0].mxu0
        %v2625 = vpop.f32.mrb[0].mxu0
        %v2626 = vadd.f32 %v2434, %v2625
        %v2627 = vpop.f32.mrb[0].mxu0
        %2628 = vmatprep.mubr.bf16.mxu0 0
        %2629 = vmatmul.mubr.bf16.gmra.mrb[0].mxu0 %v2411
        %v2630 = vpop.f32.mrb[0].mxu0
        %v2631 = vadd.f32 %v2434, %v2630
        %v2632 = vpop.f32.mrb[0].mxu0
        %v2633 = vpop.f32.mrb[0].mxu0
        %v2634 = vadd.f32 %v2434, %v2633
        %v2635 = vpop.f32.mrb[0].mxu0
        %2636 = vmatprep.mubr.bf16.mxu0 0
        %2637 = vmatmul.mubr.bf16.gmra.mrb[0].mxu0 %v2412
        %v2638 = vpop.f32.mrb[0].mxu0
        %v2639 = vadd.f32 %v2434, %v2638
        %v2640 = vpop.f32.mrb[0].mxu0
        %v2641 = vpop.f32.mrb[0].mxu0
        %v2642 = vadd.f32 %v2434, %v2641
        %v2643 = vpop.f32.mrb[0].mxu0
        %2644 = vdwg.mxu0
        %v2645 = vmax.f32 %v2519, 0.0
        %v2646 = vmax.f32 %v2522, 0.0
        %v2647 = vmax.f32 %v2527, 0.0
        %v2648 = vmax.f32 %v2530, 0.0
        %v2649 = vmax.f32 %v2535, 0.0
        %v2650 = vmax.f32 %v2538, 0.0
        %v2651 = vmax.f32 %v2543, 0.0
        %v2652 = vmax.f32 %v2546, 0.0
        %v2653 = vmax.f32 %v2551, 0.0
        %v2654 = vmax.f32 %v2554, 0.0
        %v2655 = vmax.f32 %v2559, 0.0
        %v2656 = vmax.f32 %v2562, 0.0
        %v2657 = vmax.f32 %v2567, 0.0
        %v2658 = vmax.f32 %v2570, 0.0
        %v2659 = vmax.f32 %v2575, 0.0
        %v2660 = vmax.f32 %v2578, 0.0
        %v2661 = vmax.f32 %v2583, 0.0
        %v2662 = vmax.f32 %v2586, 0.0
        %v2663 = vmax.f32 %v2591, 0.0
        %v2664 = vmax.f32 %v2594, 0.0
        %v2665 = vmax.f32 %v2599, 0.0
        %v2666 = vmax.f32 %v2602, 0.0
        %v2667 = vmax.f32 %v2607, 0.0
        %v2668 = vmax.f32 %v2610, 0.0
        %v2669 = vmax.f32 %v2615, 0.0
        %v2670 = vmax.f32 %v2618, 0.0
        %v2671 = vmax.f32 %v2623, 0.0
        %v2672 = vmax.f32 %v2626, 0.0
        %v2673 = vmax.f32 %v2631, 0.0
        %v2674 = vmax.f32 %v2634, 0.0
        %v2675 = vmax.f32 %v2639, 0.0
        %v2676 = vmax.f32 %v2642, 0.0
        %v2677 = vpack.c.bf16 %v2646, %v2645
        %v2678 = vpack.c.bf16 %v2648, %v2647
        %v2679 = vpack.c.bf16 %v2650, %v2649
        %v2680 = vpack.c.bf16 %v2652, %v2651
        %v2681 = vpack.c.bf16 %v2654, %v2653
        %v2682 = vpack.c.bf16 %v2656, %v2655
        %v2683 = vpack.c.bf16 %v2658, %v2657
        %v2684 = vpack.c.bf16 %v2660, %v2659
        %v2685 = vpack.c.bf16 %v2662, %v2661
        %v2686 = vpack.c.bf16 %v2664, %v2663
        %v2687 = vpack.c.bf16 %v2666, %v2665
        %v2688 = vpack.c.bf16 %v2668, %v2667
        %v2689 = vpack.c.bf16 %v2670, %v2669
        %v2690 = vpack.c.bf16 %v2672, %v2671
        %v2691 = vpack.c.bf16 %v2674, %v2673
        %v2692 = vpack.c.bf16 %v2676, %v2675
        %v2693 = vld [vmem:[%s7] sm:$0xf]
        %v2694 = vld [vmem:[%s7 + $0x4] sm:$0xf]
        %v2695 = vld [vmem:[%s7 + $0x8] sm:$0xf]
        %v2696 = vld [vmem:[%s7 + $0xc] sm:$0xf]
        %v2697 = vld [vmem:[%s7 + $0x10] sm:$0xf]
        %v2698 = vld [vmem:[%s7 + $0x14] sm:$0xf]
        %v2699 = vld [vmem:[%s7 + $0x18] sm:$0xf]
        %v2700 = vld [vmem:[%s7 + $0x1c] sm:$0xf]
        %v2701 = vld [vmem:[%s7 + $0x20] sm:$0xf]
        %v2702 = vld [vmem:[%s7 + $0x24] sm:$0xf]
        %v2703 = vld [vmem:[%s7 + $0x28] sm:$0xf]
        %v2704 = vld [vmem:[%s7 + $0x2c] sm:$0xf]
        %v2705 = vld [vmem:[%s7 + $0x30] sm:$0xf]
        %v2706 = vld [vmem:[%s7 + $0x34] sm:$0xf]
        %v2707 = vld [vmem:[%s7 + $0x38] sm:$0xf]
        %v2708 = vld [vmem:[%s7 + $0x3c] sm:$0xf]
        %v2709 = vld [vmem:[%s8] sm:$0x1]
        %v2711 = vlaneseq
        %v2712 = vshrl.u32 %v2711, 7
        %v2713 = vsub.s32 0, %v2712
        %v2714 = vrot.slane %v2709, %v2713
        %v2732 = vunpack.c.l.b16 %v2693
        %v2733 = vunpack.c.l.b16 %v2694
        %v2734 = vunpack.c.l.b16 %v2695
        %v2735 = vunpack.c.l.b16 %v2696
        %v2736 = vunpack.c.l.b16 %v2697
        %v2737 = vunpack.c.l.b16 %v2698
        %v2738 = vunpack.c.l.b16 %v2699
        %v2739 = vunpack.c.l.b16 %v2700
        %v2740 = vunpack.c.l.b16 %v2701
        %v2741 = vunpack.c.l.b16 %v2702
        %v2742 = vunpack.c.l.b16 %v2703
        %v2743 = vunpack.c.l.b16 %v2704
        %v2744 = vunpack.c.l.b16 %v2705
        %v2745 = vunpack.c.l.b16 %v2706
        %v2746 = vunpack.c.l.b16 %v2707
        %v2747 = vunpack.c.l.b16 %v2708
        %v2748 = vpack.c.b16 %v2733, %v2732
        %v2749 = vpack.c.b16 %v2735, %v2734
        %v2750 = vpack.c.b16 %v2737, %v2736
        %v2751 = vpack.c.b16 %v2739, %v2738
        %v2752 = vpack.c.b16 %v2741, %v2740
        %v2753 = vpack.c.b16 %v2743, %v2742
        %v2754 = vpack.c.b16 %v2745, %v2744
        %v2755 = vpack.c.b16 %v2747, %v2746
        %2764 = vmatprep.subr.bf16.mxu0 0
        %2765 = vmatpush1.bf16.msra.mxu0 %v2748
        %2766 = vmatprep.subr.bf16.mxu0 0
        %2767 = vmatpush1.bf16.msra.mxu0 %v2749
        %2768 = vmatprep.subr.bf16.mxu0 0
        %2769 = vmatpush1.bf16.msra.mxu0 %v2750
        %2770 = vmatprep.subr.bf16.mxu0 0
        %2771 = vmatpush1.bf16.msra.mxu0 %v2751
        %2772 = vmatprep.subr.bf16.mxu0 0
        %2773 = vmatpush1.bf16.msra.mxu0 %v2752
        %2774 = vmatprep.subr.bf16.mxu0 0
        %2775 = vmatpush1.bf16.msra.mxu0 %v2753
        %2776 = vmatprep.subr.bf16.mxu0 0
        %2777 = vmatpush1.bf16.msra.mxu0 %v2754
        %2778 = vmatprep.subr.bf16.mxu0 0
        %2779 = vmatpush1.bf16.msra.mxu0 %v2755
        %2780 = vmatprep.subr.bf16.mxu0 0
        %2781 = vmatpush1.bf16.msra.mxu0 0
        %2782 = vmatprep.subr.bf16.mxu0 0
        %2783 = vmatpush1.bf16.msra.mxu0 0
        %2784 = vmatprep.subr.bf16.mxu0 0
        %2785 = vmatpush1.bf16.msra.mxu0 0
        %2786 = vmatprep.subr.bf16.mxu0 0
        %2787 = vmatpush1.bf16.msra.mxu0 0
        %2788 = vmatprep.subr.bf16.mxu0 0
        %2789 = vmatpush1.bf16.msra.mxu0 0
        %2790 = vmatprep.subr.bf16.mxu0 0
        %2791 = vmatpush1.bf16.msra.mxu0 0
        %2792 = vmatprep.subr.bf16.mxu0 0
        %2793 = vmatpush1.bf16.msra.mxu0 0
        %2794 = vmatprep.subr.bf16.mxu0 0
        %2795 = vmatpush1.bf16.msra.mxu0 0
        %2796 = vmatprep.mubr.bf16.mxu0 0
        %2797 = vmatmul.mubr.bf16.gmra.mrb[0].mxu0 %v2677
        %v2798 = vpop.f32.mrb[0].mxu0
        %v2799 = vadd.f32 %v2714, %v2798
        %v2800 = vpop.f32.mrb[0].mxu0
        %v2801 = vpop.f32.mrb[0].mxu0
        %v2802 = vadd.f32 %v2714, %v2801
        %v2803 = vpop.f32.mrb[0].mxu0
        %2804 = vmatprep.mubr.bf16.mxu0 0
        %2805 = vmatmul.mubr.bf16.gmra.mrb[0].mxu0 %v2678
        %v2806 = vpop.f32.mrb[0].mxu0
        %v2807 = vadd.f32 %v2714, %v2806
        %v2808 = vpop.f32.mrb[0].mxu0
        %v2809 = vpop.f32.mrb[0].mxu0
        %v2810 = vadd.f32 %v2714, %v2809
        %v2811 = vpop.f32.mrb[0].mxu0
        %2812 = vmatprep.mubr.bf16.mxu0 0
        %2813 = vmatmul.mubr.bf16.gmra.mrb[0].mxu0 %v2679
        %v2814 = vpop.f32.mrb[0].mxu0
        %v2815 = vadd.f32 %v2714, %v2814
        %v2816 = vpop.f32.mrb[0].mxu0
        %v2817 = vpop.f32.mrb[0].mxu0
        %v2818 = vadd.f32 %v2714, %v2817
        %v2819 = vpop.f32.mrb[0].mxu0
        %2820 = vmatprep.mubr.bf16.mxu0 0
        %2821 = vmatmul.mubr.bf16.gmra.mrb[0].mxu0 %v2680
        %v2822 = vpop.f32.mrb[0].mxu0
        %v2823 = vadd.f32 %v2714, %v2822
        %v2824 = vpop.f32.mrb[0].mxu0
        %v2825 = vpop.f32.mrb[0].mxu0
        %v2826 = vadd.f32 %v2714, %v2825
        %v2827 = vpop.f32.mrb[0].mxu0
        %2828 = vmatprep.mubr.bf16.mxu0 0
        %2829 = vmatmul.mubr.bf16.gmra.mrb[0].mxu0 %v2681
        %v2830 = vpop.f32.mrb[0].mxu0
        %v2831 = vadd.f32 %v2714, %v2830
        %v2832 = vpop.f32.mrb[0].mxu0
        %v2833 = vpop.f32.mrb[0].mxu0
        %v2834 = vadd.f32 %v2714, %v2833
        %v2835 = vpop.f32.mrb[0].mxu0
        %2836 = vmatprep.mubr.bf16.mxu0 0
        %2837 = vmatmul.mubr.bf16.gmra.mrb[0].mxu0 %v2682
        %v2838 = vpop.f32.mrb[0].mxu0
        %v2839 = vadd.f32 %v2714, %v2838
        %v2840 = vpop.f32.mrb[0].mxu0
        %v2841 = vpop.f32.mrb[0].mxu0
        %v2842 = vadd.f32 %v2714, %v2841
        %v2843 = vpop.f32.mrb[0].mxu0
        %2844 = vmatprep.mubr.bf16.mxu0 0
        %2845 = vmatmul.mubr.bf16.gmra.mrb[0].mxu0 %v2683
        %v2846 = vpop.f32.mrb[0].mxu0
        %v2847 = vadd.f32 %v2714, %v2846
        %v2848 = vpop.f32.mrb[0].mxu0
        %v2849 = vpop.f32.mrb[0].mxu0
        %v2850 = vadd.f32 %v2714, %v2849
        %v2851 = vpop.f32.mrb[0].mxu0
        %2852 = vmatprep.mubr.bf16.mxu0 0
        %2853 = vmatmul.mubr.bf16.gmra.mrb[0].mxu0 %v2684
        %v2854 = vpop.f32.mrb[0].mxu0
        %v2855 = vadd.f32 %v2714, %v2854
        %v2856 = vpop.f32.mrb[0].mxu0
        %v2857 = vpop.f32.mrb[0].mxu0
        %v2858 = vadd.f32 %v2714, %v2857
        %v2859 = vpop.f32.mrb[0].mxu0
        %2860 = vmatprep.mubr.bf16.mxu0 0
        %2861 = vmatmul.mubr.bf16.gmra.mrb[0].mxu0 %v2685
        %v2862 = vpop.f32.mrb[0].mxu0
        %v2863 = vadd.f32 %v2714, %v2862
        %v2864 = vpop.f32.mrb[0].mxu0
        %v2865 = vpop.f32.mrb[0].mxu0
        %v2866 = vadd.f32 %v2714, %v2865
        %v2867 = vpop.f32.mrb[0].mxu0
        %2868 = vmatprep.mubr.bf16.mxu0 0
        %2869 = vmatmul.mubr.bf16.gmra.mrb[0].mxu0 %v2686
        %v2870 = vpop.f32.mrb[0].mxu0
        %v2871 = vadd.f32 %v2714, %v2870
        %v2872 = vpop.f32.mrb[0].mxu0
        %v2873 = vpop.f32.mrb[0].mxu0
        %v2874 = vadd.f32 %v2714, %v2873
        %v2875 = vpop.f32.mrb[0].mxu0
        %2876 = vmatprep.mubr.bf16.mxu0 0
        %2877 = vmatmul.mubr.bf16.gmra.mrb[0].mxu0 %v2687
        %v2878 = vpop.f32.mrb[0].mxu0
        %v2879 = vadd.f32 %v2714, %v2878
        %v2880 = vpop.f32.mrb[0].mxu0
        %v2881 = vpop.f32.mrb[0].mxu0
        %v2882 = vadd.f32 %v2714, %v2881
        %v2883 = vpop.f32.mrb[0].mxu0
        %2884 = vmatprep.mubr.bf16.mxu0 0
        %2885 = vmatmul.mubr.bf16.gmra.mrb[0].mxu0 %v2688
        %v2886 = vpop.f32.mrb[0].mxu0
        %v2887 = vadd.f32 %v2714, %v2886
        %v2888 = vpop.f32.mrb[0].mxu0
        %v2889 = vpop.f32.mrb[0].mxu0
        %v2890 = vadd.f32 %v2714, %v2889
        %v2891 = vpop.f32.mrb[0].mxu0
        %2892 = vmatprep.mubr.bf16.mxu0 0
        %2893 = vmatmul.mubr.bf16.gmra.mrb[0].mxu0 %v2689
        %v2894 = vpop.f32.mrb[0].mxu0
        %v2895 = vadd.f32 %v2714, %v2894
        %v2896 = vpop.f32.mrb[0].mxu0
        %v2897 = vpop.f32.mrb[0].mxu0
        %v2898 = vadd.f32 %v2714, %v2897
        %v2899 = vpop.f32.mrb[0].mxu0
        %2900 = vmatprep.mubr.bf16.mxu0 0
        %2901 = vmatmul.mubr.bf16.gmra.mrb[0].mxu0 %v2690
        %v2902 = vpop.f32.mrb[0].mxu0
        %v2903 = vadd.f32 %v2714, %v2902
        %v2904 = vpop.f32.mrb[0].mxu0
        %v2905 = vpop.f32.mrb[0].mxu0
        %v2906 = vadd.f32 %v2714, %v2905
        %v2907 = vpop.f32.mrb[0].mxu0
        %2908 = vmatprep.mubr.bf16.mxu0 0
        %2909 = vmatmul.mubr.bf16.gmra.mrb[0].mxu0 %v2691
        %v2910 = vpop.f32.mrb[0].mxu0
        %v2911 = vadd.f32 %v2714, %v2910
        %v2912 = vpop.f32.mrb[0].mxu0
        %v2913 = vpop.f32.mrb[0].mxu0
        %v2914 = vadd.f32 %v2714, %v2913
        %v2915 = vpop.f32.mrb[0].mxu0
        %2916 = vmatprep.mubr.bf16.mxu0 0
        %2917 = vmatmul.mubr.bf16.gmra.mrb[0].mxu0 %v2692
        %v2918 = vpop.f32.mrb[0].mxu0
        %v2919 = vadd.f32 %v2714, %v2918
        %v2920 = vpop.f32.mrb[0].mxu0
        %v2921 = vpop.f32.mrb[0].mxu0
        %v2922 = vadd.f32 %v2714, %v2921
        %v2923 = vpop.f32.mrb[0].mxu0
        %2924 = vdwg.mxu0
        %2925 = vxpose.xlu0.b32.start [1/16] %v2799, 128
        %2926 = vxpose.xlu0.b32.cont [2/16] %v2802, 128
        %2927 = vxpose.xlu0.b32.cont [3/16] 0.0, 128
        %2928 = vxpose.xlu0.b32.cont [4/16] 0.0, 128
        %2929 = vxpose.xlu0.b32.cont [5/16] 0.0, 128
        %2930 = vxpose.xlu0.b32.cont [6/16] 0.0, 128
        %2931 = vxpose.xlu0.b32.cont [7/16] 0.0, 128
        %2932 = vxpose.xlu0.b32.cont [8/16] 0.0, 128
        %2933 = vxpose.xlu0.b32.cont [9/16] 0.0, 128
        %2934 = vxpose.xlu0.b32.cont [10/16] 0.0, 128
        %2935 = vxpose.xlu0.b32.cont [11/16] 0.0, 128
        %2936 = vxpose.xlu0.b32.cont [12/16] 0.0, 128
        %2937 = vxpose.xlu0.b32.cont [13/16] 0.0, 128
        %2938 = vxpose.xlu0.b32.cont [14/16] 0.0, 128
        %2939 = vxpose.xlu0.b32.cont [15/16] 0.0, 128
        %2940 = vxpose.xlu0.b32.end [16/16] 0.0, 128
        %v2941 = vpop.trf.xlu0
        %v2942 = vpop.trf.xlu0
        %v2943 = vpop.trf.xlu0
        %v2944 = vpop.trf.xlu0
        %v2945 = vpop.trf.xlu0
        %v2946 = vpop.trf.xlu0
        %v2947 = vpop.trf.xlu0
        %v2948 = vpop.trf.xlu0
        %v2949 = vpop.trf.xlu0
        %v2950 = vpop.trf.xlu0
        %v2951 = vpop.trf.xlu0
        %v2952 = vpop.trf.xlu0
        %v2953 = vpop.trf.xlu0
        %v2954 = vpop.trf.xlu0
        %v2955 = vpop.trf.xlu0
        %v2956 = vpop.trf.xlu0
        %2957 = vxpose.xlu0.b32.start [1/16] %v2807, 128
        %2958 = vxpose.xlu0.b32.cont [2/16] %v2810, 128
        %2959 = vxpose.xlu0.b32.cont [3/16] 0.0, 128
        %2960 = vxpose.xlu0.b32.cont [4/16] 0.0, 128
        %2961 = vxpose.xlu0.b32.cont [5/16] 0.0, 128
        %2962 = vxpose.xlu0.b32.cont [6/16] 0.0, 128
        %2963 = vxpose.xlu0.b32.cont [7/16] 0.0, 128
        %2964 = vxpose.xlu0.b32.cont [8/16] 0.0, 128
        %2965 = vxpose.xlu0.b32.cont [9/16] 0.0, 128
        %2966 = vxpose.xlu0.b32.cont [10/16] 0.0, 128
        %2967 = vxpose.xlu0.b32.cont [11/16] 0.0, 128
        %2968 = vxpose.xlu0.b32.cont [12/16] 0.0, 128
        %2969 = vxpose.xlu0.b32.cont [13/16] 0.0, 128
        %2970 = vxpose.xlu0.b32.cont [14/16] 0.0, 128
        %2971 = vxpose.xlu0.b32.cont [15/16] 0.0, 128
        %2972 = vxpose.xlu0.b32.end [16/16] 0.0, 128
        %v2973 = vpop.trf.xlu0
        %v2974 = vpop.trf.xlu0
        %v2975 = vpop.trf.xlu0
        %v2976 = vpop.trf.xlu0
        %v2977 = vpop.trf.xlu0
        %v2978 = vpop.trf.xlu0
        %v2979 = vpop.trf.xlu0
        %v2980 = vpop.trf.xlu0
        %v2981 = vpop.trf.xlu0
        %v2982 = vpop.trf.xlu0
        %v2983 = vpop.trf.xlu0
        %v2984 = vpop.trf.xlu0
        %v2985 = vpop.trf.xlu0
        %v2986 = vpop.trf.xlu0
        %v2987 = vpop.trf.xlu0
        %v2988 = vpop.trf.xlu0
        %2989 = vxpose.xlu0.b32.start [1/16] %v2815, 128
        %2990 = vxpose.xlu0.b32.cont [2/16] %v2818, 128
        %2991 = vxpose.xlu0.b32.cont [3/16] 0.0, 128
        %2992 = vxpose.xlu0.b32.cont [4/16] 0.0, 128
        %2993 = vxpose.xlu0.b32.cont [5/16] 0.0, 128
        %2994 = vxpose.xlu0.b32.cont [6/16] 0.0, 128
        %2995 = vxpose.xlu0.b32.cont [7/16] 0.0, 128
        %2996 = vxpose.xlu0.b32.cont [8/16] 0.0, 128
        %2997 = vxpose.xlu0.b32.cont [9/16] 0.0, 128
        %2998 = vxpose.xlu0.b32.cont [10/16] 0.0, 128
        %2999 = vxpose.xlu0.b32.cont [11/16] 0.0, 128
        %3000 = vxpose.xlu0.b32.cont [12/16] 0.0, 128
        %3001 = vxpose.xlu0.b32.cont [13/16] 0.0, 128
        %3002 = vxpose.xlu0.b32.cont [14/16] 0.0, 128
        %3003 = vxpose.xlu0.b32.cont [15/16] 0.0, 128
        %3004 = vxpose.xlu0.b32.end [16/16] 0.0, 128
        %v3005 = vpop.trf.xlu0
        %v3006 = vpop.trf.xlu0
        %v3007 = vpop.trf.xlu0
        %v3008 = vpop.trf.xlu0
        %v3009 = vpop.trf.xlu0
        %v3010 = vpop.trf.xlu0
        %v3011 = vpop.trf.xlu0
        %v3012 = vpop.trf.xlu0
        %v3013 = vpop.trf.xlu0
        %v3014 = vpop.trf.xlu0
        %v3015 = vpop.trf.xlu0
        %v3016 = vpop.trf.xlu0
        %v3017 = vpop.trf.xlu0
        %v3018 = vpop.trf.xlu0
        %v3019 = vpop.trf.xlu0
        %v3020 = vpop.trf.xlu0
        %3021 = vxpose.xlu0.b32.start [1/16] %v2823, 128
        %3022 = vxpose.xlu0.b32.cont [2/16] %v2826, 128
        %3023 = vxpose.xlu0.b32.cont [3/16] 0.0, 128
        %3024 = vxpose.xlu0.b32.cont [4/16] 0.0, 128
        %3025 = vxpose.xlu0.b32.cont [5/16] 0.0, 128
        %3026 = vxpose.xlu0.b32.cont [6/16] 0.0, 128
        %3027 = vxpose.xlu0.b32.cont [7/16] 0.0, 128
        %3028 = vxpose.xlu0.b32.cont [8/16] 0.0, 128
        %3029 = vxpose.xlu0.b32.cont [9/16] 0.0, 128
        %3030 = vxpose.xlu0.b32.cont [10/16] 0.0, 128
        %3031 = vxpose.xlu0.b32.cont [11/16] 0.0, 128
        %3032 = vxpose.xlu0.b32.cont [12/16] 0.0, 128
        %3033 = vxpose.xlu0.b32.cont [13/16] 0.0, 128
        %3034 = vxpose.xlu0.b32.cont [14/16] 0.0, 128
        %3035 = vxpose.xlu0.b32.cont [15/16] 0.0, 128
        %3036 = vxpose.xlu0.b32.end [16/16] 0.0, 128
        %v3037 = vpop.trf.xlu0
        %v3038 = vpop.trf.xlu0
        %v3039 = vpop.trf.xlu0
        %v3040 = vpop.trf.xlu0
        %v3041 = vpop.trf.xlu0
        %v3042 = vpop.trf.xlu0
        %v3043 = vpop.trf.xlu0
        %v3044 = vpop.trf.xlu0
        %v3045 = vpop.trf.xlu0
        %v3046 = vpop.trf.xlu0
        %v3047 = vpop.trf.xlu0
        %v3048 = vpop.trf.xlu0
        %v3049 = vpop.trf.xlu0
        %v3050 = vpop.trf.xlu0
        %v3051 = vpop.trf.xlu0
        %v3052 = vpop.trf.xlu0
        %3053 = vxpose.xlu0.b32.start [1/16] %v2831, 128
        %3054 = vxpose.xlu0.b32.cont [2/16] %v2834, 128
        %3055 = vxpose.xlu0.b32.cont [3/16] 0.0, 128
        %3056 = vxpose.xlu0.b32.cont [4/16] 0.0, 128
        %3057 = vxpose.xlu0.b32.cont [5/16] 0.0, 128
        %3058 = vxpose.xlu0.b32.cont [6/16] 0.0, 128
        %3059 = vxpose.xlu0.b32.cont [7/16] 0.0, 128
        %3060 = vxpose.xlu0.b32.cont [8/16] 0.0, 128
        %3061 = vxpose.xlu0.b32.cont [9/16] 0.0, 128
        %3062 = vxpose.xlu0.b32.cont [10/16] 0.0, 128
        %3063 = vxpose.xlu0.b32.cont [11/16] 0.0, 128
        %3064 = vxpose.xlu0.b32.cont [12/16] 0.0, 128
        %3065 = vxpose.xlu0.b32.cont [13/16] 0.0, 128
        %3066 = vxpose.xlu0.b32.cont [14/16] 0.0, 128
        %3067 = vxpose.xlu0.b32.cont [15/16] 0.0, 128
        %3068 = vxpose.xlu0.b32.end [16/16] 0.0, 128
        %v3069 = vpop.trf.xlu0
        %v3070 = vpop.trf.xlu0
        %v3071 = vpop.trf.xlu0
        %v3072 = vpop.trf.xlu0
        %v3073 = vpop.trf.xlu0
        %v3074 = vpop.trf.xlu0
        %v3075 = vpop.trf.xlu0
        %v3076 = vpop.trf.xlu0
        %v3077 = vpop.trf.xlu0
        %v3078 = vpop.trf.xlu0
        %v3079 = vpop.trf.xlu0
        %v3080 = vpop.trf.xlu0
        %v3081 = vpop.trf.xlu0
        %v3082 = vpop.trf.xlu0
        %v3083 = vpop.trf.xlu0
        %v3084 = vpop.trf.xlu0
        %3085 = vxpose.xlu0.b32.start [1/16] %v2839, 128
        %3086 = vxpose.xlu0.b32.cont [2/16] %v2842, 128
        %3087 = vxpose.xlu0.b32.cont [3/16] 0.0, 128
        %3088 = vxpose.xlu0.b32.cont [4/16] 0.0, 128
        %3089 = vxpose.xlu0.b32.cont [5/16] 0.0, 128
        %3090 = vxpose.xlu0.b32.cont [6/16] 0.0, 128
        %3091 = vxpose.xlu0.b32.cont [7/16] 0.0, 128
        %3092 = vxpose.xlu0.b32.cont [8/16] 0.0, 128
        %3093 = vxpose.xlu0.b32.cont [9/16] 0.0, 128
        %3094 = vxpose.xlu0.b32.cont [10/16] 0.0, 128
        %3095 = vxpose.xlu0.b32.cont [11/16] 0.0, 128
        %3096 = vxpose.xlu0.b32.cont [12/16] 0.0, 128
        %3097 = vxpose.xlu0.b32.cont [13/16] 0.0, 128
        %3098 = vxpose.xlu0.b32.cont [14/16] 0.0, 128
        %3099 = vxpose.xlu0.b32.cont [15/16] 0.0, 128
        %3100 = vxpose.xlu0.b32.end [16/16] 0.0, 128
        %v3101 = vpop.trf.xlu0
        %v3102 = vpop.trf.xlu0
        %v3103 = vpop.trf.xlu0
        %v3104 = vpop.trf.xlu0
        %v3105 = vpop.trf.xlu0
        %v3106 = vpop.trf.xlu0
        %v3107 = vpop.trf.xlu0
        %v3108 = vpop.trf.xlu0
        %v3109 = vpop.trf.xlu0
        %v3110 = vpop.trf.xlu0
        %v3111 = vpop.trf.xlu0
        %v3112 = vpop.trf.xlu0
        %v3113 = vpop.trf.xlu0
        %v3114 = vpop.trf.xlu0
        %v3115 = vpop.trf.xlu0
        %v3116 = vpop.trf.xlu0
        %3117 = vxpose.xlu0.b32.start [1/16] %v2847, 128
        %3118 = vxpose.xlu0.b32.cont [2/16] %v2850, 128
        %3119 = vxpose.xlu0.b32.cont [3/16] 0.0, 128
        %3120 = vxpose.xlu0.b32.cont [4/16] 0.0, 128
        %3121 = vxpose.xlu0.b32.cont [5/16] 0.0, 128
        %3122 = vxpose.xlu0.b32.cont [6/16] 0.0, 128
        %3123 = vxpose.xlu0.b32.cont [7/16] 0.0, 128
        %3124 = vxpose.xlu0.b32.cont [8/16] 0.0, 128
        %3125 = vxpose.xlu0.b32.cont [9/16] 0.0, 128
        %3126 = vxpose.xlu0.b32.cont [10/16] 0.0, 128
        %3127 = vxpose.xlu0.b32.cont [11/16] 0.0, 128
        %3128 = vxpose.xlu0.b32.cont [12/16] 0.0, 128
        %3129 = vxpose.xlu0.b32.cont [13/16] 0.0, 128
        %3130 = vxpose.xlu0.b32.cont [14/16] 0.0, 128
        %3131 = vxpose.xlu0.b32.cont [15/16] 0.0, 128
        %3132 = vxpose.xlu0.b32.end [16/16] 0.0, 128
        %v3133 = vpop.trf.xlu0
        %v3134 = vpop.trf.xlu0
        %v3135 = vpop.trf.xlu0
        %v3136 = vpop.trf.xlu0
        %v3137 = vpop.trf.xlu0
        %v3138 = vpop.trf.xlu0
        %v3139 = vpop.trf.xlu0
        %v3140 = vpop.trf.xlu0
        %v3141 = vpop.trf.xlu0
        %v3142 = vpop.trf.xlu0
        %v3143 = vpop.trf.xlu0
        %v3144 = vpop.trf.xlu0
        %v3145 = vpop.trf.xlu0
        %v3146 = vpop.trf.xlu0
        %v3147 = vpop.trf.xlu0
        %v3148 = vpop.trf.xlu0
        %3149 = vxpose.xlu0.b32.start [1/16] %v2855, 128
        %3150 = vxpose.xlu0.b32.cont [2/16] %v2858, 128
        %3151 = vxpose.xlu0.b32.cont [3/16] 0.0, 128
        %3152 = vxpose.xlu0.b32.cont [4/16] 0.0, 128
        %3153 = vxpose.xlu0.b32.cont [5/16] 0.0, 128
        %3154 = vxpose.xlu0.b32.cont [6/16] 0.0, 128
        %3155 = vxpose.xlu0.b32.cont [7/16] 0.0, 128
        %3156 = vxpose.xlu0.b32.cont [8/16] 0.0, 128
        %3157 = vxpose.xlu0.b32.cont [9/16] 0.0, 128
        %3158 = vxpose.xlu0.b32.cont [10/16] 0.0, 128
        %3159 = vxpose.xlu0.b32.cont [11/16] 0.0, 128
        %3160 = vxpose.xlu0.b32.cont [12/16] 0.0, 128
        %3161 = vxpose.xlu0.b32.cont [13/16] 0.0, 128
        %3162 = vxpose.xlu0.b32.cont [14/16] 0.0, 128
        %3163 = vxpose.xlu0.b32.cont [15/16] 0.0, 128
        %3164 = vxpose.xlu0.b32.end [16/16] 0.0, 128
        %v3165 = vpop.trf.xlu0
        %v3166 = vpop.trf.xlu0
        %v3167 = vpop.trf.xlu0
        %v3168 = vpop.trf.xlu0
        %v3169 = vpop.trf.xlu0
        %v3170 = vpop.trf.xlu0
        %v3171 = vpop.trf.xlu0
        %v3172 = vpop.trf.xlu0
        %v3173 = vpop.trf.xlu0
        %v3174 = vpop.trf.xlu0
        %v3175 = vpop.trf.xlu0
        %v3176 = vpop.trf.xlu0
        %v3177 = vpop.trf.xlu0
        %v3178 = vpop.trf.xlu0
        %v3179 = vpop.trf.xlu0
        %v3180 = vpop.trf.xlu0
        %3181 = vxpose.xlu0.b32.start [1/16] %v2863, 128
        %3182 = vxpose.xlu0.b32.cont [2/16] %v2866, 128
        %3183 = vxpose.xlu0.b32.cont [3/16] 0.0, 128
        %3184 = vxpose.xlu0.b32.cont [4/16] 0.0, 128
        %3185 = vxpose.xlu0.b32.cont [5/16] 0.0, 128
        %3186 = vxpose.xlu0.b32.cont [6/16] 0.0, 128
        %3187 = vxpose.xlu0.b32.cont [7/16] 0.0, 128
        %3188 = vxpose.xlu0.b32.cont [8/16] 0.0, 128
        %3189 = vxpose.xlu0.b32.cont [9/16] 0.0, 128
        %3190 = vxpose.xlu0.b32.cont [10/16] 0.0, 128
        %3191 = vxpose.xlu0.b32.cont [11/16] 0.0, 128
        %3192 = vxpose.xlu0.b32.cont [12/16] 0.0, 128
        %3193 = vxpose.xlu0.b32.cont [13/16] 0.0, 128
        %3194 = vxpose.xlu0.b32.cont [14/16] 0.0, 128
        %3195 = vxpose.xlu0.b32.cont [15/16] 0.0, 128
        %3196 = vxpose.xlu0.b32.end [16/16] 0.0, 128
        %v3197 = vpop.trf.xlu0
        %v3198 = vpop.trf.xlu0
        %v3199 = vpop.trf.xlu0
        %v3200 = vpop.trf.xlu0
        %v3201 = vpop.trf.xlu0
        %v3202 = vpop.trf.xlu0
        %v3203 = vpop.trf.xlu0
        %v3204 = vpop.trf.xlu0
        %v3205 = vpop.trf.xlu0
        %v3206 = vpop.trf.xlu0
        %v3207 = vpop.trf.xlu0
        %v3208 = vpop.trf.xlu0
        %v3209 = vpop.trf.xlu0
        %v3210 = vpop.trf.xlu0
        %v3211 = vpop.trf.xlu0
        %v3212 = vpop.trf.xlu0
        %3213 = vxpose.xlu0.b32.start [1/16] %v2871, 128
        %3214 = vxpose.xlu0.b32.cont [2/16] %v2874, 128
        %3215 = vxpose.xlu0.b32.cont [3/16] 0.0, 128
        %3216 = vxpose.xlu0.b32.cont [4/16] 0.0, 128
        %3217 = vxpose.xlu0.b32.cont [5/16] 0.0, 128
        %3218 = vxpose.xlu0.b32.cont [6/16] 0.0, 128
        %3219 = vxpose.xlu0.b32.cont [7/16] 0.0, 128
        %3220 = vxpose.xlu0.b32.cont [8/16] 0.0, 128
        %3221 = vxpose.xlu0.b32.cont [9/16] 0.0, 128
        %3222 = vxpose.xlu0.b32.cont [10/16] 0.0, 128
        %3223 = vxpose.xlu0.b32.cont [11/16] 0.0, 128
        %3224 = vxpose.xlu0.b32.cont [12/16] 0.0, 128
        %3225 = vxpose.xlu0.b32.cont [13/16] 0.0, 128
        %3226 = vxpose.xlu0.b32.cont [14/16] 0.0, 128
        %3227 = vxpose.xlu0.b32.cont [15/16] 0.0, 128
        %3228 = vxpose.xlu0.b32.end [16/16] 0.0, 128
        %v3229 = vpop.trf.xlu0
        %v3230 = vpop.trf.xlu0
        %v3231 = vpop.trf.xlu0
        %v3232 = vpop.trf.xlu0
        %v3233 = vpop.trf.xlu0
        %v3234 = vpop.trf.xlu0
        %v3235 = vpop.trf.xlu0
        %v3236 = vpop.trf.xlu0
        %v3237 = vpop.trf.xlu0
        %v3238 = vpop.trf.xlu0
        %v3239 = vpop.trf.xlu0
        %v3240 = vpop.trf.xlu0
        %v3241 = vpop.trf.xlu0
        %v3242 = vpop.trf.xlu0
        %v3243 = vpop.trf.xlu0
        %v3244 = vpop.trf.xlu0
        %3245 = vxpose.xlu0.b32.start [1/16] %v2879, 128
        %3246 = vxpose.xlu0.b32.cont [2/16] %v2882, 128
        %3247 = vxpose.xlu0.b32.cont [3/16] 0.0, 128
        %3248 = vxpose.xlu0.b32.cont [4/16] 0.0, 128
        %3249 = vxpose.xlu0.b32.cont [5/16] 0.0, 128
        %3250 = vxpose.xlu0.b32.cont [6/16] 0.0, 128
        %3251 = vxpose.xlu0.b32.cont [7/16] 0.0, 128
        %3252 = vxpose.xlu0.b32.cont [8/16] 0.0, 128
        %3253 = vxpose.xlu0.b32.cont [9/16] 0.0, 128
        %3254 = vxpose.xlu0.b32.cont [10/16] 0.0, 128
        %3255 = vxpose.xlu0.b32.cont [11/16] 0.0, 128
        %3256 = vxpose.xlu0.b32.cont [12/16] 0.0, 128
        %3257 = vxpose.xlu0.b32.cont [13/16] 0.0, 128
        %3258 = vxpose.xlu0.b32.cont [14/16] 0.0, 128
        %3259 = vxpose.xlu0.b32.cont [15/16] 0.0, 128
        %3260 = vxpose.xlu0.b32.end [16/16] 0.0, 128
        %v3261 = vpop.trf.xlu0
        %v3262 = vpop.trf.xlu0
        %v3263 = vpop.trf.xlu0
        %v3264 = vpop.trf.xlu0
        %v3265 = vpop.trf.xlu0
        %v3266 = vpop.trf.xlu0
        %v3267 = vpop.trf.xlu0
        %v3268 = vpop.trf.xlu0
        %v3269 = vpop.trf.xlu0
        %v3270 = vpop.trf.xlu0
        %v3271 = vpop.trf.xlu0
        %v3272 = vpop.trf.xlu0
        %v3273 = vpop.trf.xlu0
        %v3274 = vpop.trf.xlu0
        %v3275 = vpop.trf.xlu0
        %v3276 = vpop.trf.xlu0
        %3277 = vxpose.xlu0.b32.start [1/16] %v2887, 128
        %3278 = vxpose.xlu0.b32.cont [2/16] %v2890, 128
        %3279 = vxpose.xlu0.b32.cont [3/16] 0.0, 128
        %3280 = vxpose.xlu0.b32.cont [4/16] 0.0, 128
        %3281 = vxpose.xlu0.b32.cont [5/16] 0.0, 128
        %3282 = vxpose.xlu0.b32.cont [6/16] 0.0, 128
        %3283 = vxpose.xlu0.b32.cont [7/16] 0.0, 128
        %3284 = vxpose.xlu0.b32.cont [8/16] 0.0, 128
        %3285 = vxpose.xlu0.b32.cont [9/16] 0.0, 128
        %3286 = vxpose.xlu0.b32.cont [10/16] 0.0, 128
        %3287 = vxpose.xlu0.b32.cont [11/16] 0.0, 128
        %3288 = vxpose.xlu0.b32.cont [12/16] 0.0, 128
        %3289 = vxpose.xlu0.b32.cont [13/16] 0.0, 128
        %3290 = vxpose.xlu0.b32.cont [14/16] 0.0, 128
        %3291 = vxpose.xlu0.b32.cont [15/16] 0.0, 128
        %3292 = vxpose.xlu0.b32.end [16/16] 0.0, 128
        %v3293 = vpop.trf.xlu0
        %v3294 = vpop.trf.xlu0
        %v3295 = vpop.trf.xlu0
        %v3296 = vpop.trf.xlu0
        %v3297 = vpop.trf.xlu0
        %v3298 = vpop.trf.xlu0
        %v3299 = vpop.trf.xlu0
        %v3300 = vpop.trf.xlu0
        %v3301 = vpop.trf.xlu0
        %v3302 = vpop.trf.xlu0
        %v3303 = vpop.trf.xlu0
        %v3304 = vpop.trf.xlu0
        %v3305 = vpop.trf.xlu0
        %v3306 = vpop.trf.xlu0
        %v3307 = vpop.trf.xlu0
        %v3308 = vpop.trf.xlu0
        %3309 = vxpose.xlu0.b32.start [1/16] %v2895, 128
        %3310 = vxpose.xlu0.b32.cont [2/16] %v2898, 128
        %3311 = vxpose.xlu0.b32.cont [3/16] 0.0, 128
        %3312 = vxpose.xlu0.b32.cont [4/16] 0.0, 128
        %3313 = vxpose.xlu0.b32.cont [5/16] 0.0, 128
        %3314 = vxpose.xlu0.b32.cont [6/16] 0.0, 128
        %3315 = vxpose.xlu0.b32.cont [7/16] 0.0, 128
        %3316 = vxpose.xlu0.b32.cont [8/16] 0.0, 128
        %3317 = vxpose.xlu0.b32.cont [9/16] 0.0, 128
        %3318 = vxpose.xlu0.b32.cont [10/16] 0.0, 128
        %3319 = vxpose.xlu0.b32.cont [11/16] 0.0, 128
        %3320 = vxpose.xlu0.b32.cont [12/16] 0.0, 128
        %3321 = vxpose.xlu0.b32.cont [13/16] 0.0, 128
        %3322 = vxpose.xlu0.b32.cont [14/16] 0.0, 128
        %3323 = vxpose.xlu0.b32.cont [15/16] 0.0, 128
        %3324 = vxpose.xlu0.b32.end [16/16] 0.0, 128
        %v3325 = vpop.trf.xlu0
        %v3326 = vpop.trf.xlu0
        %v3327 = vpop.trf.xlu0
        %v3328 = vpop.trf.xlu0
        %v3329 = vpop.trf.xlu0
        %v3330 = vpop.trf.xlu0
        %v3331 = vpop.trf.xlu0
        %v3332 = vpop.trf.xlu0
        %v3333 = vpop.trf.xlu0
        %v3334 = vpop.trf.xlu0
        %v3335 = vpop.trf.xlu0
        %v3336 = vpop.trf.xlu0
        %v3337 = vpop.trf.xlu0
        %v3338 = vpop.trf.xlu0
        %v3339 = vpop.trf.xlu0
        %v3340 = vpop.trf.xlu0
        %3341 = vxpose.xlu0.b32.start [1/16] %v2903, 128
        %3342 = vxpose.xlu0.b32.cont [2/16] %v2906, 128
        %3343 = vxpose.xlu0.b32.cont [3/16] 0.0, 128
        %3344 = vxpose.xlu0.b32.cont [4/16] 0.0, 128
        %3345 = vxpose.xlu0.b32.cont [5/16] 0.0, 128
        %3346 = vxpose.xlu0.b32.cont [6/16] 0.0, 128
        %3347 = vxpose.xlu0.b32.cont [7/16] 0.0, 128
        %3348 = vxpose.xlu0.b32.cont [8/16] 0.0, 128
        %3349 = vxpose.xlu0.b32.cont [9/16] 0.0, 128
        %3350 = vxpose.xlu0.b32.cont [10/16] 0.0, 128
        %3351 = vxpose.xlu0.b32.cont [11/16] 0.0, 128
        %3352 = vxpose.xlu0.b32.cont [12/16] 0.0, 128
        %3353 = vxpose.xlu0.b32.cont [13/16] 0.0, 128
        %3354 = vxpose.xlu0.b32.cont [14/16] 0.0, 128
        %3355 = vxpose.xlu0.b32.cont [15/16] 0.0, 128
        %3356 = vxpose.xlu0.b32.end [16/16] 0.0, 128
        %v3357 = vpop.trf.xlu0
        %v3358 = vpop.trf.xlu0
        %v3359 = vpop.trf.xlu0
        %v3360 = vpop.trf.xlu0
        %v3361 = vpop.trf.xlu0
        %v3362 = vpop.trf.xlu0
        %v3363 = vpop.trf.xlu0
        %v3364 = vpop.trf.xlu0
        %v3365 = vpop.trf.xlu0
        %v3366 = vpop.trf.xlu0
        %v3367 = vpop.trf.xlu0
        %v3368 = vpop.trf.xlu0
        %v3369 = vpop.trf.xlu0
        %v3370 = vpop.trf.xlu0
        %v3371 = vpop.trf.xlu0
        %v3372 = vpop.trf.xlu0
        %3373 = vxpose.xlu0.b32.start [1/16] %v2911, 128
        %3374 = vxpose.xlu0.b32.cont [2/16] %v2914, 128
        %3375 = vxpose.xlu0.b32.cont [3/16] 0.0, 128
        %3376 = vxpose.xlu0.b32.cont [4/16] 0.0, 128
        %3377 = vxpose.xlu0.b32.cont [5/16] 0.0, 128
        %3378 = vxpose.xlu0.b32.cont [6/16] 0.0, 128
        %3379 = vxpose.xlu0.b32.cont [7/16] 0.0, 128
        %3380 = vxpose.xlu0.b32.cont [8/16] 0.0, 128
        %3381 = vxpose.xlu0.b32.cont [9/16] 0.0, 128
        %3382 = vxpose.xlu0.b32.cont [10/16] 0.0, 128
        %3383 = vxpose.xlu0.b32.cont [11/16] 0.0, 128
        %3384 = vxpose.xlu0.b32.cont [12/16] 0.0, 128
        %3385 = vxpose.xlu0.b32.cont [13/16] 0.0, 128
        %3386 = vxpose.xlu0.b32.cont [14/16] 0.0, 128
        %3387 = vxpose.xlu0.b32.cont [15/16] 0.0, 128
        %3388 = vxpose.xlu0.b32.end [16/16] 0.0, 128
        %v3389 = vpop.trf.xlu0
        %v3390 = vpop.trf.xlu0
        %v3391 = vpop.trf.xlu0
        %v3392 = vpop.trf.xlu0
        %v3393 = vpop.trf.xlu0
        %v3394 = vpop.trf.xlu0
        %v3395 = vpop.trf.xlu0
        %v3396 = vpop.trf.xlu0
        %v3397 = vpop.trf.xlu0
        %v3398 = vpop.trf.xlu0
        %v3399 = vpop.trf.xlu0
        %v3400 = vpop.trf.xlu0
        %v3401 = vpop.trf.xlu0
        %v3402 = vpop.trf.xlu0
        %v3403 = vpop.trf.xlu0
        %v3404 = vpop.trf.xlu0
        %3405 = vxpose.xlu0.b32.start [1/16] %v2919, 128
        %3406 = vxpose.xlu0.b32.cont [2/16] %v2922, 128
        %3407 = vxpose.xlu0.b32.cont [3/16] 0.0, 128
        %3408 = vxpose.xlu0.b32.cont [4/16] 0.0, 128
        %3409 = vxpose.xlu0.b32.cont [5/16] 0.0, 128
        %3410 = vxpose.xlu0.b32.cont [6/16] 0.0, 128
        %3411 = vxpose.xlu0.b32.cont [7/16] 0.0, 128
        %3412 = vxpose.xlu0.b32.cont [8/16] 0.0, 128
        %3413 = vxpose.xlu0.b32.cont [9/16] 0.0, 128
        %3414 = vxpose.xlu0.b32.cont [10/16] 0.0, 128
        %3415 = vxpose.xlu0.b32.cont [11/16] 0.0, 128
        %3416 = vxpose.xlu0.b32.cont [12/16] 0.0, 128
        %3417 = vxpose.xlu0.b32.cont [13/16] 0.0, 128
        %3418 = vxpose.xlu0.b32.cont [14/16] 0.0, 128
        %3419 = vxpose.xlu0.b32.cont [15/16] 0.0, 128
        %3420 = vxpose.xlu0.b32.end [16/16] 0.0, 128
        %v3421 = vpop.trf.xlu0
        %v3422 = vpop.trf.xlu0
        %v3423 = vpop.trf.xlu0
        %v3424 = vpop.trf.xlu0
        %v3425 = vpop.trf.xlu0
        %v3426 = vpop.trf.xlu0
        %v3427 = vpop.trf.xlu0
        %v3428 = vpop.trf.xlu0
        %v3429 = vpop.trf.xlu0
        %v3430 = vpop.trf.xlu0
        %v3431 = vpop.trf.xlu0
        %v3432 = vpop.trf.xlu0
        %v3433 = vpop.trf.xlu0
        %v3434 = vpop.trf.xlu0
        %v3435 = vpop.trf.xlu0
        %v3436 = vpop.trf.xlu0
        %v3437 = vpack.c.bf16 %v2973, %v2941
        %v3438 = vpack.c.bf16 %v3037, %v3005
        %v3439 = vpack.c.bf16 %v3101, %v3069
        %v3440 = vpack.c.bf16 %v3165, %v3133
        %v3441 = vpack.c.bf16 %v3229, %v3197
        %v3442 = vpack.c.bf16 %v3293, %v3261
        %v3443 = vpack.c.bf16 %v3357, %v3325
        %v3444 = vpack.c.bf16 %v3421, %v3389
        %v3445 = vld [vmem:[%s9] sm:$0xf]
        %v3446 = vld [vmem:[%s9 + $0x4] sm:$0xf]
        %v3449 = vunpack.c.l.b16 %v3445
        %v3450 = vunpack.c.l.b16 %v3446
        %v3451 = vpack.c.b16 %v3450, %v3449
        %vm3453 = vcmask 130048
        %v3455 = vsel %vm3453, %v3437, 0
        %v3458 = vsel %vm3453, %v3438, 0
        %v3461 = vsel %vm3453, %v3439, 0
        %v3464 = vsel %vm3453, %v3440, 0
        %v3467 = vsel %vm3453, %v3441, 0
        %v3470 = vsel %vm3453, %v3442, 0
        %v3473 = vsel %vm3453, %v3443, 0
        %v3476 = vsel %vm3453, %v3444, 0
        %3478 = vmatprep.subr.bf16.mxu0 0
        %3479 = vmatpush1.bf16.msra.mxu0 %v3451
        %3480 = vmatprep.subr.bf16.mxu0 0
        %3481 = vmatpush1.bf16.msra.mxu0 0
        %3482 = vmatprep.subr.bf16.mxu0 0
        %3483 = vmatpush1.bf16.msra.mxu0 0
        %3484 = vmatprep.subr.bf16.mxu0 0
        %3485 = vmatpush1.bf16.msra.mxu0 0
        %3486 = vmatprep.subr.bf16.mxu0 0
        %3487 = vmatpush1.bf16.msra.mxu0 0
        %3488 = vmatprep.subr.bf16.mxu0 0
        %3489 = vmatpush1.bf16.msra.mxu0 0
        %3490 = vmatprep.subr.bf16.mxu0 0
        %3491 = vmatpush1.bf16.msra.mxu0 0
        %3492 = vmatprep.subr.bf16.mxu0 0
        %3493 = vmatpush1.bf16.msra.mxu0 0
        %3494 = vmatprep.subr.bf16.mxu0 0
        %3495 = vmatpush1.bf16.msra.mxu0 0
        %3496 = vmatprep.subr.bf16.mxu0 0
        %3497 = vmatpush1.bf16.msra.mxu0 0
        %3498 = vmatprep.subr.bf16.mxu0 0
        %3499 = vmatpush1.bf16.msra.mxu0 0
        %3500 = vmatprep.subr.bf16.mxu0 0
        %3501 = vmatpush1.bf16.msra.mxu0 0
        %3502 = vmatprep.subr.bf16.mxu0 0
        %3503 = vmatpush1.bf16.msra.mxu0 0
        %3504 = vmatprep.subr.bf16.mxu0 0
        %3505 = vmatpush1.bf16.msra.mxu0 0
        %3506 = vmatprep.subr.bf16.mxu0 0
        %3507 = vmatpush1.bf16.msra.mxu0 0
        %3508 = vmatprep.subr.bf16.mxu0 0
        %3509 = vmatpush1.bf16.msra.mxu0 0
        %3510 = vmatprep.mubr.bf16.mxu0 0
        %3511 = vmatmul.mubr.bf16.gmra.mrb[0].mxu0 %v3455
        %v3512 = vpop.f32.mrb[0].mxu0
        %v3513 = vadd.f32 0.0, %v3512
        %v3514 = vpop.f32.mrb[0].mxu0
        %v3515 = vpop.f32.mrb[0].mxu0
        %v3516 = vadd.f32 0.0, %v3515
        %v3517 = vpop.f32.mrb[0].mxu0
        %3518 = vmatprep.mubr.bf16.mxu0 0
        %3519 = vmatmul.mubr.bf16.gmra.mrb[0].mxu0 %v3458
        %v3520 = vpop.f32.mrb[0].mxu0
        %v3521 = vadd.f32 0.0, %v3520
        %v3522 = vpop.f32.mrb[0].mxu0
        %v3523 = vpop.f32.mrb[0].mxu0
        %v3524 = vadd.f32 0.0, %v3523
        %v3525 = vpop.f32.mrb[0].mxu0
        %3526 = vmatprep.mubr.bf16.mxu0 0
        %3527 = vmatmul.mubr.bf16.gmra.mrb[0].mxu0 %v3461
        %v3528 = vpop.f32.mrb[0].mxu0
        %v3529 = vadd.f32 0.0, %v3528
        %v3530 = vpop.f32.mrb[0].mxu0
        %v3531 = vpop.f32.mrb[0].mxu0
        %v3532 = vadd.f32 0.0, %v3531
        %v3533 = vpop.f32.mrb[0].mxu0
        %3534 = vmatprep.mubr.bf16.mxu0 0
        %3535 = vmatmul.mubr.bf16.gmra.mrb[0].mxu0 %v3464
        %v3536 = vpop.f32.mrb[0].mxu0
        %v3537 = vadd.f32 0.0, %v3536
        %v3538 = vpop.f32.mrb[0].mxu0
        %v3539 = vpop.f32.mrb[0].mxu0
        %v3540 = vadd.f32 0.0, %v3539
        %v3541 = vpop.f32.mrb[0].mxu0
        %3542 = vmatprep.mubr.bf16.mxu0 0
        %3543 = vmatmul.mubr.bf16.gmra.mrb[0].mxu0 %v3467
        %v3544 = vpop.f32.mrb[0].mxu0
        %v3545 = vadd.f32 0.0, %v3544
        %v3546 = vpop.f32.mrb[0].mxu0
        %v3547 = vpop.f32.mrb[0].mxu0
        %v3548 = vadd.f32 0.0, %v3547
        %v3549 = vpop.f32.mrb[0].mxu0
        %3550 = vmatprep.mubr.bf16.mxu0 0
        %3551 = vmatmul.mubr.bf16.gmra.mrb[0].mxu0 %v3470
        %v3552 = vpop.f32.mrb[0].mxu0
        %v3553 = vadd.f32 0.0, %v3552
        %v3554 = vpop.f32.mrb[0].mxu0
        %v3555 = vpop.f32.mrb[0].mxu0
        %v3556 = vadd.f32 0.0, %v3555
        %v3557 = vpop.f32.mrb[0].mxu0
        %3558 = vmatprep.mubr.bf16.mxu0 0
        %3559 = vmatmul.mubr.bf16.gmra.mrb[0].mxu0 %v3473
        %v3560 = vpop.f32.mrb[0].mxu0
        %v3561 = vadd.f32 0.0, %v3560
        %v3562 = vpop.f32.mrb[0].mxu0
        %v3563 = vpop.f32.mrb[0].mxu0
        %v3564 = vadd.f32 0.0, %v3563
        %v3565 = vpop.f32.mrb[0].mxu0
        %3566 = vmatprep.mubr.bf16.mxu0 0
        %3567 = vmatmul.mubr.bf16.gmra.mrb[0].mxu0 %v3476
        %v3568 = vpop.f32.mrb[0].mxu0
        %v3569 = vadd.f32 0.0, %v3568
        %v3570 = vpop.f32.mrb[0].mxu0
        %v3571 = vpop.f32.mrb[0].mxu0
        %v3572 = vadd.f32 0.0, %v3571
        %v3573 = vpop.f32.mrb[0].mxu0
        %3574 = vdwg.mxu0
        %v3575 = vld [vmem:[#allocation2] sm:$0xf]
        %v3576 = vld [vmem:[#allocation2 + $0x4] sm:$0xf]
        %v3577 = vld [vmem:[#allocation2 + $0x8] sm:$0xf]
        %v3578 = vld [vmem:[#allocation2 + $0xc] sm:$0xf]
        %v3579 = vld [vmem:[#allocation2 + $0x10] sm:$0xf]
        %v3580 = vld [vmem:[#allocation2 + $0x14] sm:$0xf]
        %v3581 = vld [vmem:[#allocation2 + $0x18] sm:$0xf]
        %v3582 = vld [vmem:[#allocation2 + $0x1c] sm:$0xf]
        %v3583 = vld [vmem:[#allocation2 + $0x20] sm:$0xf]
        %v3584 = vld [vmem:[#allocation2 + $0x24] sm:$0xf]
        %v3585 = vld [vmem:[#allocation2 + $0x28] sm:$0xf]
        %v3586 = vld [vmem:[#allocation2 + $0x2c] sm:$0xf]
        %v3587 = vld [vmem:[#allocation2 + $0x30] sm:$0xf]
        %v3588 = vld [vmem:[#allocation2 + $0x34] sm:$0xf]
        %v3589 = vld [vmem:[#allocation2 + $0x38] sm:$0xf]
        %v3590 = vld [vmem:[#allocation2 + $0x3c] sm:$0xf]
        %v3591 = vld [vmem:[#allocation2 + $0x40] sm:$0xf]
        %v3592 = vld [vmem:[#allocation2 + $0x44] sm:$0xf]
        %v3593 = vld [vmem:[#allocation2 + $0x48] sm:$0xf]
        %v3594 = vld [vmem:[#allocation2 + $0x4c] sm:$0xf]
        %v3595 = vld [vmem:[#allocation2 + $0x50] sm:$0xf]
        %v3596 = vld [vmem:[#allocation2 + $0x54] sm:$0xf]
        %v3597 = vld [vmem:[#allocation2 + $0x58] sm:$0xf]
        %v3598 = vld [vmem:[#allocation2 + $0x5c] sm:$0xf]
        %v3599 = vld [vmem:[#allocation2 + $0x60] sm:$0xf]
        %v3600 = vld [vmem:[#allocation2 + $0x64] sm:$0xf]
        %v3601 = vld [vmem:[#allocation2 + $0x68] sm:$0xf]
        %v3602 = vld [vmem:[#allocation2 + $0x6c] sm:$0xf]
        %v3603 = vld [vmem:[#allocation2 + $0x70] sm:$0xf]
        %v3604 = vld [vmem:[#allocation2 + $0x74] sm:$0xf]
        %v3605 = vld [vmem:[#allocation2 + $0x78] sm:$0xf]
        %v3606 = vld [vmem:[#allocation2 + $0x7c] sm:$0xf]
        %v3607 = vpack.c.bf16 %v3516, %v3513
        %v3608 = vpack.c.bf16 %v3524, %v3521
        %v3609 = vpack.c.bf16 %v3532, %v3529
        %v3610 = vpack.c.bf16 %v3540, %v3537
        %v3611 = vpack.c.bf16 %v3548, %v3545
        %v3612 = vpack.c.bf16 %v3556, %v3553
        %v3613 = vpack.c.bf16 %v3564, %v3561
        %v3614 = vpack.c.bf16 %v3572, %v3569
        %v3647 = vunpack.c.l.b16 %v3575
        %v3648 = vunpack.c.l.b16 %v3576
        %v3649 = vunpack.c.l.b16 %v3577
        %v3650 = vunpack.c.l.b16 %v3578
        %v3651 = vunpack.c.l.b16 %v3579
        %v3652 = vunpack.c.l.b16 %v3580
        %v3653 = vunpack.c.l.b16 %v3581
        %v3654 = vunpack.c.l.b16 %v3582
        %v3655 = vunpack.c.l.b16 %v3583
        %v3656 = vunpack.c.l.b16 %v3584
        %v3657 = vunpack.c.l.b16 %v3585
        %v3658 = vunpack.c.l.b16 %v3586
        %v3659 = vunpack.c.l.b16 %v3587
        %v3660 = vunpack.c.l.b16 %v3588
        %v3661 = vunpack.c.l.b16 %v3589
        %v3662 = vunpack.c.l.b16 %v3590
        %v3663 = vunpack.c.l.b16 %v3591
        %v3664 = vunpack.c.l.b16 %v3592
        %v3665 = vunpack.c.l.b16 %v3593
        %v3666 = vunpack.c.l.b16 %v3594
        %v3667 = vunpack.c.l.b16 %v3595
        %v3668 = vunpack.c.l.b16 %v3596
        %v3669 = vunpack.c.l.b16 %v3597
        %v3670 = vunpack.c.l.b16 %v3598
        %v3671 = vunpack.c.l.b16 %v3599
        %v3672 = vunpack.c.l.b16 %v3600
        %v3673 = vunpack.c.l.b16 %v3601
        %v3674 = vunpack.c.l.b16 %v3602
        %v3675 = vunpack.c.l.b16 %v3603
        %v3676 = vunpack.c.l.b16 %v3604
        %v3677 = vunpack.c.l.b16 %v3605
        %v3678 = vunpack.c.l.b16 %v3606
        %v3679 = vpack.c.b16 %v3648, %v3647
        %v3680 = vpack.c.b16 %v3650, %v3649
        %v3681 = vpack.c.b16 %v3652, %v3651
        %v3682 = vpack.c.b16 %v3654, %v3653
        %v3683 = vpack.c.b16 %v3656, %v3655
        %v3684 = vpack.c.b16 %v3658, %v3657
        %v3685 = vpack.c.b16 %v3660, %v3659
        %v3686 = vpack.c.b16 %v3662, %v3661
        %v3687 = vpack.c.b16 %v3664, %v3663
        %v3688 = vpack.c.b16 %v3666, %v3665
        %v3689 = vpack.c.b16 %v3668, %v3667
        %v3690 = vpack.c.b16 %v3670, %v3669
        %v3691 = vpack.c.b16 %v3672, %v3671
        %v3692 = vpack.c.b16 %v3674, %v3673
        %v3693 = vpack.c.b16 %v3676, %v3675
        %v3694 = vpack.c.b16 %v3678, %v3677
        %3711 = vmatprep.subr.bf16.mxu0 0
        %3712 = vmatpush1.bf16.msra.mxu0 %v3607
        %3713 = vmatprep.subr.bf16.mxu0 0
        %3714 = vmatpush1.bf16.msra.mxu0 %v3608
        %3715 = vmatprep.subr.bf16.mxu0 0
        %3716 = vmatpush1.bf16.msra.mxu0 %v3609
        %3717 = vmatprep.subr.bf16.mxu0 0
        %3718 = vmatpush1.bf16.msra.mxu0 %v3610
        %3719 = vmatprep.subr.bf16.mxu0 0
        %3720 = vmatpush1.bf16.msra.mxu0 %v3611
        %3721 = vmatprep.subr.bf16.mxu0 0
        %3722 = vmatpush1.bf16.msra.mxu0 %v3612
        %3723 = vmatprep.subr.bf16.mxu0 0
        %3724 = vmatpush1.bf16.msra.mxu0 %v3613
        %3725 = vmatprep.subr.bf16.mxu0 0
        %3726 = vmatpush1.bf16.msra.mxu0 %v3614
        %3727 = vmatprep.subr.bf16.mxu0 0
        %3728 = vmatpush1.bf16.msra.mxu0 0
        %3729 = vmatprep.subr.bf16.mxu0 0
        %3730 = vmatpush1.bf16.msra.mxu0 0
        %3731 = vmatprep.subr.bf16.mxu0 0
        %3732 = vmatpush1.bf16.msra.mxu0 0
        %3733 = vmatprep.subr.bf16.mxu0 0
        %3734 = vmatpush1.bf16.msra.mxu0 0
        %3735 = vmatprep.subr.bf16.mxu0 0
        %3736 = vmatpush1.bf16.msra.mxu0 0
        %3737 = vmatprep.subr.bf16.mxu0 0
        %3738 = vmatpush1.bf16.msra.mxu0 0
        %3739 = vmatprep.subr.bf16.mxu0 0
        %3740 = vmatpush1.bf16.msra.mxu0 0
        %3741 = vmatprep.subr.bf16.mxu0 0
        %3742 = vmatpush1.bf16.msra.mxu0 0
        %3743 = vmatprep.mubr.bf16.mxu0 0
        %3744 = vmatmul.mubr.bf16.gmra.mrb[0].mxu0 %v3679
        %v3745 = vpop.f32.mrb[0].mxu0
        %v3746 = vadd.f32 0.0, %v3745
        %v3747 = vpop.f32.mrb[0].mxu0
        %v3748 = vpop.f32.mrb[0].mxu0
        %v3749 = vadd.f32 0.0, %v3748
        %v3750 = vpop.f32.mrb[0].mxu0
        %3751 = vmatprep.mubr.bf16.mxu0 0
        %3752 = vmatmul.mubr.bf16.gmra.mrb[0].mxu0 %v3680
        %v3753 = vpop.f32.mrb[0].mxu0
        %v3754 = vadd.f32 0.0, %v3753
        %v3755 = vpop.f32.mrb[0].mxu0
        %v3756 = vpop.f32.mrb[0].mxu0
        %v3757 = vadd.f32 0.0, %v3756
        %v3758 = vpop.f32.mrb[0].mxu0
        %3759 = vmatprep.mubr.bf16.mxu0 0
        %3760 = vmatmul.mubr.bf16.gmra.mrb[0].mxu0 %v3681
        %v3761 = vpop.f32.mrb[0].mxu0
        %v3762 = vadd.f32 0.0, %v3761
        %v3763 = vpop.f32.mrb[0].mxu0
        %v3764 = vpop.f32.mrb[0].mxu0
        %v3765 = vadd.f32 0.0, %v3764
        %v3766 = vpop.f32.mrb[0].mxu0
        %3767 = vmatprep.mubr.bf16.mxu0 0
        %3768 = vmatmul.mubr.bf16.gmra.mrb[0].mxu0 %v3682
        %v3769 = vpop.f32.mrb[0].mxu0
        %v3770 = vadd.f32 0.0, %v3769
        %v3771 = vpop.f32.mrb[0].mxu0
        %v3772 = vpop.f32.mrb[0].mxu0
        %v3773 = vadd.f32 0.0, %v3772
        %v3774 = vpop.f32.mrb[0].mxu0
        %3775 = vmatprep.mubr.bf16.mxu0 0
        %3776 = vmatmul.mubr.bf16.gmra.mrb[0].mxu0 %v3683
        %v3777 = vpop.f32.mrb[0].mxu0
        %v3778 = vadd.f32 0.0, %v3777
        %v3779 = vpop.f32.mrb[0].mxu0
        %v3780 = vpop.f32.mrb[0].mxu0
        %v3781 = vadd.f32 0.0, %v3780
        %v3782 = vpop.f32.mrb[0].mxu0
        %3783 = vmatprep.mubr.bf16.mxu0 0
        %3784 = vmatmul.mubr.bf16.gmra.mrb[0].mxu0 %v3684
        %v3785 = vpop.f32.mrb[0].mxu0
        %v3786 = vadd.f32 0.0, %v3785
        %v3787 = vpop.f32.mrb[0].mxu0
        %v3788 = vpop.f32.mrb[0].mxu0
        %v3789 = vadd.f32 0.0, %v3788
        %v3790 = vpop.f32.mrb[0].mxu0
        %3791 = vmatprep.mubr.bf16.mxu0 0
        %3792 = vmatmul.mubr.bf16.gmra.mrb[0].mxu0 %v3685
        %v3793 = vpop.f32.mrb[0].mxu0
        %v3794 = vadd.f32 0.0, %v3793
        %v3795 = vpop.f32.mrb[0].mxu0
        %v3796 = vpop.f32.mrb[0].mxu0
        %v3797 = vadd.f32 0.0, %v3796
        %v3798 = vpop.f32.mrb[0].mxu0
        %3799 = vmatprep.mubr.bf16.mxu0 0
        %3800 = vmatmul.mubr.bf16.gmra.mrb[0].mxu0 %v3686
        %v3801 = vpop.f32.mrb[0].mxu0
        %v3802 = vadd.f32 0.0, %v3801
        %v3803 = vpop.f32.mrb[0].mxu0
        %v3804 = vpop.f32.mrb[0].mxu0
        %v3805 = vadd.f32 0.0, %v3804
        %v3806 = vpop.f32.mrb[0].mxu0
        %3807 = vmatprep.mubr.bf16.mxu0 0
        %3808 = vmatmul.mubr.bf16.gmra.mrb[0].mxu0 %v3687
        %v3809 = vpop.f32.mrb[0].mxu0
        %v3810 = vadd.f32 0.0, %v3809
        %v3811 = vpop.f32.mrb[0].mxu0
        %v3812 = vpop.f32.mrb[0].mxu0
        %v3813 = vadd.f32 0.0, %v3812
        %v3814 = vpop.f32.mrb[0].mxu0
        %3815 = vmatprep.mubr.bf16.mxu0 0
        %3816 = vmatmul.mubr.bf16.gmra.mrb[0].mxu0 %v3688
        %v3817 = vpop.f32.mrb[0].mxu0
        %v3818 = vadd.f32 0.0, %v3817
        %v3819 = vpop.f32.mrb[0].mxu0
        %v3820 = vpop.f32.mrb[0].mxu0
        %v3821 = vadd.f32 0.0, %v3820
        %v3822 = vpop.f32.mrb[0].mxu0
        %3823 = vmatprep.mubr.bf16.mxu0 0
        %3824 = vmatmul.mubr.bf16.gmra.mrb[0].mxu0 %v3689
        %v3825 = vpop.f32.mrb[0].mxu0
        %v3826 = vadd.f32 0.0, %v3825
        %v3827 = vpop.f32.mrb[0].mxu0
        %v3828 = vpop.f32.mrb[0].mxu0
        %v3829 = vadd.f32 0.0, %v3828
        %v3830 = vpop.f32.mrb[0].mxu0
        %3831 = vmatprep.mubr.bf16.mxu0 0
        %3832 = vmatmul.mubr.bf16.gmra.mrb[0].mxu0 %v3690
        %v3833 = vpop.f32.mrb[0].mxu0
        %v3834 = vadd.f32 0.0, %v3833
        %v3835 = vpop.f32.mrb[0].mxu0
        %v3836 = vpop.f32.mrb[0].mxu0
        %v3837 = vadd.f32 0.0, %v3836
        %v3838 = vpop.f32.mrb[0].mxu0
        %3839 = vmatprep.mubr.bf16.mxu0 0
        %3840 = vmatmul.mubr.bf16.gmra.mrb[0].mxu0 %v3691
        %v3841 = vpop.f32.mrb[0].mxu0
        %v3842 = vadd.f32 0.0, %v3841
        %v3843 = vpop.f32.mrb[0].mxu0
        %v3844 = vpop.f32.mrb[0].mxu0
        %v3845 = vadd.f32 0.0, %v3844
        %v3846 = vpop.f32.mrb[0].mxu0
        %3847 = vmatprep.mubr.bf16.mxu0 0
        %3848 = vmatmul.mubr.bf16.gmra.mrb[0].mxu0 %v3692
        %v3849 = vpop.f32.mrb[0].mxu0
        %v3850 = vadd.f32 0.0, %v3849
        %v3851 = vpop.f32.mrb[0].mxu0
        %v3852 = vpop.f32.mrb[0].mxu0
        %v3853 = vadd.f32 0.0, %v3852
        %v3854 = vpop.f32.mrb[0].mxu0
        %3855 = vmatprep.mubr.bf16.mxu0 0
        %3856 = vmatmul.mubr.bf16.gmra.mrb[0].mxu0 %v3693
        %v3857 = vpop.f32.mrb[0].mxu0
        %v3858 = vadd.f32 0.0, %v3857
        %v3859 = vpop.f32.mrb[0].mxu0
        %v3860 = vpop.f32.mrb[0].mxu0
        %v3861 = vadd.f32 0.0, %v3860
        %v3862 = vpop.f32.mrb[0].mxu0
        %3863 = vmatprep.mubr.bf16.mxu0 0
        %3864 = vmatmul.mubr.bf16.gmra.mrb[0].mxu0 %v3694
        %v3865 = vpop.f32.mrb[0].mxu0
        %v3866 = vadd.f32 0.0, %v3865
        %v3867 = vpop.f32.mrb[0].mxu0
        %v3868 = vpop.f32.mrb[0].mxu0
        %v3869 = vadd.f32 0.0, %v3868
        %v3870 = vpop.f32.mrb[0].mxu0
        %3871 = vdwg.mxu0
        %vm3872 = vcmask 261120
        %3873 = vst.msk [vmem:[%s394] sm:$0xff] %vm3872, %v3746
        %3874 = vst.msk [vmem:[%s394 + $0x8] sm:$0xff] %vm3872, %v3749
        %3875 = vst.msk [vmem:[%s394 + $0x10] sm:$0xff] %vm3872, %v3754
        %3876 = vst.msk [vmem:[%s394 + $0x18] sm:$0xff] %vm3872, %v3757
        %3877 = vst.msk [vmem:[%s394 + $0x20] sm:$0xff] %vm3872, %v3762
        %3878 = vst.msk [vmem:[%s394 + $0x28] sm:$0xff] %vm3872, %v3765
        %3879 = vst.msk [vmem:[%s394 + $0x30] sm:$0xff] %vm3872, %v3770
        %3880 = vst.msk [vmem:[%s394 + $0x38] sm:$0xff] %vm3872, %v3773
        %3881 = vst.msk [vmem:[%s394 + $0x40] sm:$0xff] %vm3872, %v3778
        %3882 = vst.msk [vmem:[%s394 + $0x48] sm:$0xff] %vm3872, %v3781
        %3883 = vst.msk [vmem:[%s394 + $0x50] sm:$0xff] %vm3872, %v3786
        %3884 = vst.msk [vmem:[%s394 + $0x58] sm:$0xff] %vm3872, %v3789
        %3885 = vst.msk [vmem:[%s394 + $0x60] sm:$0xff] %vm3872, %v3794
        %3886 = vst.msk [vmem:[%s394 + $0x68] sm:$0xff] %vm3872, %v3797
        %3887 = vst.msk [vmem:[%s394 + $0x70] sm:$0xff] %vm3872, %v3802
        %3888 = vst.msk [vmem:[%s394 + $0x78] sm:$0xff] %vm3872, %v3805
        %3889 = vst.msk [vmem:[%s394 + $0x80] sm:$0xff] %vm3872, %v3810
        %3890 = vst.msk [vmem:[%s394 + $0x88] sm:$0xff] %vm3872, %v3813
        %3891 = vst.msk [vmem:[%s394 + $0x90] sm:$0xff] %vm3872, %v3818
        %3892 = vst.msk [vmem:[%s394 + $0x98] sm:$0xff] %vm3872, %v3821
        %3893 = vst.msk [vmem:[%s394 + $0xa0] sm:$0xff] %vm3872, %v3826
        %3894 = vst.msk [vmem:[%s394 + $0xa8] sm:$0xff] %vm3872, %v3829
        %3895 = vst.msk [vmem:[%s394 + $0xb0] sm:$0xff] %vm3872, %v3834
        %3896 = vst.msk [vmem:[%s394 + $0xb8] sm:$0xff] %vm3872, %v3837
        %3897 = vst.msk [vmem:[%s394 + $0xc0] sm:$0xff] %vm3872, %v3842
        %3898 = vst.msk [vmem:[%s394 + $0xc8] sm:$0xff] %vm3872, %v3845
        %3899 = vst.msk [vmem:[%s394 + $0xd0] sm:$0xff] %vm3872, %v3850
        %3900 = vst.msk [vmem:[%s394 + $0xd8] sm:$0xff] %vm3872, %v3853
        %3901 = vst.msk [vmem:[%s394 + $0xe0] sm:$0xff] %vm3872, %v3858
        %3902 = vst.msk [vmem:[%s394 + $0xe8] sm:$0xff] %vm3872, %v3861
        %3903 = vst.msk [vmem:[%s394 + $0xf0] sm:$0xff] %vm3872, %v3866
        %3904 = vst.msk [vmem:[%s394 + $0xf8] sm:$0xff] %vm3872, %v3869
        %s3905 = sand.u32 %s270, 1
        %s3906 = scalar_lea.sflag [#allocation4], %s3905
        %s3907 = sand.u32 %s270, 1
        %s3908 = smul.addr %s3907, 256
        %s3909 = scalar_lea.vmem [#allocation5], %s3908
        // Predicated region
        $region69: #{classifier_forward.1} parent=63 // pred_check
          %p3910 = pneg %p280
        $region70: #{classifier_forward.1} parent=63 // pred_check_branch
          %3912 = sbr.rel (%p3910) target = $region72
        $region71: #{classifier_forward.1} parent=63 // pred_region
          %s3914 = ssub.s32 4096, 4096
          %3915 = vsyncadd %s3906, %s3914
          %s3916 = smul.addr %s26, 32
          %s3917 = smul.addr %s3916, 128
          %s3918 = scalar_lea.hbm %s11, %s3917
          %s3919 = sshll.u32 %s3909, 4
          %s3920 = int_to_ptr.vmem [resolvable:$true] %s3919
          %3925 = dma.vmem_to_hbm [thread:$0]  %s3920, 4096, %s3918, %s3906, 128, 128, 8
        $region72: #{classifier_forward.1} parent=63 // pred_fallthru
          _
      $region64: #{classifier_forward.1} parent=5 // pred_fallthru
        _
      %p3926 = scmp.le.s32.totalorder 2, %s21
      // Predicated region
      $region73: #{classifier_forward.1} parent=5 // pred_check
        %p3927 = pneg %p3926
      $region74: #{classifier_forward.1} parent=5 // pred_check_branch
        %3929 = sbr.rel (%p3927) target = $region76
      $region75: #{classifier_forward.1} parent=5 // pred_region
        %s3930 = ssub.s32 %s21, 2
        // Predicated region
        $region77: #{classifier_forward.1} parent=75 // pred_check
          %p3931 = pneg %p286
        $region78: #{classifier_forward.1} parent=75 // pred_check_branch
          %3933 = sbr.rel (%p3931) target = $region80
        $region79: #{classifier_forward.1} parent=75 // pred_region
          %s3934 = sand.u32 %s271, 1
          %s3935 = scalar_lea.sflag [#allocation4], %s3934
          %s3936 = sand.u32 %s271, 1
          %s3937 = smul.addr %s3936, 256
          %s3938 = scalar_lea.vmem [#allocation5], %s3937
          %3939 = dma.done %s3935, 4096
        $region80: #{classifier_forward.1} parent=75 // pred_fallthru
          _
      $region76: #{classifier_forward.1} parent=5 // pred_fallthru
        _
    $region6: #{classifier_forward.1} parent=1 // loop_footer
      %s25 = sadd.s32 1, %s21
    $region7: #{classifier_forward.1} parent=1 // loop_footer_branch
      %20 = sbr.rel target = $region3
    $region8: #{classifier_forward.1} parent=1 // loop_exit
      _
    %3940 = vsyncpa [#allocation3], 1
    %s3941 = scalar_lea.sflag [#allocation3], 1
    %3942 = vsyncpa %s3941, 1
    %3943 = vsyncpa [#allocation4], 1
    %s3944 = scalar_lea.sflag [#allocation4], 1
    %3945 = vsyncpa %s3944, 1

</llo_original>
